<compile_context>
chip_gen: v6e
topology: v6e:2x2x1
jax: 0.10.0
libtpu: 0.0.40
codegen_flags: <defaults>
</compile_context>

<pallas_src>
import functools

import jax
import jax.numpy as jnp
from jax.experimental import pallas as pl
from jax.experimental.pallas import tpu as pltpu


# Column layout of the packed per-channel parameter slab (shape (2C, 34)).
_COL_B_EXP = 0    # P_IML 1x1 expand bias                (2C rows)
_COL_DW1   = 1    # P_IML dw taps 0..8; folded bias at +9
_COL_B_PJ1 = 11   # P_IML 1x1 project bias               (C rows)
_COL_DW2   = 12   # P_out_proj dw taps 0..8; bias at +9
_COL_B_PJ2 = 22   # P_out_proj project bias              (C rows)
_COL_DW3   = 23   # P_integration dw taps 0..8; bias at +9
_COL_B_PJ3 = 33   # P_integration project bias           (C rows)
_PSLAB_COLS = 34


# ----------------------------------------------------------------------------
# Kernel
# ----------------------------------------------------------------------------
def _focal_encoder_kernel(H, W, lidar_ref, w_ref, p_ref, out_ref):
    """Full FocalEncoderLayer forward for one batch element.

    Activation layout: (C, M) with M = H*W flattened row-major along lanes.
    lidar_ref : (1, C, M)   input BEV features
    w_ref     : (5C, 2C)    packed matmul weights (w_exp | w_pj1 | w_pj2 | w_pj3)
    p_ref     : (2C, 34)    packed per-channel params (dw taps + all biases)
    out_ref   : (1, C, M)   output BEV features
    """
    _, C, M = out_ref.shape
    C2 = 2 * C

    # ---- per-tap border masks & lane-roll shifts (built once from iota,
    #      shared by all three depthwise stages; no halo scratch) -------------
    m_idx = jax.lax.broadcasted_iota(jnp.int32, (1, M), 1)
    if (W & (W - 1)) == 0:                       # power-of-two fast path
        w_idx = jnp.bitwise_and(m_idx, W - 1)
    else:
        w_idx = jnp.remainder(m_idx, W)
    row_ok = {-1: m_idx >= W, 0: None, 1: m_idx < M - W}        # 0 <= h+dh < H
    col_ok = {-1: w_idx >= 1, 0: None, 1: w_idx <= W - 2}       # 0 <= w+dw < W

    tap_geom = []                                # (mask_or_None, lane shift)
    for th in range(3):
        for tw in range(3):
            dh, dw = th - 1, tw - 1
            r, c = row_ok[dh], col_ok[dw]
            if r is None:
                mask = c
            elif c is None:
                mask = r
            else:
                mask = jnp.logical_and(r, c)
            tap_geom.append((mask, (-(dh * W + dw)) % M))

    def pcol(j, rows=C2):
        return p_ref[:rows, j:j + 1]             # (rows, 1) per-channel column

    def dw3x3(x, col0):
        """3x3 depthwise conv (stride 1, zero pad 1) + folded-BN bias + ReLU6.

        The +/-1 spatial shifts are lane rotations (pltpu.roll -> XLU) with a
        border mask; everything stays in vregs.
        """
        Cx = x.shape[0]
        acc = None
        for k, (mask, shift) in enumerate(tap_geom):
            tap = pcol(col0 + k, Cx)
            if shift == 0:                       # centre tap: no shift, no mask
                term = x * tap
            else:
                term = jnp.where(mask, pltpu.roll(x, shift, axis=1), 0.0) * tap
            acc = term if acc is None else acc + term
        return jnp.clip(acc + pcol(col0 + 9, Cx), 0.0, 6.0)

    x = lidar_ref[0].astype(jnp.float32)         # (C, M)

    # ---- P_IML: InvertedResidual(C -> C, expand_ratio=2), eval BN folded ----
    t = jnp.dot(w_ref[0:C2, 0:C], x, preferred_element_type=jnp.float32)
    t = jnp.clip(t + pcol(_COL_B_EXP), 0.0, 6.0)                 # 1x1 expand + ReLU6
    t = dw3x3(t, _COL_DW1)                                        # 3x3 dw + ReLU6
    p2p = (jnp.dot(w_ref[C2:C2 + C, :], t, preferred_element_type=jnp.float32)
           + pcol(_COL_B_PJ1, C) + x)                             # 1x1 project + residual

    # ---- P_out_proj( cat(I2P_feat = lidar, P2P_feat) ), expand_ratio=1 ------
    t = dw3x3(jnp.concatenate([x, p2p], axis=0), _COL_DW2)        # one 2C-channel dw
    aug = (jnp.dot(w_ref[C2 + C:C2 + 2 * C, :], t, preferred_element_type=jnp.float32)
           + pcol(_COL_B_PJ2, C))                                 # single K=2C matmul

    # ---- P_integration( cat(P_Aug_feat, lidar) ), expand_ratio=1 ------------
    t = dw3x3(jnp.concatenate([aug, x], axis=0), _COL_DW3)
    out = (jnp.dot(w_ref[C2 + 2 * C:C2 + 3 * C, :], t, preferred_element_type=jnp.float32)
           + pcol(_COL_B_PJ3, C))

    out_ref[0] = out.astype(out_ref.dtype)


# ----------------------------------------------------------------------------
# Parameter setup (deterministic, eval-mode BN folded into the conv weights)
# ----------------------------------------------------------------------------
def _fold_bn(gamma, beta, mean, var, eps=1e-5):
    scale = gamma / jnp.sqrt(var + eps)
    bias = beta - mean * scale
    return scale, bias


def _init_bn(key, c):
    k1, k2, k3, k4 = jax.random.split(key, 4)
    gamma = jax.random.uniform(k1, (c,), jnp.float32, 0.5, 1.5)
    beta = 0.1 * jax.random.normal(k2, (c,), jnp.float32)
    mean = 0.1 * jax.random.normal(k3, (c,), jnp.float32)
    var = jax.random.uniform(k4, (c,), jnp.float32, 0.5, 1.5)
    return _fold_bn(gamma, beta, mean, var)


class FocalEncoderLayerPallas:
    """iterbev='bevfusionmb2', iterbev_wo_img=True, max_points_height unused."""

    def __init__(self, hidden_channel, key):
        C = hidden_channel
        C2 = 2 * C
        self.C = C
        ks = iter(jax.random.split(key, 32))
        s = 0.05

        def conv1x1(cin, cout):                  # weight (cout, cin), folded bias (cout,)
            w = s * jax.random.normal(next(ks), (cout, cin), jnp.float32)
            sc, bi = _init_bn(next(ks), cout)
            return w * sc[:, None], bi

        def dw3x3_w(c):                          # taps (9, c) row-major, folded bias (c,)
            w = s * jax.random.normal(next(ks), (9, c), jnp.float32)
            sc, bi = _init_bn(next(ks), c)
            return w * sc[None, :], bi

        # P_IML: InvertedResidual(C, C, stride=1, expand_ratio=2)
        self.w_exp, self.b_exp = conv1x1(C, C2)
        self.w_dw1, self.b_dw1 = dw3x3_w(C2)
        self.w_pj1, self.b_pj1 = conv1x1(C2, C)
        # P_out_proj: InvertedResidual(2C, C, stride=1, expand_ratio=1)
        self.w_dw2, self.b_dw2 = dw3x3_w(C2)
        self.w_pj2, self.b_pj2 = conv1x1(C2, C)
        # P_integration: InvertedResidual(2C, C, stride=1, expand_ratio=1)
        self.w_dw3, self.b_dw3 = dw3x3_w(C2)
        self.w_pj3, self.b_pj3 = conv1x1(C2, C)

        # ---- pack everything into two slabs (two DMAs total) ----------------
        # Matmul-weight slab: rows [0,2C)=w_exp (cols [0,C)), [2C,3C)=w_pj1,
        # [3C,4C)=w_pj2, [4C,5C)=w_pj3.  All row offsets are multiples of 8.
        wslab = jnp.zeros((5 * C, C2), jnp.float32)
        wslab = wslab.at[0:C2, 0:C].set(self.w_exp)
        wslab = wslab.at[C2:C2 + C, :].set(self.w_pj1)
        wslab = wslab.at[C2 + C:C2 + 2 * C, :].set(self.w_pj2)
        wslab = wslab.at[C2 + 2 * C:C2 + 3 * C, :].set(self.w_pj3)
        self.wslab = wslab

        # Per-channel param slab (2C, 34): dw taps + all folded biases.
        pslab = jnp.zeros((C2, _PSLAB_COLS), jnp.float32)
        pslab = pslab.at[:, _COL_B_EXP].set(self.b_exp)
        pslab = pslab.at[:, _COL_DW1:_COL_DW1 + 9].set(self.w_dw1.T)
        pslab = pslab.at[:, _COL_DW1 + 9].set(self.b_dw1)
        pslab = pslab.at[:C, _COL_B_PJ1].set(self.b_pj1)
        pslab = pslab.at[:, _COL_DW2:_COL_DW2 + 9].set(self.w_dw2.T)
        pslab = pslab.at[:, _COL_DW2 + 9].set(self.b_dw2)
        pslab = pslab.at[:C, _COL_B_PJ2].set(self.b_pj2)
        pslab = pslab.at[:, _COL_DW3:_COL_DW3 + 9].set(self.w_dw3.T)
        pslab = pslab.at[:, _COL_DW3 + 9].set(self.b_dw3)
        pslab = pslab.at[:C, _COL_B_PJ3].set(self.b_pj3)
        self.pslab = pslab

    def forward(self, img_feat, lidar_feat, img_metas=None, extra_args=None):
        B, C, H, W = lidar_feat.shape
        assert C == self.C and C % 8 == 0
        M = H * W
        x = lidar_feat.reshape(B, C, M)          # contiguous reshape: no data movement

        out = pl.pallas_call(
            functools.partial(_focal_encoder_kernel, H, W),
            out_shape=jax.ShapeDtypeStruct((B, C, M), lidar_feat.dtype),
            grid=(B,),
            in_specs=[
                pl.BlockSpec((1, C, M), lambda b: (b, 0, 0)),       # lane-dense activations
                pl.BlockSpec(self.wslab.shape, lambda b: (0, 0)),   # matmul-weight slab
                pl.BlockSpec(self.pslab.shape, lambda b: (0, 0)),   # per-channel param slab
            ],
            out_specs=pl.BlockSpec((1, C, M), lambda b: (b, 0, 0)),
            compiler_params=pltpu.CompilerParams(
                dimension_semantics=("parallel",)),  # one batch element per TC on v7x
        )(x, self.wslab, self.pslab)

        new_lidar_feat = out.reshape(B, C, H, W)
        new_img_feat = None  # iterbev_wo_img=True -> iterimg_conv is None
        return new_img_feat, new_lidar_feat


# ----------------------------------------------------------------------------
# Pure-JAX reference (same math, no Pallas) for a sanity check
# ----------------------------------------------------------------------------
def _ref_forward(m, lidar_nchw):
    hp = jax.lax.Precision.HIGHEST

    def pw(x, w, b):                 # 1x1 conv (BN folded); w (Cout, Cin), b (Cout,)
        return jnp.einsum('oc,bchw->bohw', w, x, precision=hp) + b[None, :, None, None]

    def dw(x, taps, b):              # 3x3 depthwise, pad 1, + bias + ReLU6; taps (9, Cx)
        Bx, Cx, Hx, Wx = x.shape
        xp = jnp.pad(x, ((0, 0), (0, 0), (1, 1), (1, 1)))
        acc = jnp.zeros_like(x)
        for th in range(3):
            for tw in range(3):
                acc = acc + (xp[:, :, th:th + Hx, tw:tw + Wx]
                             * taps[th * 3 + tw][None, :, None, None])
        return jnp.clip(acc + b[None, :, None, None], 0.0, 6.0)

    x = lidar_nchw
    t = jnp.clip(pw(x, m.w_exp, m.b_exp), 0.0, 6.0)
    t = dw(t, m.w_dw1, m.b_dw1)
    p2p = pw(t, m.w_pj1, m.b_pj1) + x
    t = dw(jnp.concatenate([x, p2p], axis=1), m.w_dw2, m.b_dw2)
    aug = pw(t, m.w_pj2, m.b_pj2)
    t = dw(jnp.concatenate([aug, x], axis=1), m.w_dw3, m.b_dw3)
    return pw(t, m.w_pj3, m.b_pj3)


# ----------------------------------------------------------------------------
if __name__ == "__main__":
    key = jax.random.PRNGKey(0)
    k_param, k_lidar = jax.random.split(key)

    batch, hidden, Hbev, Wbev = 2, 32, 16, 16
    lidar_feat = jax.random.normal(k_lidar, (batch, hidden, Hbev, Wbev), jnp.float32)
    img_feat = None  # unused: iterbev_wo_img=True

    layer = FocalEncoderLayerPallas(hidden_channel=hidden, key=k_param)

    new_img_feat, new_lidar_feat = layer.forward(img_feat, lidar_feat, img_metas=None)
    new_lidar_feat = jax.block_until_ready(new_lidar_feat)

    assert new_img_feat is None
    assert new_lidar_feat.shape == (batch, hidden, Hbev, Wbev)

    ref = jax.block_until_ready(_ref_forward(layer, lidar_feat))
    max_err = float(jnp.max(jnp.abs(new_lidar_feat - ref)))
    assert max_err < 1e-3, max_err

    print("KERNEL_OK")
</pallas_src>

<mosaic_0001>
module attributes {stable_mosaic.version = 11 : i64} {
  func.func @_focal_encoder_kernel(%arg0: i32, %arg1: memref<1x32x256xf32, #tpu.memory_space<vmem>>, %arg2: memref<160x64xf32, #tpu.memory_space<vmem>>, %arg3: memref<64x34xf32, #tpu.memory_space<vmem>>, %arg4: memref<1x32x256xf32, #tpu.memory_space<vmem>>) attributes {dimension_semantics = [#tpu.dimension_semantics<parallel>], iteration_bounds = array<i64: 2>, scalar_prefetch = 0 : i64, scratch_operands = 0 : i64, tpu.core_type = #tpu.core_type<tc>, window_params = [{transform_indices = @transform_0, window_bounds = array<i64: 1, 32, 256>}, {pipeline_mode = #tpu.pipeline_mode<synchronous>, transform_indices = @transform_1, window_bounds = array<i64: 160, 64>}, {pipeline_mode = #tpu.pipeline_mode<synchronous>, transform_indices = @transform_2, window_bounds = array<i64: 64, 34>}, {transform_indices = @transform_3, window_bounds = array<i64: 1, 32, 256>}]} {
    %0 = tpu.iota {dimensions = array<i32: 1>} : vector<1x256xi32>
    %c15_i32 = arith.constant 15 : i32
    %1 = vector.broadcast %c15_i32 : i32 to vector<1x256xi32>
    %2 = arith.andi %0, %1 : vector<1x256xi32>
    %c16_i32 = arith.constant 16 : i32
    %3 = vector.broadcast %c16_i32 : i32 to vector<1x256xi32>
    %4 = arith.cmpi sge, %0, %3 : vector<1x256xi32>
    %c240_i32 = arith.constant 240 : i32
    %5 = vector.broadcast %c240_i32 : i32 to vector<1x256xi32>
    %6 = arith.cmpi slt, %0, %5 : vector<1x256xi32>
    %c1_i32 = arith.constant 1 : i32
    %7 = vector.broadcast %c1_i32 : i32 to vector<1x256xi32>
    %8 = arith.cmpi sge, %2, %7 : vector<1x256xi32>
    %c14_i32 = arith.constant 14 : i32
    %9 = vector.broadcast %c14_i32 : i32 to vector<1x256xi32>
    %10 = arith.cmpi sle, %2, %9 : vector<1x256xi32>
    %11 = arith.andi %4, %8 : vector<1x256xi1>
    %12 = arith.andi %4, %10 : vector<1x256xi1>
    %13 = arith.andi %6, %8 : vector<1x256xi1>
    %14 = arith.andi %6, %10 : vector<1x256xi1>
    %c0 = arith.constant 0 : index
    %c0_0 = arith.constant 0 : index
    %c0_1 = arith.constant 0 : index
    %15 = vector.load %arg1[%c0, %c0_0, %c0_1] : memref<1x32x256xf32, #tpu.memory_space<vmem>>, vector<1x32x256xf32>
    %16 = vector.shape_cast %15 : vector<1x32x256xf32> to vector<32x256xf32>
    %c0_2 = arith.constant 0 : index
    %c0_3 = arith.constant 0 : index
    %17 = vector.load %arg2[%c0_2, %c0_3] : memref<160x64xf32, #tpu.memory_space<vmem>>, vector<64x32xf32>
    %cst = arith.constant dense<0.000000e+00> : vector<64x256xf32>
    %18 = tpu.matmul %17, %16, %cst {dimension_numbers = #tpu.dot_dimension_numbers<[1], [0], [0], [1], [0, 0, 1, 1], [], []>} : vector<64x32xf32>, vector<32x256xf32>, vector<64x256xf32> -> vector<64x256xf32>
    %c0_4 = arith.constant 0 : index
    %c0_5 = arith.constant 0 : index
    %19 = vector.load %arg3[%c0_4, %c0_5] : memref<64x34xf32, #tpu.memory_space<vmem>>, vector<64x1xf32>
    %20 = vector.broadcast %19 : vector<64x1xf32> to vector<64x256xf32>
    %21 = arith.addf %18, %20 : vector<64x256xf32>
    %cst_6 = arith.constant 0.000000e+00 : f32
    %cst_7 = arith.constant 6.000000e+00 : f32
    %22 = vector.broadcast %cst_6 : f32 to vector<64x256xf32>
    %23 = arith.maximumf %22, %21 : vector<64x256xf32>
    %24 = vector.broadcast %cst_7 : f32 to vector<64x256xf32>
    %25 = arith.minimumf %24, %23 : vector<64x256xf32>
    %c0_8 = arith.constant 0 : index
    %c1 = arith.constant 1 : index
    %26 = vector.load %arg3[%c0_8, %c1] : memref<64x34xf32, #tpu.memory_space<vmem>>, vector<64x1xf32>
    %c17_i32 = arith.constant 17 : i32
    %27 = tpu.dynamic_rotate %25 by %c17_i32 dim 1 : vector<64x256xf32>, i32 -> vector<64x256xf32>
    %cst_9 = arith.constant 0.000000e+00 : f32
    %28 = vector.shape_cast %11 : vector<1x256xi1> to vector<1x256xi1>
    %29 = vector.broadcast %28 : vector<1x256xi1> to vector<64x256xi1>
    %30 = vector.broadcast %cst_9 : f32 to vector<64x256xf32>
    %31 = arith.select %29, %27, %30 : vector<64x256xi1>, vector<64x256xf32>
    %32 = vector.broadcast %26 : vector<64x1xf32> to vector<64x256xf32>
    %33 = arith.mulf %31, %32 : vector<64x256xf32>
    %c0_10 = arith.constant 0 : index
    %c2 = arith.constant 2 : index
    %34 = vector.load %arg3[%c0_10, %c2] : memref<64x34xf32, #tpu.memory_space<vmem>>, vector<64x1xf32>
    %c16_i32_11 = arith.constant 16 : i32
    %35 = tpu.dynamic_rotate %25 by %c16_i32_11 dim 1 : vector<64x256xf32>, i32 -> vector<64x256xf32>
    %cst_12 = arith.constant 0.000000e+00 : f32
    %36 = vector.shape_cast %4 : vector<1x256xi1> to vector<1x256xi1>
    %37 = vector.broadcast %36 : vector<1x256xi1> to vector<64x256xi1>
    %38 = vector.broadcast %cst_12 : f32 to vector<64x256xf32>
    %39 = arith.select %37, %35, %38 : vector<64x256xi1>, vector<64x256xf32>
    %40 = vector.broadcast %34 : vector<64x1xf32> to vector<64x256xf32>
    %41 = arith.mulf %39, %40 : vector<64x256xf32>
    %42 = arith.addf %33, %41 : vector<64x256xf32>
    %c0_13 = arith.constant 0 : index
    %c3 = arith.constant 3 : index
    %43 = vector.load %arg3[%c0_13, %c3] : memref<64x34xf32, #tpu.memory_space<vmem>>, vector<64x1xf32>
    %c15_i32_14 = arith.constant 15 : i32
    %44 = tpu.dynamic_rotate %25 by %c15_i32_14 dim 1 : vector<64x256xf32>, i32 -> vector<64x256xf32>
    %cst_15 = arith.constant 0.000000e+00 : f32
    %45 = vector.shape_cast %12 : vector<1x256xi1> to vector<1x256xi1>
    %46 = vector.broadcast %45 : vector<1x256xi1> to vector<64x256xi1>
    %47 = vector.broadcast %cst_15 : f32 to vector<64x256xf32>
    %48 = arith.select %46, %44, %47 : vector<64x256xi1>, vector<64x256xf32>
    %49 = vector.broadcast %43 : vector<64x1xf32> to vector<64x256xf32>
    %50 = arith.mulf %48, %49 : vector<64x256xf32>
    %51 = arith.addf %42, %50 : vector<64x256xf32>
    %c0_16 = arith.constant 0 : index
    %c4 = arith.constant 4 : index
    %52 = vector.load %arg3[%c0_16, %c4] : memref<64x34xf32, #tpu.memory_space<vmem>>, vector<64x1xf32>
    %c1_i32_17 = arith.constant 1 : i32
    %53 = tpu.dynamic_rotate %25 by %c1_i32_17 dim 1 : vector<64x256xf32>, i32 -> vector<64x256xf32>
    %cst_18 = arith.constant 0.000000e+00 : f32
    %54 = vector.shape_cast %8 : vector<1x256xi1> to vector<1x256xi1>
    %55 = vector.broadcast %54 : vector<1x256xi1> to vector<64x256xi1>
    %56 = vector.broadcast %cst_18 : f32 to vector<64x256xf32>
    %57 = arith.select %55, %53, %56 : vector<64x256xi1>, vector<64x256xf32>
    %58 = vector.broadcast %52 : vector<64x1xf32> to vector<64x256xf32>
    %59 = arith.mulf %57, %58 : vector<64x256xf32>
    %60 = arith.addf %51, %59 : vector<64x256xf32>
    %c0_19 = arith.constant 0 : index
    %c5 = arith.constant 5 : index
    %61 = vector.load %arg3[%c0_19, %c5] : memref<64x34xf32, #tpu.memory_space<vmem>>, vector<64x1xf32>
    %62 = vector.broadcast %61 : vector<64x1xf32> to vector<64x256xf32>
    %63 = arith.mulf %25, %62 : vector<64x256xf32>
    %64 = arith.addf %60, %63 : vector<64x256xf32>
    %c0_20 = arith.constant 0 : index
    %c6 = arith.constant 6 : index
    %65 = vector.load %arg3[%c0_20, %c6] : memref<64x34xf32, #tpu.memory_space<vmem>>, vector<64x1xf32>
    %c255_i32 = arith.constant 255 : i32
    %66 = tpu.dynamic_rotate %25 by %c255_i32 dim 1 : vector<64x256xf32>, i32 -> vector<64x256xf32>
    %cst_21 = arith.constant 0.000000e+00 : f32
    %67 = vector.shape_cast %10 : vector<1x256xi1> to vector<1x256xi1>
    %68 = vector.broadcast %67 : vector<1x256xi1> to vector<64x256xi1>
    %69 = vector.broadcast %cst_21 : f32 to vector<64x256xf32>
    %70 = arith.select %68, %66, %69 : vector<64x256xi1>, vector<64x256xf32>
    %71 = vector.broadcast %65 : vector<64x1xf32> to vector<64x256xf32>
    %72 = arith.mulf %70, %71 : vector<64x256xf32>
    %73 = arith.addf %64, %72 : vector<64x256xf32>
    %c0_22 = arith.constant 0 : index
    %c7 = arith.constant 7 : index
    %74 = vector.load %arg3[%c0_22, %c7] : memref<64x34xf32, #tpu.memory_space<vmem>>, vector<64x1xf32>
    %c241_i32 = arith.constant 241 : i32
    %75 = tpu.dynamic_rotate %25 by %c241_i32 dim 1 : vector<64x256xf32>, i32 -> vector<64x256xf32>
    %cst_23 = arith.constant 0.000000e+00 : f32
    %76 = vector.shape_cast %13 : vector<1x256xi1> to vector<1x256xi1>
    %77 = vector.broadcast %76 : vector<1x256xi1> to vector<64x256xi1>
    %78 = vector.broadcast %cst_23 : f32 to vector<64x256xf32>
    %79 = arith.select %77, %75, %78 : vector<64x256xi1>, vector<64x256xf32>
    %80 = vector.broadcast %74 : vector<64x1xf32> to vector<64x256xf32>
    %81 = arith.mulf %79, %80 : vector<64x256xf32>
    %82 = arith.addf %73, %81 : vector<64x256xf32>
    %c0_24 = arith.constant 0 : index
    %c8 = arith.constant 8 : index
    %83 = vector.load %arg3[%c0_24, %c8] : memref<64x34xf32, #tpu.memory_space<vmem>>, vector<64x1xf32>
    %c240_i32_25 = arith.constant 240 : i32
    %84 = tpu.dynamic_rotate %25 by %c240_i32_25 dim 1 : vector<64x256xf32>, i32 -> vector<64x256xf32>
    %cst_26 = arith.constant 0.000000e+00 : f32
    %85 = vector.shape_cast %6 : vector<1x256xi1> to vector<1x256xi1>
    %86 = vector.broadcast %85 : vector<1x256xi1> to vector<64x256xi1>
    %87 = vector.broadcast %cst_26 : f32 to vector<64x256xf32>
    %88 = arith.select %86, %84, %87 : vector<64x256xi1>, vector<64x256xf32>
    %89 = vector.broadcast %83 : vector<64x1xf32> to vector<64x256xf32>
    %90 = arith.mulf %88, %89 : vector<64x256xf32>
    %91 = arith.addf %82, %90 : vector<64x256xf32>
    %c0_27 = arith.constant 0 : index
    %c9 = arith.constant 9 : index
    %92 = vector.load %arg3[%c0_27, %c9] : memref<64x34xf32, #tpu.memory_space<vmem>>, vector<64x1xf32>
    %c239_i32 = arith.constant 239 : i32
    %93 = tpu.dynamic_rotate %25 by %c239_i32 dim 1 : vector<64x256xf32>, i32 -> vector<64x256xf32>
    %cst_28 = arith.constant 0.000000e+00 : f32
    %94 = vector.shape_cast %14 : vector<1x256xi1> to vector<1x256xi1>
    %95 = vector.broadcast %94 : vector<1x256xi1> to vector<64x256xi1>
    %96 = vector.broadcast %cst_28 : f32 to vector<64x256xf32>
    %97 = arith.select %95, %93, %96 : vector<64x256xi1>, vector<64x256xf32>
    %98 = vector.broadcast %92 : vector<64x1xf32> to vector<64x256xf32>
    %99 = arith.mulf %97, %98 : vector<64x256xf32>
    %100 = arith.addf %91, %99 : vector<64x256xf32>
    %c0_29 = arith.constant 0 : index
    %c10 = arith.constant 10 : index
    %101 = vector.load %arg3[%c0_29, %c10] : memref<64x34xf32, #tpu.memory_space<vmem>>, vector<64x1xf32>
    %102 = vector.broadcast %101 : vector<64x1xf32> to vector<64x256xf32>
    %103 = arith.addf %100, %102 : vector<64x256xf32>
    %cst_30 = arith.constant 0.000000e+00 : f32
    %cst_31 = arith.constant 6.000000e+00 : f32
    %104 = vector.broadcast %cst_30 : f32 to vector<64x256xf32>
    %105 = arith.maximumf %104, %103 : vector<64x256xf32>
    %106 = vector.broadcast %cst_31 : f32 to vector<64x256xf32>
    %107 = arith.minimumf %106, %105 : vector<64x256xf32>
    %c64 = arith.constant 64 : index
    %c0_32 = arith.constant 0 : index
    %108 = vector.load %arg2[%c64, %c0_32] : memref<160x64xf32, #tpu.memory_space<vmem>>, vector<32x64xf32>
    %cst_33 = arith.constant dense<0.000000e+00> : vector<32x256xf32>
    %109 = tpu.matmul %108, %107, %cst_33 {dimension_numbers = #tpu.dot_dimension_numbers<[1], [0], [0], [1], [0, 0, 1, 1], [], []>} : vector<32x64xf32>, vector<64x256xf32>, vector<32x256xf32> -> vector<32x256xf32>
    %c0_34 = arith.constant 0 : index
    %c11 = arith.constant 11 : index
    %110 = vector.load %arg3[%c0_34, %c11] : memref<64x34xf32, #tpu.memory_space<vmem>>, vector<32x1xf32>
    %111 = vector.broadcast %110 : vector<32x1xf32> to vector<32x256xf32>
    %112 = arith.addf %109, %111 : vector<32x256xf32>
    %113 = arith.addf %112, %16 : vector<32x256xf32>
    %114 = tpu.concatenate %16, %113 in 0 : vector<32x256xf32>, vector<32x256xf32> -> vector<64x256xf32>
    %c0_35 = arith.constant 0 : index
    %c12 = arith.constant 12 : index
    %115 = vector.load %arg3[%c0_35, %c12] : memref<64x34xf32, #tpu.memory_space<vmem>>, vector<64x1xf32>
    %c17_i32_36 = arith.constant 17 : i32
    %116 = tpu.dynamic_rotate %114 by %c17_i32_36 dim 1 : vector<64x256xf32>, i32 -> vector<64x256xf32>
    %cst_37 = arith.constant 0.000000e+00 : f32
    %117 = vector.shape_cast %11 : vector<1x256xi1> to vector<1x256xi1>
    %118 = vector.broadcast %117 : vector<1x256xi1> to vector<64x256xi1>
    %119 = vector.broadcast %cst_37 : f32 to vector<64x256xf32>
    %120 = arith.select %118, %116, %119 : vector<64x256xi1>, vector<64x256xf32>
    %121 = vector.broadcast %115 : vector<64x1xf32> to vector<64x256xf32>
    %122 = arith.mulf %120, %121 : vector<64x256xf32>
    %c0_38 = arith.constant 0 : index
    %c13 = arith.constant 13 : index
    %123 = vector.load %arg3[%c0_38, %c13] : memref<64x34xf32, #tpu.memory_space<vmem>>, vector<64x1xf32>
    %c16_i32_39 = arith.constant 16 : i32
    %124 = tpu.dynamic_rotate %114 by %c16_i32_39 dim 1 : vector<64x256xf32>, i32 -> vector<64x256xf32>
    %cst_40 = arith.constant 0.000000e+00 : f32
    %125 = vector.shape_cast %4 : vector<1x256xi1> to vector<1x256xi1>
    %126 = vector.broadcast %125 : vector<1x256xi1> to vector<64x256xi1>
    %127 = vector.broadcast %cst_40 : f32 to vector<64x256xf32>
    %128 = arith.select %126, %124, %127 : vector<64x256xi1>, vector<64x256xf32>
    %129 = vector.broadcast %123 : vector<64x1xf32> to vector<64x256xf32>
    %130 = arith.mulf %128, %129 : vector<64x256xf32>
    %131 = arith.addf %122, %130 : vector<64x256xf32>
    %c0_41 = arith.constant 0 : index
    %c14 = arith.constant 14 : index
    %132 = vector.load %arg3[%c0_41, %c14] : memref<64x34xf32, #tpu.memory_space<vmem>>, vector<64x1xf32>
    %c15_i32_42 = arith.constant 15 : i32
    %133 = tpu.dynamic_rotate %114 by %c15_i32_42 dim 1 : vector<64x256xf32>, i32 -> vector<64x256xf32>
    %cst_43 = arith.constant 0.000000e+00 : f32
    %134 = vector.shape_cast %12 : vector<1x256xi1> to vector<1x256xi1>
    %135 = vector.broadcast %134 : vector<1x256xi1> to vector<64x256xi1>
    %136 = vector.broadcast %cst_43 : f32 to vector<64x256xf32>
    %137 = arith.select %135, %133, %136 : vector<64x256xi1>, vector<64x256xf32>
    %138 = vector.broadcast %132 : vector<64x1xf32> to vector<64x256xf32>
    %139 = arith.mulf %137, %138 : vector<64x256xf32>
    %140 = arith.addf %131, %139 : vector<64x256xf32>
    %c0_44 = arith.constant 0 : index
    %c15 = arith.constant 15 : index
    %141 = vector.load %arg3[%c0_44, %c15] : memref<64x34xf32, #tpu.memory_space<vmem>>, vector<64x1xf32>
    %c1_i32_45 = arith.constant 1 : i32
    %142 = tpu.dynamic_rotate %114 by %c1_i32_45 dim 1 : vector<64x256xf32>, i32 -> vector<64x256xf32>
    %cst_46 = arith.constant 0.000000e+00 : f32
    %143 = vector.shape_cast %8 : vector<1x256xi1> to vector<1x256xi1>
    %144 = vector.broadcast %143 : vector<1x256xi1> to vector<64x256xi1>
    %145 = vector.broadcast %cst_46 : f32 to vector<64x256xf32>
    %146 = arith.select %144, %142, %145 : vector<64x256xi1>, vector<64x256xf32>
    %147 = vector.broadcast %141 : vector<64x1xf32> to vector<64x256xf32>
    %148 = arith.mulf %146, %147 : vector<64x256xf32>
    %149 = arith.addf %140, %148 : vector<64x256xf32>
    %c0_47 = arith.constant 0 : index
    %c16 = arith.constant 16 : index
    %150 = vector.load %arg3[%c0_47, %c16] : memref<64x34xf32, #tpu.memory_space<vmem>>, vector<64x1xf32>
    %151 = vector.broadcast %150 : vector<64x1xf32> to vector<64x256xf32>
    %152 = arith.mulf %114, %151 : vector<64x256xf32>
    %153 = arith.addf %149, %152 : vector<64x256xf32>
    %c0_48 = arith.constant 0 : index
    %c17 = arith.constant 17 : index
    %154 = vector.load %arg3[%c0_48, %c17] : memref<64x34xf32, #tpu.memory_space<vmem>>, vector<64x1xf32>
    %c255_i32_49 = arith.constant 255 : i32
    %155 = tpu.dynamic_rotate %114 by %c255_i32_49 dim 1 : vector<64x256xf32>, i32 -> vector<64x256xf32>
    %cst_50 = arith.constant 0.000000e+00 : f32
    %156 = vector.shape_cast %10 : vector<1x256xi1> to vector<1x256xi1>
    %157 = vector.broadcast %156 : vector<1x256xi1> to vector<64x256xi1>
    %158 = vector.broadcast %cst_50 : f32 to vector<64x256xf32>
    %159 = arith.select %157, %155, %158 : vector<64x256xi1>, vector<64x256xf32>
    %160 = vector.broadcast %154 : vector<64x1xf32> to vector<64x256xf32>
    %161 = arith.mulf %159, %160 : vector<64x256xf32>
    %162 = arith.addf %153, %161 : vector<64x256xf32>
    %c0_51 = arith.constant 0 : index
    %c18 = arith.constant 18 : index
    %163 = vector.load %arg3[%c0_51, %c18] : memref<64x34xf32, #tpu.memory_space<vmem>>, vector<64x1xf32>
    %c241_i32_52 = arith.constant 241 : i32
    %164 = tpu.dynamic_rotate %114 by %c241_i32_52 dim 1 : vector<64x256xf32>, i32 -> vector<64x256xf32>
    %cst_53 = arith.constant 0.000000e+00 : f32
    %165 = vector.shape_cast %13 : vector<1x256xi1> to vector<1x256xi1>
    %166 = vector.broadcast %165 : vector<1x256xi1> to vector<64x256xi1>
    %167 = vector.broadcast %cst_53 : f32 to vector<64x256xf32>
    %168 = arith.select %166, %164, %167 : vector<64x256xi1>, vector<64x256xf32>
    %169 = vector.broadcast %163 : vector<64x1xf32> to vector<64x256xf32>
    %170 = arith.mulf %168, %169 : vector<64x256xf32>
    %171 = arith.addf %162, %170 : vector<64x256xf32>
    %c0_54 = arith.constant 0 : index
    %c19 = arith.constant 19 : index
    %172 = vector.load %arg3[%c0_54, %c19] : memref<64x34xf32, #tpu.memory_space<vmem>>, vector<64x1xf32>
    %c240_i32_55 = arith.constant 240 : i32
    %173 = tpu.dynamic_rotate %114 by %c240_i32_55 dim 1 : vector<64x256xf32>, i32 -> vector<64x256xf32>
    %cst_56 = arith.constant 0.000000e+00 : f32
    %174 = vector.shape_cast %6 : vector<1x256xi1> to vector<1x256xi1>
    %175 = vector.broadcast %174 : vector<1x256xi1> to vector<64x256xi1>
    %176 = vector.broadcast %cst_56 : f32 to vector<64x256xf32>
    %177 = arith.select %175, %173, %176 : vector<64x256xi1>, vector<64x256xf32>
    %178 = vector.broadcast %172 : vector<64x1xf32> to vector<64x256xf32>
    %179 = arith.mulf %177, %178 : vector<64x256xf32>
    %180 = arith.addf %171, %179 : vector<64x256xf32>
    %c0_57 = arith.constant 0 : index
    %c20 = arith.constant 20 : index
    %181 = vector.load %arg3[%c0_57, %c20] : memref<64x34xf32, #tpu.memory_space<vmem>>, vector<64x1xf32>
    %c239_i32_58 = arith.constant 239 : i32
    %182 = tpu.dynamic_rotate %114 by %c239_i32_58 dim 1 : vector<64x256xf32>, i32 -> vector<64x256xf32>
    %cst_59 = arith.constant 0.000000e+00 : f32
    %183 = vector.shape_cast %14 : vector<1x256xi1> to vector<1x256xi1>
    %184 = vector.broadcast %183 : vector<1x256xi1> to vector<64x256xi1>
    %185 = vector.broadcast %cst_59 : f32 to vector<64x256xf32>
    %186 = arith.select %184, %182, %185 : vector<64x256xi1>, vector<64x256xf32>
    %187 = vector.broadcast %181 : vector<64x1xf32> to vector<64x256xf32>
    %188 = arith.mulf %186, %187 : vector<64x256xf32>
    %189 = arith.addf %180, %188 : vector<64x256xf32>
    %c0_60 = arith.constant 0 : index
    %c21 = arith.constant 21 : index
    %190 = vector.load %arg3[%c0_60, %c21] : memref<64x34xf32, #tpu.memory_space<vmem>>, vector<64x1xf32>
    %191 = vector.broadcast %190 : vector<64x1xf32> to vector<64x256xf32>
    %192 = arith.addf %189, %191 : vector<64x256xf32>
    %cst_61 = arith.constant 0.000000e+00 : f32
    %cst_62 = arith.constant 6.000000e+00 : f32
    %193 = vector.broadcast %cst_61 : f32 to vector<64x256xf32>
    %194 = arith.maximumf %193, %192 : vector<64x256xf32>
    %195 = vector.broadcast %cst_62 : f32 to vector<64x256xf32>
    %196 = arith.minimumf %195, %194 : vector<64x256xf32>
    %c96 = arith.constant 96 : index
    %c0_63 = arith.constant 0 : index
    %197 = vector.load %arg2[%c96, %c0_63] : memref<160x64xf32, #tpu.memory_space<vmem>>, vector<32x64xf32>
    %cst_64 = arith.constant dense<0.000000e+00> : vector<32x256xf32>
    %198 = tpu.matmul %197, %196, %cst_64 {dimension_numbers = #tpu.dot_dimension_numbers<[1], [0], [0], [1], [0, 0, 1, 1], [], []>} : vector<32x64xf32>, vector<64x256xf32>, vector<32x256xf32> -> vector<32x256xf32>
    %c0_65 = arith.constant 0 : index
    %c22 = arith.constant 22 : index
    %199 = vector.load %arg3[%c0_65, %c22] : memref<64x34xf32, #tpu.memory_space<vmem>>, vector<32x1xf32>
    %200 = vector.broadcast %199 : vector<32x1xf32> to vector<32x256xf32>
    %201 = arith.addf %198, %200 : vector<32x256xf32>
    %202 = tpu.concatenate %201, %16 in 0 : vector<32x256xf32>, vector<32x256xf32> -> vector<64x256xf32>
    %c0_66 = arith.constant 0 : index
    %c23 = arith.constant 23 : index
    %203 = vector.load %arg3[%c0_66, %c23] : memref<64x34xf32, #tpu.memory_space<vmem>>, vector<64x1xf32>
    %c17_i32_67 = arith.constant 17 : i32
    %204 = tpu.dynamic_rotate %202 by %c17_i32_67 dim 1 : vector<64x256xf32>, i32 -> vector<64x256xf32>
    %cst_68 = arith.constant 0.000000e+00 : f32
    %205 = vector.shape_cast %11 : vector<1x256xi1> to vector<1x256xi1>
    %206 = vector.broadcast %205 : vector<1x256xi1> to vector<64x256xi1>
    %207 = vector.broadcast %cst_68 : f32 to vector<64x256xf32>
    %208 = arith.select %206, %204, %207 : vector<64x256xi1>, vector<64x256xf32>
    %209 = vector.broadcast %203 : vector<64x1xf32> to vector<64x256xf32>
    %210 = arith.mulf %208, %209 : vector<64x256xf32>
    %c0_69 = arith.constant 0 : index
    %c24 = arith.constant 24 : index
    %211 = vector.load %arg3[%c0_69, %c24] : memref<64x34xf32, #tpu.memory_space<vmem>>, vector<64x1xf32>
    %c16_i32_70 = arith.constant 16 : i32
    %212 = tpu.dynamic_rotate %202 by %c16_i32_70 dim 1 : vector<64x256xf32>, i32 -> vector<64x256xf32>
    %cst_71 = arith.constant 0.000000e+00 : f32
    %213 = vector.shape_cast %4 : vector<1x256xi1> to vector<1x256xi1>
    %214 = vector.broadcast %213 : vector<1x256xi1> to vector<64x256xi1>
    %215 = vector.broadcast %cst_71 : f32 to vector<64x256xf32>
    %216 = arith.select %214, %212, %215 : vector<64x256xi1>, vector<64x256xf32>
    %217 = vector.broadcast %211 : vector<64x1xf32> to vector<64x256xf32>
    %218 = arith.mulf %216, %217 : vector<64x256xf32>
    %219 = arith.addf %210, %218 : vector<64x256xf32>
    %c0_72 = arith.constant 0 : index
    %c25 = arith.constant 25 : index
    %220 = vector.load %arg3[%c0_72, %c25] : memref<64x34xf32, #tpu.memory_space<vmem>>, vector<64x1xf32>
    %c15_i32_73 = arith.constant 15 : i32
    %221 = tpu.dynamic_rotate %202 by %c15_i32_73 dim 1 : vector<64x256xf32>, i32 -> vector<64x256xf32>
    %cst_74 = arith.constant 0.000000e+00 : f32
    %222 = vector.shape_cast %12 : vector<1x256xi1> to vector<1x256xi1>
    %223 = vector.broadcast %222 : vector<1x256xi1> to vector<64x256xi1>
    %224 = vector.broadcast %cst_74 : f32 to vector<64x256xf32>
    %225 = arith.select %223, %221, %224 : vector<64x256xi1>, vector<64x256xf32>
    %226 = vector.broadcast %220 : vector<64x1xf32> to vector<64x256xf32>
    %227 = arith.mulf %225, %226 : vector<64x256xf32>
    %228 = arith.addf %219, %227 : vector<64x256xf32>
    %c0_75 = arith.constant 0 : index
    %c26 = arith.constant 26 : index
    %229 = vector.load %arg3[%c0_75, %c26] : memref<64x34xf32, #tpu.memory_space<vmem>>, vector<64x1xf32>
    %c1_i32_76 = arith.constant 1 : i32
    %230 = tpu.dynamic_rotate %202 by %c1_i32_76 dim 1 : vector<64x256xf32>, i32 -> vector<64x256xf32>
    %cst_77 = arith.constant 0.000000e+00 : f32
    %231 = vector.shape_cast %8 : vector<1x256xi1> to vector<1x256xi1>
    %232 = vector.broadcast %231 : vector<1x256xi1> to vector<64x256xi1>
    %233 = vector.broadcast %cst_77 : f32 to vector<64x256xf32>
    %234 = arith.select %232, %230, %233 : vector<64x256xi1>, vector<64x256xf32>
    %235 = vector.broadcast %229 : vector<64x1xf32> to vector<64x256xf32>
    %236 = arith.mulf %234, %235 : vector<64x256xf32>
    %237 = arith.addf %228, %236 : vector<64x256xf32>
    %c0_78 = arith.constant 0 : index
    %c27 = arith.constant 27 : index
    %238 = vector.load %arg3[%c0_78, %c27] : memref<64x34xf32, #tpu.memory_space<vmem>>, vector<64x1xf32>
    %239 = vector.broadcast %238 : vector<64x1xf32> to vector<64x256xf32>
    %240 = arith.mulf %202, %239 : vector<64x256xf32>
    %241 = arith.addf %237, %240 : vector<64x256xf32>
    %c0_79 = arith.constant 0 : index
    %c28 = arith.constant 28 : index
    %242 = vector.load %arg3[%c0_79, %c28] : memref<64x34xf32, #tpu.memory_space<vmem>>, vector<64x1xf32>
    %c255_i32_80 = arith.constant 255 : i32
    %243 = tpu.dynamic_rotate %202 by %c255_i32_80 dim 1 : vector<64x256xf32>, i32 -> vector<64x256xf32>
    %cst_81 = arith.constant 0.000000e+00 : f32
    %244 = vector.shape_cast %10 : vector<1x256xi1> to vector<1x256xi1>
    %245 = vector.broadcast %244 : vector<1x256xi1> to vector<64x256xi1>
    %246 = vector.broadcast %cst_81 : f32 to vector<64x256xf32>
    %247 = arith.select %245, %243, %246 : vector<64x256xi1>, vector<64x256xf32>
    %248 = vector.broadcast %242 : vector<64x1xf32> to vector<64x256xf32>
    %249 = arith.mulf %247, %248 : vector<64x256xf32>
    %250 = arith.addf %241, %249 : vector<64x256xf32>
    %c0_82 = arith.constant 0 : index
    %c29 = arith.constant 29 : index
    %251 = vector.load %arg3[%c0_82, %c29] : memref<64x34xf32, #tpu.memory_space<vmem>>, vector<64x1xf32>
    %c241_i32_83 = arith.constant 241 : i32
    %252 = tpu.dynamic_rotate %202 by %c241_i32_83 dim 1 : vector<64x256xf32>, i32 -> vector<64x256xf32>
    %cst_84 = arith.constant 0.000000e+00 : f32
    %253 = vector.shape_cast %13 : vector<1x256xi1> to vector<1x256xi1>
    %254 = vector.broadcast %253 : vector<1x256xi1> to vector<64x256xi1>
    %255 = vector.broadcast %cst_84 : f32 to vector<64x256xf32>
    %256 = arith.select %254, %252, %255 : vector<64x256xi1>, vector<64x256xf32>
    %257 = vector.broadcast %251 : vector<64x1xf32> to vector<64x256xf32>
    %258 = arith.mulf %256, %257 : vector<64x256xf32>
    %259 = arith.addf %250, %258 : vector<64x256xf32>
    %c0_85 = arith.constant 0 : index
    %c30 = arith.constant 30 : index
    %260 = vector.load %arg3[%c0_85, %c30] : memref<64x34xf32, #tpu.memory_space<vmem>>, vector<64x1xf32>
    %c240_i32_86 = arith.constant 240 : i32
    %261 = tpu.dynamic_rotate %202 by %c240_i32_86 dim 1 : vector<64x256xf32>, i32 -> vector<64x256xf32>
    %cst_87 = arith.constant 0.000000e+00 : f32
    %262 = vector.shape_cast %6 : vector<1x256xi1> to vector<1x256xi1>
    %263 = vector.broadcast %262 : vector<1x256xi1> to vector<64x256xi1>
    %264 = vector.broadcast %cst_87 : f32 to vector<64x256xf32>
    %265 = arith.select %263, %261, %264 : vector<64x256xi1>, vector<64x256xf32>
    %266 = vector.broadcast %260 : vector<64x1xf32> to vector<64x256xf32>
    %267 = arith.mulf %265, %266 : vector<64x256xf32>
    %268 = arith.addf %259, %267 : vector<64x256xf32>
    %c0_88 = arith.constant 0 : index
    %c31 = arith.constant 31 : index
    %269 = vector.load %arg3[%c0_88, %c31] : memref<64x34xf32, #tpu.memory_space<vmem>>, vector<64x1xf32>
    %c239_i32_89 = arith.constant 239 : i32
    %270 = tpu.dynamic_rotate %202 by %c239_i32_89 dim 1 : vector<64x256xf32>, i32 -> vector<64x256xf32>
    %cst_90 = arith.constant 0.000000e+00 : f32
    %271 = vector.shape_cast %14 : vector<1x256xi1> to vector<1x256xi1>
    %272 = vector.broadcast %271 : vector<1x256xi1> to vector<64x256xi1>
    %273 = vector.broadcast %cst_90 : f32 to vector<64x256xf32>
    %274 = arith.select %272, %270, %273 : vector<64x256xi1>, vector<64x256xf32>
    %275 = vector.broadcast %269 : vector<64x1xf32> to vector<64x256xf32>
    %276 = arith.mulf %274, %275 : vector<64x256xf32>
    %277 = arith.addf %268, %276 : vector<64x256xf32>
    %c0_91 = arith.constant 0 : index
    %c32 = arith.constant 32 : index
    %278 = vector.load %arg3[%c0_91, %c32] : memref<64x34xf32, #tpu.memory_space<vmem>>, vector<64x1xf32>
    %279 = vector.broadcast %278 : vector<64x1xf32> to vector<64x256xf32>
    %280 = arith.addf %277, %279 : vector<64x256xf32>
    %cst_92 = arith.constant 0.000000e+00 : f32
    %cst_93 = arith.constant 6.000000e+00 : f32
    %281 = vector.broadcast %cst_92 : f32 to vector<64x256xf32>
    %282 = arith.maximumf %281, %280 : vector<64x256xf32>
    %283 = vector.broadcast %cst_93 : f32 to vector<64x256xf32>
    %284 = arith.minimumf %283, %282 : vector<64x256xf32>
    %c128 = arith.constant 128 : index
    %c0_94 = arith.constant 0 : index
    %285 = vector.load %arg2[%c128, %c0_94] : memref<160x64xf32, #tpu.memory_space<vmem>>, vector<32x64xf32>
    %cst_95 = arith.constant dense<0.000000e+00> : vector<32x256xf32>
    %286 = tpu.matmul %285, %284, %cst_95 {dimension_numbers = #tpu.dot_dimension_numbers<[1], [0], [0], [1], [0, 0, 1, 1], [], []>} : vector<32x64xf32>, vector<64x256xf32>, vector<32x256xf32> -> vector<32x256xf32>
    %c0_96 = arith.constant 0 : index
    %c33 = arith.constant 33 : index
    %287 = vector.load %arg3[%c0_96, %c33] : memref<64x34xf32, #tpu.memory_space<vmem>>, vector<32x1xf32>
    %288 = vector.broadcast %287 : vector<32x1xf32> to vector<32x256xf32>
    %289 = arith.addf %286, %288 : vector<32x256xf32>
    %c0_97 = arith.constant 0 : index
    %c0_98 = arith.constant 0 : index
    %c0_99 = arith.constant 0 : index
    %290 = vector.load %arg4[%c0_97, %c0_98, %c0_99] : memref<1x32x256xf32, #tpu.memory_space<vmem>>, vector<1x32x256xf32>
    %291 = vector.shape_cast %290 : vector<1x32x256xf32> to vector<32x256xf32>
    %292 = vector.shape_cast %289 : vector<32x256xf32> to vector<1x32x256xf32>
    tpu.vector_store %arg4[%c0_97, %c0_98, %c0_99], %292 {strides = array<i32>} : memref<1x32x256xf32, #tpu.memory_space<vmem>>, vector<1x32x256xf32>,
    return
  }
  func.func @transform_0(%arg0: i32) -> (i32, i32, i32) {
    %c0_i32 = arith.constant 0 : i32
    %c0_i32_0 = arith.constant 0 : i32
    %c0_i32_1 = arith.constant 0 : i32
    return %arg0, %c0_i32, %c0_i32_0 : i32, i32, i32
  }
  func.func @transform_1(%arg0: i32) -> (i32, i32) {
    %c0_i32 = arith.constant 0 : i32
    %c0_i32_0 = arith.constant 0 : i32
    %c0_i32_1 = arith.constant 0 : i32
    return %c0_i32, %c0_i32_0 : i32, i32
  }
  func.func @transform_2(%arg0: i32) -> (i32, i32) {
    %c0_i32 = arith.constant 0 : i32
    %c0_i32_0 = arith.constant 0 : i32
    %c0_i32_1 = arith.constant 0 : i32
    return %c0_i32, %c0_i32_0 : i32, i32
  }
  func.func @transform_3(%arg0: i32) -> (i32, i32, i32) {
    %c0_i32 = arith.constant 0 : i32
    %c0_i32_0 = arith.constant 0 : i32
    %c0_i32_1 = arith.constant 0 : i32
    return %arg0, %c0_i32, %c0_i32_0 : i32, i32, i32
  }
}

</mosaic_0001>

<llo_original>
// kernel: tpu_custom_call.1
$region0: #{tpu_custom_call.1}
  #allocation0 [shape = 'u32[]', space=smem, size = 0x4, offset = 0x4, fixed_abs, tag = 'smem constant byte address 0x4 - core index']
  #allocation1 [shape = 'u32[144,128]{1,0:T(1,128)}', space=vmem, size = 0x12000, scoped, tag = 'internal scratch']
  %s0 = inlined_call_operand.vmem [shape: f32[2,32,256], index: 0, kind: input, shape index: {}]
  %s1 = inlined_call_operand.vmem [shape: f32[160,64], index: 1, kind: input, shape index: {}]
  %s2 = inlined_call_operand.vmem [shape: f32[64,34], index: 2, kind: input, shape index: {}]
  %s3 = inlined_call_operand.hbm [shape: f32[2,32,256], index: 3, kind: output, shape index: {}]
  %s4 = sld [smem:[#allocation0]]
  $region45: #{tpu_custom_call.1} parent=0
    _
  %s6 = ssub.s32 1, %s4
  %s7 = scalar_select 0, %s6, %s4
  $region1: #{tpu_custom_call.1} parent=0
    #allocation2 [shape = 'u8[65536]{0}', space=vmem, size = 0x10000, scoped, tag = 'output window, operand 0']
    #allocation3 [shape = 's32[2]{0}', space=sflag, size = 0x8, scoped, tag = 'scoped memory for tpu_custom_call.1']
    %8 = vsyncpa [#allocation3], 0
    %s9 = scalar_lea.sflag [#allocation3], 1
    %10 = vsyncpa %s9, 0
    loop: start=0, step=1, limit=4
    $region2: #{tpu_custom_call.1} parent=1 // loop_pre_header
      _
    $region3: #{tpu_custom_call.1} parent=1 // loop_header
      %s12 = sphi 0, %s16
      %p13 = scmp.ge.s32.totalorder %s12, 4
      %s22 = sphi 0, %s24
      %s25 = sphi 0, %s22
      %s26 = sphi 0, %s25
      %s42 = sphi 0, %s26
      %s46 = sphi 0, %s46
      %s48 = sphi 0, %s46
      %s49 = sphi 0, %s48
      %s63 = sphi 0, %s49
      %s67 = sphi 0, %s67
      %s69 = sphi 0, %s67
      %s70 = sphi 0, %s69
      %s84 = sphi 0, %s70
      %s90 = sphi 0, %s92
      %s93 = sphi 0, %s90
      %s94 = sphi 0, %s93
      %s110 = sphi 0, %s94
    $region4: #{tpu_custom_call.1} parent=1 // loop_header_branch
      %15 = sbr.rel (%p13) target = $region8
    $region5: #{tpu_custom_call.1} parent=1 // loop_body
      %s17 = ssub.s32 %s12, 1
      %s18 = ssub.s32 %s12, 2
      %s19 = sadd.s32 %s12, 1
      %s20 = ssub.s32 %s12, %s19
      %p21 = scmp.eq.s32.totalorder %s20, 0
      %s23 = sadd.s32 %s22, 1
      %s24 = scalar_select %p21, %s22, %s23
      %p27 = pneg %p21
      %p28 = scmp.eq.s32.totalorder %s12, 1
      %p29 = por %p27, %p28
      %p30 = scmp.ne.s32.totalorder %s22, %s25
      %p31 = scmp.eq.s32.totalorder %s12, 0
      %p32 = por %p30, %p31
      %p33 = scmp.ne.s32.totalorder %s22, %s25
      %p34 = scmp.eq.s32.totalorder %s17, 1
      %p35 = por %p33, %p34
      %p36 = scmp.ne.s32.totalorder %s25, %s26
      %p37 = scmp.eq.s32.totalorder %s17, 0
      %p38 = por %p36, %p37
      %p39 = scmp.ne.s32.totalorder %s25, %s26
      %p40 = scmp.eq.s32.totalorder %s18, 1
      %p41 = por %p39, %p40
      %p43 = scmp.ne.s32.totalorder %s26, %s42
      %p44 = scmp.eq.s32.totalorder %s18, 0
      %p45 = por %p43, %p44
      %s47 = sadd.s32 %s46, 1
      %p50 = scmp.eq.s32.totalorder %s12, 1
      %p51 = scmp.ne.s32.totalorder %s46, %s48
      %p52 = scmp.eq.s32.totalorder %s12, 0
      %p53 = por %p51, %p52
      %p54 = scmp.ne.s32.totalorder %s46, %s48
      %p55 = scmp.eq.s32.totalorder %s17, 1
      %p56 = por %p54, %p55
      %p57 = scmp.ne.s32.totalorder %s48, %s49
      %p58 = scmp.eq.s32.totalorder %s17, 0
      %p59 = por %p57, %p58
      %p60 = scmp.ne.s32.totalorder %s48, %s49
      %p61 = scmp.eq.s32.totalorder %s18, 1
      %p62 = por %p60, %p61
      %p64 = scmp.ne.s32.totalorder %s49, %s63
      %p65 = scmp.eq.s32.totalorder %s18, 0
      %p66 = por %p64, %p65
      %s68 = sadd.s32 %s67, 1
      %p71 = scmp.eq.s32.totalorder %s12, 1
      %p72 = scmp.ne.s32.totalorder %s67, %s69
      %p73 = scmp.eq.s32.totalorder %s12, 0
      %p74 = por %p72, %p73
      %p75 = scmp.ne.s32.totalorder %s67, %s69
      %p76 = scmp.eq.s32.totalorder %s17, 1
      %p77 = por %p75, %p76
      %p78 = scmp.ne.s32.totalorder %s69, %s70
      %p79 = scmp.eq.s32.totalorder %s17, 0
      %p80 = por %p78, %p79
      %p81 = scmp.ne.s32.totalorder %s69, %s70
      %p82 = scmp.eq.s32.totalorder %s18, 1
      %p83 = por %p81, %p82
      %p85 = scmp.ne.s32.totalorder %s70, %s84
      %p86 = scmp.eq.s32.totalorder %s18, 0
      %p87 = por %p85, %p86
      %s88 = ssub.s32 %s12, %s19
      %p89 = scmp.eq.s32.totalorder %s88, 0
      %s91 = sadd.s32 %s90, 1
      %s92 = scalar_select %p89, %s90, %s91
      %p95 = pneg %p89
      %p96 = scmp.eq.s32.totalorder %s12, 1
      %p97 = por %p95, %p96
      %p98 = scmp.ne.s32.totalorder %s90, %s93
      %p99 = scmp.eq.s32.totalorder %s12, 0
      %p100 = por %p98, %p99
      %p101 = scmp.ne.s32.totalorder %s90, %s93
      %p102 = scmp.eq.s32.totalorder %s17, 1
      %p103 = por %p101, %p102
      %p104 = scmp.ne.s32.totalorder %s93, %s94
      %p105 = scmp.eq.s32.totalorder %s17, 0
      %p106 = por %p104, %p105
      %p107 = scmp.ne.s32.totalorder %s93, %s94
      %p108 = scmp.eq.s32.totalorder %s18, 1
      %p109 = por %p107, %p108
      %p111 = scmp.ne.s32.totalorder %s94, %s110
      %p112 = scmp.eq.s32.totalorder %s18, 0
      %p113 = por %p111, %p112
      %p114 = scmp.le.s32.totalorder 1, %s12
      %p115 = scmp.lt.s32.totalorder %s12, 3
      %p116 = pnand %p114, %p115
      %p117 = pneg %p116
      // Predicated region
      $region9: #{tpu_custom_call.1} parent=5 // pred_check
        _
      $region10: #{tpu_custom_call.1} parent=5 // pred_check_branch
        %119 = sbr.rel (%p116) target = $region12
      $region11: #{tpu_custom_call.1} parent=5 // pred_region
        %s120 = ssub.s32 %s12, 1
        // Predicated region
        $region13: #{tpu_custom_call.1} parent=11 // pred_check
          %p121 = pneg %p59
        $region14: #{tpu_custom_call.1} parent=11 // pred_check_branch
          %123 = sbr.rel (%p121) target = $region16
        $region15: #{tpu_custom_call.1} parent=11 // pred_region
          _
        $region16: #{tpu_custom_call.1} parent=11 // pred_fallthru
          _
        // Predicated region
        $region17: #{tpu_custom_call.1} parent=11 // pred_check
          %p124 = pneg %p80
        $region18: #{tpu_custom_call.1} parent=11 // pred_check_branch
          %126 = sbr.rel (%p124) target = $region20
        $region19: #{tpu_custom_call.1} parent=11 // pred_region
          _
        $region20: #{tpu_custom_call.1} parent=11 // pred_fallthru
          _
      $region12: #{tpu_custom_call.1} parent=5 // pred_fallthru
        _
      %p127 = scmp.lt.s32.totalorder %s12, 2
      // Predicated region
      $region21: #{tpu_custom_call.1} parent=5 // pred_check
        %p128 = pneg %p127
      $region22: #{tpu_custom_call.1} parent=5 // pred_check_branch
        %130 = sbr.rel (%p128) target = $region24
      $region23: #{tpu_custom_call.1} parent=5 // pred_region
        // Predicated region
        $region25: #{tpu_custom_call.1} parent=23 // pred_check
          %p131 = pneg %p32
        $region26: #{tpu_custom_call.1} parent=23 // pred_check_branch
          %133 = sbr.rel (%p131) target = $region28
        $region27: #{tpu_custom_call.1} parent=23 // pred_region
          %p134 = scmp.lt.s32.totalorder %s12, 1
          %s135 = scalar_select %p134, %s12, 1
          %s136 = smul.addr %s135, 8
          %s137 = smul.addr %s136, 8
          %s138 = scalar_lea.vmem %s0, %s137
        $region28: #{tpu_custom_call.1} parent=23 // pred_fallthru
          _
      $region24: #{tpu_custom_call.1} parent=5 // pred_fallthru
        _
      %p139 = scmp.le.s32.totalorder 1, %s12
      %p140 = scmp.lt.s32.totalorder %s12, 3
      %p141 = pnand %p139, %p140
      %p142 = pneg %p141
      // Predicated region
      $region29: #{tpu_custom_call.1} parent=5 // pred_check
        _
      $region30: #{tpu_custom_call.1} parent=5 // pred_check_branch
        %144 = sbr.rel (%p141) target = $region32
      $region31: #{tpu_custom_call.1} parent=5 // pred_region
        %s145 = ssub.s32 %s12, 1
        %p146 = scmp.lt.s32.totalorder %s17, 1
        %s147 = scalar_select %p146, %s17, 1
        %s148 = smul.addr %s147, 8
        %s149 = smul.addr %s148, 8
        %s150 = scalar_lea.vmem %s0, %s149
        %p151 = pneg %p38
        %p152 = pneg %p35
        %p153 = pneg %p59
        %p154 = pneg %p56
        %p155 = pneg %p80
        %p156 = pneg %p77
        %p157 = pneg %p106
        %p158 = pneg %p103
        %s159 = sand.u32 %s93, 1
        %s160 = scalar_lea.sflag [#allocation3], %s159
        %s161 = sand.u32 %s93, 1
        %s162 = smul.addr %s161, 64
        %s163 = scalar_lea.vmem [#allocation2], %s162
        %p164 = scmp.lt.s32.totalorder %s17, 1
        %s165 = scalar_select %p164, %s17, 1
        %s166 = smul.addr %s165, 8
        %s167 = smul.addr %s166, 8
        %s168 = scalar_lea.vmem %s0, %s167
        %v169 = vlaneseq
        %v170 = vand.u32 %v169, 127
        %v171 = vadd.s32 %v170, 128
        %v172 = vand.u32 %v170, 15
        %v173 = vand.u32 %v171, 15
        %vm174 = vcmp.ge.s32.totalorder %v170, 16
        %vm175 = vcmp.ge.s32.totalorder %v171, 16
        %vm176 = vcmp.lt.s32.totalorder %v170, 240
        %vm177 = vcmp.lt.s32.totalorder %v171, 240
        %vm178 = vcmp.ge.s32.totalorder %v172, 1
        %vm179 = vcmp.ge.s32.totalorder %v173, 1
        %vm180 = vcmp.le.s32.totalorder %v172, 14
        %vm181 = vcmp.le.s32.totalorder %v173, 14
        %vm182 = vmand %vm174, %vm178
        %vm183 = vmand %vm175, %vm179
        %vm184 = vmand %vm174, %vm180
        %vm185 = vmand %vm175, %vm181
        %vm186 = vmand %vm176, %vm178
        %vm187 = vmand %vm177, %vm179
        %vm188 = vmand %vm176, %vm180
        %vm189 = vmand %vm177, %vm181
        %v190 = vld [vmem:[%s168] sm:$0xff]
        %v191 = vld [vmem:[%s168 + $0x8] sm:$0xff]
        %v192 = vld [vmem:[%s168 + $0x10] sm:$0xff]
        %v193 = vld [vmem:[%s168 + $0x18] sm:$0xff]
        %v194 = vld [vmem:[%s168 + $0x20] sm:$0xff]
        %v195 = vld [vmem:[%s168 + $0x28] sm:$0xff]
        %v196 = vld [vmem:[%s168 + $0x30] sm:$0xff]
        %v197 = vld [vmem:[%s168 + $0x38] sm:$0xff]
        %v198 = vld [vmem:[%s1] sm:$0xff]
        %v199 = vld [vmem:[%s1 + $0x8] sm:$0xff]
        %v200 = vld [vmem:[%s1 + $0x10] sm:$0xff]
        %v201 = vld [vmem:[%s1 + $0x18] sm:$0xff]
        %v202 = vld [vmem:[%s1 + $0x20] sm:$0xff]
        %v203 = vld [vmem:[%s1 + $0x28] sm:$0xff]
        %v204 = vld [vmem:[%s1 + $0x30] sm:$0xff]
        %v205 = vld [vmem:[%s1 + $0x38] sm:$0xff]
        %v206 = vld [vmem:[%s2] sm:$0xff]
        %v207 = vld [vmem:[%s2 + $0x8] sm:$0xff]
        %v208 = vld [vmem:[%s2 + $0x10] sm:$0xff]
        %v209 = vld [vmem:[%s2 + $0x18] sm:$0xff]
        %v210 = vld [vmem:[%s2 + $0x20] sm:$0xff]
        %v211 = vld [vmem:[%s2 + $0x28] sm:$0xff]
        %v212 = vld [vmem:[%s2 + $0x30] sm:$0xff]
        %v213 = vld [vmem:[%s2 + $0x38] sm:$0xff]
        %215 = vset.pattern.permute.xlu0 0
        %216 = vperm.xlu0 %215, %v206
        %v217 = vpop.permute.xlu0 %216
        %220 = vset.pattern.permute.xlu0 0
        %221 = vperm.xlu0 %220, %v207
        %v222 = vpop.permute.xlu0 %221
        %225 = vset.pattern.permute.xlu0 0
        %226 = vperm.xlu0 %225, %v208
        %v227 = vpop.permute.xlu0 %226
        %230 = vset.pattern.permute.xlu0 0
        %231 = vperm.xlu0 %230, %v209
        %v232 = vpop.permute.xlu0 %231
        %235 = vset.pattern.permute.xlu0 0
        %236 = vperm.xlu0 %235, %v210
        %v237 = vpop.permute.xlu0 %236
        %240 = vset.pattern.permute.xlu0 0
        %241 = vperm.xlu0 %240, %v211
        %v242 = vpop.permute.xlu0 %241
        %245 = vset.pattern.permute.xlu0 0
        %246 = vperm.xlu0 %245, %v212
        %v247 = vpop.permute.xlu0 %246
        %250 = vset.pattern.permute.xlu0 0
        %251 = vperm.xlu0 %250, %v213
        %v252 = vpop.permute.xlu0 %251
        %vm254 = vcmask 261120
        %v256 = vsel %vm254, %v198, 0
        %v259 = vsel %vm254, %v199, 0
        %v262 = vsel %vm254, %v200, 0
        %v265 = vsel %vm254, %v201, 0
        %v268 = vsel %vm254, %v202, 0
        %v271 = vsel %vm254, %v203, 0
        %v274 = vsel %vm254, %v204, 0
        %v277 = vsel %vm254, %v205, 0
        %279 = vmatprep.subr.mxu0 0.0
        %280 = vmatpush1.msra.mxu0 0.0
        %281 = vmatprep.subr.mxu0 0.0
        %282 = vmatpush1.msra.mxu0 0.0
        %283 = vmatprep.subr.mxu0 0.0
        %284 = vmatpush1.msra.mxu0 0.0
        %285 = vmatprep.subr.mxu0 0.0
        %286 = vmatpush1.msra.mxu0 0.0
        %287 = vmatprep.subr.mxu0 0.0
        %288 = vmatpush1.msra.mxu0 0.0
        %289 = vmatprep.subr.mxu0 0.0
        %290 = vmatpush1.msra.mxu0 0.0
        %291 = vmatprep.subr.mxu0 0.0
        %292 = vmatpush1.msra.mxu0 0.0
        %293 = vmatprep.subr.mxu0 0.0
        %294 = vmatpush1.msra.mxu0 0.0
        %295 = vmatprep.subr.mxu0 0.0
        %296 = vmatpush1.msra.mxu0 0.0
        %297 = vmatprep.subr.mxu0 0.0
        %298 = vmatpush1.msra.mxu0 0.0
        %299 = vmatprep.subr.mxu0 0.0
        %300 = vmatpush1.msra.mxu0 0.0
        %301 = vmatprep.subr.mxu0 0.0
        %302 = vmatpush1.msra.mxu0 0.0
        %303 = vmatprep.subr.mxu0 %v197
        %304 = vmatpush1.msra.mxu0 %v196
        %305 = vmatprep.subr.mxu0 %v195
        %306 = vmatpush1.msra.mxu0 %v194
        %307 = vmatprep.subr.mxu0 %v193
        %308 = vmatpush1.msra.mxu0 %v192
        %309 = vmatprep.subr.mxu0 %v191
        %310 = vmatpush1.msra.mxu0 %v190
        %311 = vmatprep.subr.mxu0 0.0
        %312 = vmatpush2.msra.mxu0 0.0
        %313 = vmatprep.subr.mxu0 0.0
        %314 = vmatpush2.msra.mxu0 0.0
        %315 = vmatprep.subr.mxu0 0.0
        %316 = vmatpush2.msra.mxu0 0.0
        %317 = vmatprep.subr.mxu0 0.0
        %318 = vmatpush2.msra.mxu0 0.0
        %319 = vmatprep.subr.mxu0 0.0
        %320 = vmatpush2.msra.mxu0 0.0
        %321 = vmatprep.subr.mxu0 0.0
        %322 = vmatpush2.msra.mxu0 0.0
        %323 = vmatprep.subr.mxu0 0.0
        %324 = vmatpush2.msra.mxu0 0.0
        %325 = vmatprep.subr.mxu0 0.0
        %326 = vmatpush2.msra.mxu0 0.0
        %327 = vmatprep.subr.mxu0 0.0
        %328 = vmatpush2.msra.mxu0 0.0
        %329 = vmatprep.subr.mxu0 0.0
        %330 = vmatpush2.msra.mxu0 0.0
        %331 = vmatprep.subr.mxu0 0.0
        %332 = vmatpush2.msra.mxu0 0.0
        %333 = vmatprep.subr.mxu0 0.0
        %334 = vmatpush2.msra.mxu0 0.0
        %335 = vmatprep.subr.mxu0 0.0
        %336 = vmatpush2.msra.mxu0 0.0
        %337 = vmatprep.subr.mxu0 0.0
        %338 = vmatpush2.msra.mxu0 0.0
        %339 = vmatprep.subr.mxu0 0.0
        %340 = vmatpush2.msra.mxu0 0.0
        %341 = vmatprep.subr.mxu0 0.0
        %342 = vmatpush2.msra.mxu0 0.0
        %343 = vmatprep.mubr.f32.mxu0 0.0
        %344 = vmatmul.mubr.f32.gmra.mxu0 %v256
        %v345 = vpop.f32.mrf.mxu0
        %v346 = vadd.f32 %v217, %v345
        %v347 = vpop.f32.mrf.mxu0
        %v348 = vadd.f32 %v217, %v347
        %349 = vmatprep.mubr.f32.mxu0 0.0
        %350 = vmatmul.mubr.f32.gmra.mxu0 %v259
        %v351 = vpop.f32.mrf.mxu0
        %v352 = vadd.f32 %v222, %v351
        %v353 = vpop.f32.mrf.mxu0
        %v354 = vadd.f32 %v222, %v353
        %355 = vmatprep.mubr.f32.mxu0 0.0
        %356 = vmatmul.mubr.f32.gmra.mxu0 %v262
        %v357 = vpop.f32.mrf.mxu0
        %v358 = vadd.f32 %v227, %v357
        %v359 = vpop.f32.mrf.mxu0
        %v360 = vadd.f32 %v227, %v359
        %361 = vmatprep.mubr.f32.mxu0 0.0
        %362 = vmatmul.mubr.f32.gmra.mxu0 %v265
        %v363 = vpop.f32.mrf.mxu0
        %v364 = vadd.f32 %v232, %v363
        %v365 = vpop.f32.mrf.mxu0
        %v366 = vadd.f32 %v232, %v365
        %367 = vmatprep.mubr.f32.mxu0 0.0
        %368 = vmatmul.mubr.f32.gmra.mxu0 %v268
        %v369 = vpop.f32.mrf.mxu0
        %v370 = vadd.f32 %v237, %v369
        %v371 = vpop.f32.mrf.mxu0
        %v372 = vadd.f32 %v237, %v371
        %373 = vmatprep.mubr.f32.mxu0 0.0
        %374 = vmatmul.mubr.f32.gmra.mxu0 %v271
        %v375 = vpop.f32.mrf.mxu0
        %v376 = vadd.f32 %v242, %v375
        %v377 = vpop.f32.mrf.mxu0
        %v378 = vadd.f32 %v242, %v377
        %379 = vmatprep.mubr.f32.mxu0 0.0
        %380 = vmatmul.mubr.f32.gmra.mxu0 %v274
        %v381 = vpop.f32.mrf.mxu0
        %v382 = vadd.f32 %v247, %v381
        %v383 = vpop.f32.mrf.mxu0
        %v384 = vadd.f32 %v247, %v383
        %385 = vmatprep.mubr.f32.mxu0 0.0
        %386 = vmatmul.mubr.f32.gmra.mxu0 %v277
        %v387 = vpop.f32.mrf.mxu0
        %v388 = vadd.f32 %v252, %v387
        %v389 = vpop.f32.mrf.mxu0
        %v390 = vadd.f32 %v252, %v389
        %391 = vdwg.mxu0
        %v392 = vmax.f32 %v346, 0.0
        %v393 = vmax.f32 %v348, 0.0
        %v394 = vmax.f32 %v352, 0.0
        %v395 = vmax.f32 %v354, 0.0
        %v396 = vmax.f32 %v358, 0.0
        %v397 = vmax.f32 %v360, 0.0
        %v398 = vmax.f32 %v364, 0.0
        %v399 = vmax.f32 %v366, 0.0
        %v400 = vmax.f32 %v370, 0.0
        %v401 = vmax.f32 %v372, 0.0
        %v402 = vmax.f32 %v376, 0.0
        %v403 = vmax.f32 %v378, 0.0
        %v404 = vmax.f32 %v382, 0.0
        %v405 = vmax.f32 %v384, 0.0
        %v406 = vmax.f32 %v388, 0.0
        %v407 = vmax.f32 %v390, 0.0
        %v408 = vmin.f32 %v392, 6.0
        %v409 = vmin.f32 %v393, 6.0
        %v410 = vmin.f32 %v394, 6.0
        %v411 = vmin.f32 %v395, 6.0
        %v412 = vmin.f32 %v396, 6.0
        %v413 = vmin.f32 %v397, 6.0
        %v414 = vmin.f32 %v398, 6.0
        %v415 = vmin.f32 %v399, 6.0
        %v416 = vmin.f32 %v400, 6.0
        %v417 = vmin.f32 %v401, 6.0
        %v418 = vmin.f32 %v402, 6.0
        %v419 = vmin.f32 %v403, 6.0
        %v420 = vmin.f32 %v404, 6.0
        %v421 = vmin.f32 %v405, 6.0
        %v422 = vmin.f32 %v406, 6.0
        %v423 = vmin.f32 %v407, 6.0
        %424 = vrot.lane.b32.xlu0 %v408, 17
        %v425 = vpop.permute.xlu0 %424
        %426 = vrot.lane.b32.xlu0 %v410, 17
        %v427 = vpop.permute.xlu0 %426
        %428 = vrot.lane.b32.xlu0 %v412, 17
        %v429 = vpop.permute.xlu0 %428
        %430 = vrot.lane.b32.xlu0 %v414, 17
        %v431 = vpop.permute.xlu0 %430
        %432 = vrot.lane.b32.xlu0 %v416, 17
        %v433 = vpop.permute.xlu0 %432
        %434 = vrot.lane.b32.xlu0 %v418, 17
        %v435 = vpop.permute.xlu0 %434
        %436 = vrot.lane.b32.xlu0 %v420, 17
        %v437 = vpop.permute.xlu0 %436
        %438 = vrot.lane.b32.xlu0 %v422, 17
        %v439 = vpop.permute.xlu0 %438
        %440 = vrot.lane.b32.xlu0 %v409, 17
        %v441 = vpop.permute.xlu0 %440
        %442 = vrot.lane.b32.xlu0 %v411, 17
        %v443 = vpop.permute.xlu0 %442
        %444 = vrot.lane.b32.xlu0 %v413, 17
        %v445 = vpop.permute.xlu0 %444
        %446 = vrot.lane.b32.xlu0 %v415, 17
        %v447 = vpop.permute.xlu0 %446
        %448 = vrot.lane.b32.xlu0 %v417, 17
        %v449 = vpop.permute.xlu0 %448
        %450 = vrot.lane.b32.xlu0 %v419, 17
        %v451 = vpop.permute.xlu0 %450
        %452 = vrot.lane.b32.xlu0 %v421, 17
        %v453 = vpop.permute.xlu0 %452
        %454 = vrot.lane.b32.xlu0 %v423, 17
        %v455 = vpop.permute.xlu0 %454
        %vm456 = vcmp.lt.s32.totalorder %v170, 17
        %v457 = vsel %vm456, %v425, %v441
        %v458 = vsel %vm456, %v427, %v443
        %v459 = vsel %vm456, %v429, %v445
        %v460 = vsel %vm456, %v431, %v447
        %v461 = vsel %vm456, %v433, %v449
        %v462 = vsel %vm456, %v435, %v451
        %v463 = vsel %vm456, %v437, %v453
        %v464 = vsel %vm456, %v439, %v455
        %v465 = vsel %vm456, %v441, %v425
        %v466 = vsel %vm456, %v443, %v427
        %v467 = vsel %vm456, %v445, %v429
        %v468 = vsel %vm456, %v447, %v431
        %v469 = vsel %vm456, %v449, %v433
        %v470 = vsel %vm456, %v451, %v435
        %v471 = vsel %vm456, %v453, %v437
        %v472 = vsel %vm456, %v455, %v439
        %v473 = vsel %vm182, 1, 0
        %v474 = vsel %vm183, 1, 0
        %vm475 = vcmp.eq.s32.totalorder %v473, 1
        %vm476 = vcmp.eq.s32.totalorder %v474, 1
        %v477 = vsel %vm475, %v465, 0.0
        %v478 = vsel %vm476, %v457, 0.0
        %v479 = vsel %vm475, %v466, 0.0
        %v480 = vsel %vm476, %v458, 0.0
        %v481 = vsel %vm475, %v467, 0.0
        %v482 = vsel %vm476, %v459, 0.0
        %v483 = vsel %vm475, %v468, 0.0
        %v484 = vsel %vm476, %v460, 0.0
        %v485 = vsel %vm475, %v469, 0.0
        %v486 = vsel %vm476, %v461, 0.0
        %v487 = vsel %vm475, %v470, 0.0
        %v488 = vsel %vm476, %v462, 0.0
        %v489 = vsel %vm475, %v471, 0.0
        %v490 = vsel %vm476, %v463, 0.0
        %v491 = vsel %vm475, %v472, 0.0
        %v492 = vsel %vm476, %v464, 0.0
        %493 = vset.pattern.permute.xlu0 1
        %494 = vperm.xlu0 %493, %v206
        %v495 = vpop.permute.xlu0 %494
        %497 = vset.pattern.permute.xlu0 1
        %498 = vperm.xlu0 %497, %v207
        %v499 = vpop.permute.xlu0 %498
        %501 = vset.pattern.permute.xlu0 1
        %502 = vperm.xlu0 %501, %v208
        %v503 = vpop.permute.xlu0 %502
        %505 = vset.pattern.permute.xlu0 1
        %506 = vperm.xlu0 %505, %v209
        %v507 = vpop.permute.xlu0 %506
        %509 = vset.pattern.permute.xlu0 1
        %510 = vperm.xlu0 %509, %v210
        %v511 = vpop.permute.xlu0 %510
        %513 = vset.pattern.permute.xlu0 1
        %514 = vperm.xlu0 %513, %v211
        %v515 = vpop.permute.xlu0 %514
        %517 = vset.pattern.permute.xlu0 1
        %518 = vperm.xlu0 %517, %v212
        %v519 = vpop.permute.xlu0 %518
        %521 = vset.pattern.permute.xlu0 1
        %522 = vperm.xlu0 %521, %v213
        %v523 = vpop.permute.xlu0 %522
        %v525 = vmul.f32 %v477, %v495
        %v526 = vmul.f32 %v478, %v495
        %v527 = vmul.f32 %v479, %v499
        %v528 = vmul.f32 %v480, %v499
        %v529 = vmul.f32 %v481, %v503
        %v530 = vmul.f32 %v482, %v503
        %v531 = vmul.f32 %v483, %v507
        %v532 = vmul.f32 %v484, %v507
        %v533 = vmul.f32 %v485, %v511
        %v534 = vmul.f32 %v486, %v511
        %v535 = vmul.f32 %v487, %v515
        %v536 = vmul.f32 %v488, %v515
        %v537 = vmul.f32 %v489, %v519
        %v538 = vmul.f32 %v490, %v519
        %v539 = vmul.f32 %v491, %v523
        %v540 = vmul.f32 %v492, %v523
        %541 = vrot.lane.b32.xlu0 %v408, 16
        %v542 = vpop.permute.xlu0 %541
        %543 = vrot.lane.b32.xlu0 %v410, 16
        %v544 = vpop.permute.xlu0 %543
        %545 = vrot.lane.b32.xlu0 %v412, 16
        %v546 = vpop.permute.xlu0 %545
        %547 = vrot.lane.b32.xlu0 %v414, 16
        %v548 = vpop.permute.xlu0 %547
        %549 = vrot.lane.b32.xlu0 %v416, 16
        %v550 = vpop.permute.xlu0 %549
        %551 = vrot.lane.b32.xlu0 %v418, 16
        %v552 = vpop.permute.xlu0 %551
        %553 = vrot.lane.b32.xlu0 %v420, 16
        %v554 = vpop.permute.xlu0 %553
        %555 = vrot.lane.b32.xlu0 %v422, 16
        %v556 = vpop.permute.xlu0 %555
        %557 = vrot.lane.b32.xlu0 %v409, 16
        %v558 = vpop.permute.xlu0 %557
        %559 = vrot.lane.b32.xlu0 %v411, 16
        %v560 = vpop.permute.xlu0 %559
        %561 = vrot.lane.b32.xlu0 %v413, 16
        %v562 = vpop.permute.xlu0 %561
        %563 = vrot.lane.b32.xlu0 %v415, 16
        %v564 = vpop.permute.xlu0 %563
        %565 = vrot.lane.b32.xlu0 %v417, 16
        %v566 = vpop.permute.xlu0 %565
        %567 = vrot.lane.b32.xlu0 %v419, 16
        %v568 = vpop.permute.xlu0 %567
        %569 = vrot.lane.b32.xlu0 %v421, 16
        %v570 = vpop.permute.xlu0 %569
        %571 = vrot.lane.b32.xlu0 %v423, 16
        %v572 = vpop.permute.xlu0 %571
        %vm573 = vcmp.lt.s32.totalorder %v170, 16
        %v574 = vsel %vm573, %v542, %v558
        %v575 = vsel %vm573, %v544, %v560
        %v576 = vsel %vm573, %v546, %v562
        %v577 = vsel %vm573, %v548, %v564
        %v578 = vsel %vm573, %v550, %v566
        %v579 = vsel %vm573, %v552, %v568
        %v580 = vsel %vm573, %v554, %v570
        %v581 = vsel %vm573, %v556, %v572
        %v582 = vsel %vm573, %v558, %v542
        %v583 = vsel %vm573, %v560, %v544
        %v584 = vsel %vm573, %v562, %v546
        %v585 = vsel %vm573, %v564, %v548
        %v586 = vsel %vm573, %v566, %v550
        %v587 = vsel %vm573, %v568, %v552
        %v588 = vsel %vm573, %v570, %v554
        %v589 = vsel %vm573, %v572, %v556
        %v590 = vsel %vm174, 1, 0
        %v591 = vsel %vm175, 1, 0
        %vm592 = vcmp.eq.s32.totalorder %v590, 1
        %vm593 = vcmp.eq.s32.totalorder %v591, 1
        %v594 = vsel %vm592, %v582, 0.0
        %v595 = vsel %vm593, %v574, 0.0
        %v596 = vsel %vm592, %v583, 0.0
        %v597 = vsel %vm593, %v575, 0.0
        %v598 = vsel %vm592, %v584, 0.0
        %v599 = vsel %vm593, %v576, 0.0
        %v600 = vsel %vm592, %v585, 0.0
        %v601 = vsel %vm593, %v577, 0.0
        %v602 = vsel %vm592, %v586, 0.0
        %v603 = vsel %vm593, %v578, 0.0
        %v604 = vsel %vm592, %v587, 0.0
        %v605 = vsel %vm593, %v579, 0.0
        %v606 = vsel %vm592, %v588, 0.0
        %v607 = vsel %vm593, %v580, 0.0
        %v608 = vsel %vm592, %v589, 0.0
        %v609 = vsel %vm593, %v581, 0.0
        %610 = vset.pattern.permute.xlu0 2
        %611 = vperm.xlu0 %610, %v206
        %v612 = vpop.permute.xlu0 %611
        %614 = vset.pattern.permute.xlu0 2
        %615 = vperm.xlu0 %614, %v207
        %v616 = vpop.permute.xlu0 %615
        %618 = vset.pattern.permute.xlu0 2
        %619 = vperm.xlu0 %618, %v208
        %v620 = vpop.permute.xlu0 %619
        %622 = vset.pattern.permute.xlu0 2
        %623 = vperm.xlu0 %622, %v209
        %v624 = vpop.permute.xlu0 %623
        %626 = vset.pattern.permute.xlu0 2
        %627 = vperm.xlu0 %626, %v210
        %v628 = vpop.permute.xlu0 %627
        %630 = vset.pattern.permute.xlu0 2
        %631 = vperm.xlu0 %630, %v211
        %v632 = vpop.permute.xlu0 %631
        %634 = vset.pattern.permute.xlu0 2
        %635 = vperm.xlu0 %634, %v212
        %v636 = vpop.permute.xlu0 %635
        %638 = vset.pattern.permute.xlu0 2
        %639 = vperm.xlu0 %638, %v213
        %v640 = vpop.permute.xlu0 %639
        %v642 = vmul.f32 %v594, %v612
        %v643 = vmul.f32 %v595, %v612
        %v644 = vmul.f32 %v596, %v616
        %v645 = vmul.f32 %v597, %v616
        %v646 = vmul.f32 %v598, %v620
        %v647 = vmul.f32 %v599, %v620
        %v648 = vmul.f32 %v600, %v624
        %v649 = vmul.f32 %v601, %v624
        %v650 = vmul.f32 %v602, %v628
        %v651 = vmul.f32 %v603, %v628
        %v652 = vmul.f32 %v604, %v632
        %v653 = vmul.f32 %v605, %v632
        %v654 = vmul.f32 %v606, %v636
        %v655 = vmul.f32 %v607, %v636
        %v656 = vmul.f32 %v608, %v640
        %v657 = vmul.f32 %v609, %v640
        %v658 = vadd.f32 %v525, %v642
        %v659 = vadd.f32 %v526, %v643
        %v660 = vadd.f32 %v527, %v644
        %v661 = vadd.f32 %v528, %v645
        %v662 = vadd.f32 %v529, %v646
        %v663 = vadd.f32 %v530, %v647
        %v664 = vadd.f32 %v531, %v648
        %v665 = vadd.f32 %v532, %v649
        %v666 = vadd.f32 %v533, %v650
        %v667 = vadd.f32 %v534, %v651
        %v668 = vadd.f32 %v535, %v652
        %v669 = vadd.f32 %v536, %v653
        %v670 = vadd.f32 %v537, %v654
        %v671 = vadd.f32 %v538, %v655
        %v672 = vadd.f32 %v539, %v656
        %v673 = vadd.f32 %v540, %v657
        %674 = vrot.lane.b32.xlu0 %v408, 15
        %v675 = vpop.permute.xlu0 %674
        %676 = vrot.lane.b32.xlu0 %v410, 15
        %v677 = vpop.permute.xlu0 %676
        %678 = vrot.lane.b32.xlu0 %v412, 15
        %v679 = vpop.permute.xlu0 %678
        %680 = vrot.lane.b32.xlu0 %v414, 15
        %v681 = vpop.permute.xlu0 %680
        %682 = vrot.lane.b32.xlu0 %v416, 15
        %v683 = vpop.permute.xlu0 %682
        %684 = vrot.lane.b32.xlu0 %v418, 15
        %v685 = vpop.permute.xlu0 %684
        %686 = vrot.lane.b32.xlu0 %v420, 15
        %v687 = vpop.permute.xlu0 %686
        %688 = vrot.lane.b32.xlu0 %v422, 15
        %v689 = vpop.permute.xlu0 %688
        %690 = vrot.lane.b32.xlu0 %v409, 15
        %v691 = vpop.permute.xlu0 %690
        %692 = vrot.lane.b32.xlu0 %v411, 15
        %v693 = vpop.permute.xlu0 %692
        %694 = vrot.lane.b32.xlu0 %v413, 15
        %v695 = vpop.permute.xlu0 %694
        %696 = vrot.lane.b32.xlu0 %v415, 15
        %v697 = vpop.permute.xlu0 %696
        %698 = vrot.lane.b32.xlu0 %v417, 15
        %v699 = vpop.permute.xlu0 %698
        %700 = vrot.lane.b32.xlu0 %v419, 15
        %v701 = vpop.permute.xlu0 %700
        %702 = vrot.lane.b32.xlu0 %v421, 15
        %v703 = vpop.permute.xlu0 %702
        %704 = vrot.lane.b32.xlu0 %v423, 15
        %v705 = vpop.permute.xlu0 %704
        %vm706 = vcmp.lt.s32.totalorder %v170, 15
        %v707 = vsel %vm706, %v675, %v691
        %v708 = vsel %vm706, %v677, %v693
        %v709 = vsel %vm706, %v679, %v695
        %v710 = vsel %vm706, %v681, %v697
        %v711 = vsel %vm706, %v683, %v699
        %v712 = vsel %vm706, %v685, %v701
        %v713 = vsel %vm706, %v687, %v703
        %v714 = vsel %vm706, %v689, %v705
        %v715 = vsel %vm706, %v691, %v675
        %v716 = vsel %vm706, %v693, %v677
        %v717 = vsel %vm706, %v695, %v679
        %v718 = vsel %vm706, %v697, %v681
        %v719 = vsel %vm706, %v699, %v683
        %v720 = vsel %vm706, %v701, %v685
        %v721 = vsel %vm706, %v703, %v687
        %v722 = vsel %vm706, %v705, %v689
        %v723 = vsel %vm184, 1, 0
        %v724 = vsel %vm185, 1, 0
        %vm725 = vcmp.eq.s32.totalorder %v723, 1
        %vm726 = vcmp.eq.s32.totalorder %v724, 1
        %v727 = vsel %vm725, %v715, 0.0
        %v728 = vsel %vm726, %v707, 0.0
        %v729 = vsel %vm725, %v716, 0.0
        %v730 = vsel %vm726, %v708, 0.0
        %v731 = vsel %vm725, %v717, 0.0
        %v732 = vsel %vm726, %v709, 0.0
        %v733 = vsel %vm725, %v718, 0.0
        %v734 = vsel %vm726, %v710, 0.0
        %v735 = vsel %vm725, %v719, 0.0
        %v736 = vsel %vm726, %v711, 0.0
        %v737 = vsel %vm725, %v720, 0.0
        %v738 = vsel %vm726, %v712, 0.0
        %v739 = vsel %vm725, %v721, 0.0
        %v740 = vsel %vm726, %v713, 0.0
        %v741 = vsel %vm725, %v722, 0.0
        %v742 = vsel %vm726, %v714, 0.0
        %743 = vset.pattern.permute.xlu0 3
        %744 = vperm.xlu0 %743, %v206
        %v745 = vpop.permute.xlu0 %744
        %747 = vset.pattern.permute.xlu0 3
        %748 = vperm.xlu0 %747, %v207
        %v749 = vpop.permute.xlu0 %748
        %751 = vset.pattern.permute.xlu0 3
        %752 = vperm.xlu0 %751, %v208
        %v753 = vpop.permute.xlu0 %752
        %755 = vset.pattern.permute.xlu0 3
        %756 = vperm.xlu0 %755, %v209
        %v757 = vpop.permute.xlu0 %756
        %759 = vset.pattern.permute.xlu0 3
        %760 = vperm.xlu0 %759, %v210
        %v761 = vpop.permute.xlu0 %760
        %763 = vset.pattern.permute.xlu0 3
        %764 = vperm.xlu0 %763, %v211
        %v765 = vpop.permute.xlu0 %764
        %767 = vset.pattern.permute.xlu0 3
        %768 = vperm.xlu0 %767, %v212
        %v769 = vpop.permute.xlu0 %768
        %771 = vset.pattern.permute.xlu0 3
        %772 = vperm.xlu0 %771, %v213
        %v773 = vpop.permute.xlu0 %772
        %v775 = vmul.f32 %v727, %v745
        %v776 = vmul.f32 %v728, %v745
        %v777 = vmul.f32 %v729, %v749
        %v778 = vmul.f32 %v730, %v749
        %v779 = vmul.f32 %v731, %v753
        %v780 = vmul.f32 %v732, %v753
        %v781 = vmul.f32 %v733, %v757
        %v782 = vmul.f32 %v734, %v757
        %v783 = vmul.f32 %v735, %v761
        %v784 = vmul.f32 %v736, %v761
        %v785 = vmul.f32 %v737, %v765
        %v786 = vmul.f32 %v738, %v765
        %v787 = vmul.f32 %v739, %v769
        %v788 = vmul.f32 %v740, %v769
        %v789 = vmul.f32 %v741, %v773
        %v790 = vmul.f32 %v742, %v773
        %v791 = vadd.f32 %v658, %v775
        %v792 = vadd.f32 %v659, %v776
        %v793 = vadd.f32 %v660, %v777
        %v794 = vadd.f32 %v661, %v778
        %v795 = vadd.f32 %v662, %v779
        %v796 = vadd.f32 %v663, %v780
        %v797 = vadd.f32 %v664, %v781
        %v798 = vadd.f32 %v665, %v782
        %v799 = vadd.f32 %v666, %v783
        %v800 = vadd.f32 %v667, %v784
        %v801 = vadd.f32 %v668, %v785
        %v802 = vadd.f32 %v669, %v786
        %v803 = vadd.f32 %v670, %v787
        %v804 = vadd.f32 %v671, %v788
        %v805 = vadd.f32 %v672, %v789
        %v806 = vadd.f32 %v673, %v790
        %807 = vrot.lane.b32.xlu0 %v408, 1
        %v808 = vpop.permute.xlu0 %807
        %809 = vrot.lane.b32.xlu0 %v410, 1
        %v810 = vpop.permute.xlu0 %809
        %811 = vrot.lane.b32.xlu0 %v412, 1
        %v812 = vpop.permute.xlu0 %811
        %813 = vrot.lane.b32.xlu0 %v414, 1
        %v814 = vpop.permute.xlu0 %813
        %815 = vrot.lane.b32.xlu0 %v416, 1
        %v816 = vpop.permute.xlu0 %815
        %817 = vrot.lane.b32.xlu0 %v418, 1
        %v818 = vpop.permute.xlu0 %817
        %819 = vrot.lane.b32.xlu0 %v420, 1
        %v820 = vpop.permute.xlu0 %819
        %821 = vrot.lane.b32.xlu0 %v422, 1
        %v822 = vpop.permute.xlu0 %821
        %823 = vrot.lane.b32.xlu0 %v409, 1
        %v824 = vpop.permute.xlu0 %823
        %825 = vrot.lane.b32.xlu0 %v411, 1
        %v826 = vpop.permute.xlu0 %825
        %827 = vrot.lane.b32.xlu0 %v413, 1
        %v828 = vpop.permute.xlu0 %827
        %829 = vrot.lane.b32.xlu0 %v415, 1
        %v830 = vpop.permute.xlu0 %829
        %831 = vrot.lane.b32.xlu0 %v417, 1
        %v832 = vpop.permute.xlu0 %831
        %833 = vrot.lane.b32.xlu0 %v419, 1
        %v834 = vpop.permute.xlu0 %833
        %835 = vrot.lane.b32.xlu0 %v421, 1
        %v836 = vpop.permute.xlu0 %835
        %837 = vrot.lane.b32.xlu0 %v423, 1
        %v838 = vpop.permute.xlu0 %837
        %vm839 = vcmp.lt.s32.totalorder %v170, 1
        %v840 = vsel %vm839, %v808, %v824
        %v841 = vsel %vm839, %v810, %v826
        %v842 = vsel %vm839, %v812, %v828
        %v843 = vsel %vm839, %v814, %v830
        %v844 = vsel %vm839, %v816, %v832
        %v845 = vsel %vm839, %v818, %v834
        %v846 = vsel %vm839, %v820, %v836
        %v847 = vsel %vm839, %v822, %v838
        %v848 = vsel %vm839, %v824, %v808
        %v849 = vsel %vm839, %v826, %v810
        %v850 = vsel %vm839, %v828, %v812
        %v851 = vsel %vm839, %v830, %v814
        %v852 = vsel %vm839, %v832, %v816
        %v853 = vsel %vm839, %v834, %v818
        %v854 = vsel %vm839, %v836, %v820
        %v855 = vsel %vm839, %v838, %v822
        %v856 = vsel %vm178, 1, 0
        %v857 = vsel %vm179, 1, 0
        %vm858 = vcmp.eq.s32.totalorder %v856, 1
        %vm859 = vcmp.eq.s32.totalorder %v857, 1
        %v860 = vsel %vm858, %v848, 0.0
        %v861 = vsel %vm859, %v840, 0.0
        %v862 = vsel %vm858, %v849, 0.0
        %v863 = vsel %vm859, %v841, 0.0
        %v864 = vsel %vm858, %v850, 0.0
        %v865 = vsel %vm859, %v842, 0.0
        %v866 = vsel %vm858, %v851, 0.0
        %v867 = vsel %vm859, %v843, 0.0
        %v868 = vsel %vm858, %v852, 0.0
        %v869 = vsel %vm859, %v844, 0.0
        %v870 = vsel %vm858, %v853, 0.0
        %v871 = vsel %vm859, %v845, 0.0
        %v872 = vsel %vm858, %v854, 0.0
        %v873 = vsel %vm859, %v846, 0.0
        %v874 = vsel %vm858, %v855, 0.0
        %v875 = vsel %vm859, %v847, 0.0
        %876 = vset.pattern.permute.xlu0 4
        %877 = vperm.xlu0 %876, %v206
        %v878 = vpop.permute.xlu0 %877
        %880 = vset.pattern.permute.xlu0 4
        %881 = vperm.xlu0 %880, %v207
        %v882 = vpop.permute.xlu0 %881
        %884 = vset.pattern.permute.xlu0 4
        %885 = vperm.xlu0 %884, %v208
        %v886 = vpop.permute.xlu0 %885
        %888 = vset.pattern.permute.xlu0 4
        %889 = vperm.xlu0 %888, %v209
        %v890 = vpop.permute.xlu0 %889
        %892 = vset.pattern.permute.xlu0 4
        %893 = vperm.xlu0 %892, %v210
        %v894 = vpop.permute.xlu0 %893
        %896 = vset.pattern.permute.xlu0 4
        %897 = vperm.xlu0 %896, %v211
        %v898 = vpop.permute.xlu0 %897
        %900 = vset.pattern.permute.xlu0 4
        %901 = vperm.xlu0 %900, %v212
        %v902 = vpop.permute.xlu0 %901
        %904 = vset.pattern.permute.xlu0 4
        %905 = vperm.xlu0 %904, %v213
        %v906 = vpop.permute.xlu0 %905
        %v908 = vmul.f32 %v860, %v878
        %v909 = vmul.f32 %v861, %v878
        %v910 = vmul.f32 %v862, %v882
        %v911 = vmul.f32 %v863, %v882
        %v912 = vmul.f32 %v864, %v886
        %v913 = vmul.f32 %v865, %v886
        %v914 = vmul.f32 %v866, %v890
        %v915 = vmul.f32 %v867, %v890
        %v916 = vmul.f32 %v868, %v894
        %v917 = vmul.f32 %v869, %v894
        %v918 = vmul.f32 %v870, %v898
        %v919 = vmul.f32 %v871, %v898
        %v920 = vmul.f32 %v872, %v902
        %v921 = vmul.f32 %v873, %v902
        %v922 = vmul.f32 %v874, %v906
        %v923 = vmul.f32 %v875, %v906
        %v924 = vadd.f32 %v791, %v908
        %v925 = vadd.f32 %v792, %v909
        %v926 = vadd.f32 %v793, %v910
        %v927 = vadd.f32 %v794, %v911
        %v928 = vadd.f32 %v795, %v912
        %v929 = vadd.f32 %v796, %v913
        %v930 = vadd.f32 %v797, %v914
        %v931 = vadd.f32 %v798, %v915
        %v932 = vadd.f32 %v799, %v916
        %v933 = vadd.f32 %v800, %v917
        %v934 = vadd.f32 %v801, %v918
        %v935 = vadd.f32 %v802, %v919
        %v936 = vadd.f32 %v803, %v920
        %v937 = vadd.f32 %v804, %v921
        %v938 = vadd.f32 %v805, %v922
        %v939 = vadd.f32 %v806, %v923
        %940 = vset.pattern.permute.xlu0 5
        %941 = vperm.xlu0 %940, %v206
        %v942 = vpop.permute.xlu0 %941
        %944 = vset.pattern.permute.xlu0 5
        %945 = vperm.xlu0 %944, %v207
        %v946 = vpop.permute.xlu0 %945
        %948 = vset.pattern.permute.xlu0 5
        %949 = vperm.xlu0 %948, %v208
        %v950 = vpop.permute.xlu0 %949
        %952 = vset.pattern.permute.xlu0 5
        %953 = vperm.xlu0 %952, %v209
        %v954 = vpop.permute.xlu0 %953
        %956 = vset.pattern.permute.xlu0 5
        %957 = vperm.xlu0 %956, %v210
        %v958 = vpop.permute.xlu0 %957
        %960 = vset.pattern.permute.xlu0 5
        %961 = vperm.xlu0 %960, %v211
        %v962 = vpop.permute.xlu0 %961
        %964 = vset.pattern.permute.xlu0 5
        %965 = vperm.xlu0 %964, %v212
        %v966 = vpop.permute.xlu0 %965
        %968 = vset.pattern.permute.xlu0 5
        %969 = vperm.xlu0 %968, %v213
        %v970 = vpop.permute.xlu0 %969
        %v972 = vmul.f32 %v408, %v942
        %v973 = vmul.f32 %v409, %v942
        %v974 = vmul.f32 %v410, %v946
        %v975 = vmul.f32 %v411, %v946
        %v976 = vmul.f32 %v412, %v950
        %v977 = vmul.f32 %v413, %v950
        %v978 = vmul.f32 %v414, %v954
        %v979 = vmul.f32 %v415, %v954
        %v980 = vmul.f32 %v416, %v958
        %v981 = vmul.f32 %v417, %v958
        %v982 = vmul.f32 %v418, %v962
        %v983 = vmul.f32 %v419, %v962
        %v984 = vmul.f32 %v420, %v966
        %v985 = vmul.f32 %v421, %v966
        %v986 = vmul.f32 %v422, %v970
        %v987 = vmul.f32 %v423, %v970
        %v988 = vadd.f32 %v924, %v972
        %v989 = vadd.f32 %v925, %v973
        %v990 = vadd.f32 %v926, %v974
        %v991 = vadd.f32 %v927, %v975
        %v992 = vadd.f32 %v928, %v976
        %v993 = vadd.f32 %v929, %v977
        %v994 = vadd.f32 %v930, %v978
        %v995 = vadd.f32 %v931, %v979
        %v996 = vadd.f32 %v932, %v980
        %v997 = vadd.f32 %v933, %v981
        %v998 = vadd.f32 %v934, %v982
        %v999 = vadd.f32 %v935, %v983
        %v1000 = vadd.f32 %v936, %v984
        %v1001 = vadd.f32 %v937, %v985
        %v1002 = vadd.f32 %v938, %v986
        %v1003 = vadd.f32 %v939, %v987
        %1004 = vrot.lane.b32.xlu0 %v408, 127
        %v1005 = vpop.permute.xlu0 %1004
        %1006 = vrot.lane.b32.xlu0 %v410, 127
        %v1007 = vpop.permute.xlu0 %1006
        %1008 = vrot.lane.b32.xlu0 %v412, 127
        %v1009 = vpop.permute.xlu0 %1008
        %1010 = vrot.lane.b32.xlu0 %v414, 127
        %v1011 = vpop.permute.xlu0 %1010
        %1012 = vrot.lane.b32.xlu0 %v416, 127
        %v1013 = vpop.permute.xlu0 %1012
        %1014 = vrot.lane.b32.xlu0 %v418, 127
        %v1015 = vpop.permute.xlu0 %1014
        %1016 = vrot.lane.b32.xlu0 %v420, 127
        %v1017 = vpop.permute.xlu0 %1016
        %1018 = vrot.lane.b32.xlu0 %v422, 127
        %v1019 = vpop.permute.xlu0 %1018
        %1020 = vrot.lane.b32.xlu0 %v409, 127
        %v1021 = vpop.permute.xlu0 %1020
        %1022 = vrot.lane.b32.xlu0 %v411, 127
        %v1023 = vpop.permute.xlu0 %1022
        %1024 = vrot.lane.b32.xlu0 %v413, 127
        %v1025 = vpop.permute.xlu0 %1024
        %1026 = vrot.lane.b32.xlu0 %v415, 127
        %v1027 = vpop.permute.xlu0 %1026
        %1028 = vrot.lane.b32.xlu0 %v417, 127
        %v1029 = vpop.permute.xlu0 %1028
        %1030 = vrot.lane.b32.xlu0 %v419, 127
        %v1031 = vpop.permute.xlu0 %1030
        %1032 = vrot.lane.b32.xlu0 %v421, 127
        %v1033 = vpop.permute.xlu0 %1032
        %1034 = vrot.lane.b32.xlu0 %v423, 127
        %v1035 = vpop.permute.xlu0 %1034
        %vm1036 = vcmp.lt.s32.totalorder %v170, 127
        %v1037 = vsel %vm1036, %v1005, %v1021
        %v1038 = vsel %vm1036, %v1007, %v1023
        %v1039 = vsel %vm1036, %v1009, %v1025
        %v1040 = vsel %vm1036, %v1011, %v1027
        %v1041 = vsel %vm1036, %v1013, %v1029
        %v1042 = vsel %vm1036, %v1015, %v1031
        %v1043 = vsel %vm1036, %v1017, %v1033
        %v1044 = vsel %vm1036, %v1019, %v1035
        %v1045 = vsel %vm1036, %v1021, %v1005
        %v1046 = vsel %vm1036, %v1023, %v1007
        %v1047 = vsel %vm1036, %v1025, %v1009
        %v1048 = vsel %vm1036, %v1027, %v1011
        %v1049 = vsel %vm1036, %v1029, %v1013
        %v1050 = vsel %vm1036, %v1031, %v1015
        %v1051 = vsel %vm1036, %v1033, %v1017
        %v1052 = vsel %vm1036, %v1035, %v1019
        %v1053 = vsel %vm180, 1, 0
        %v1054 = vsel %vm181, 1, 0
        %vm1055 = vcmp.eq.s32.totalorder %v1053, 1
        %vm1056 = vcmp.eq.s32.totalorder %v1054, 1
        %v1057 = vsel %vm1055, %v1037, 0.0
        %v1058 = vsel %vm1056, %v1045, 0.0
        %v1059 = vsel %vm1055, %v1038, 0.0
        %v1060 = vsel %vm1056, %v1046, 0.0
        %v1061 = vsel %vm1055, %v1039, 0.0
        %v1062 = vsel %vm1056, %v1047, 0.0
        %v1063 = vsel %vm1055, %v1040, 0.0
        %v1064 = vsel %vm1056, %v1048, 0.0
        %v1065 = vsel %vm1055, %v1041, 0.0
        %v1066 = vsel %vm1056, %v1049, 0.0
        %v1067 = vsel %vm1055, %v1042, 0.0
        %v1068 = vsel %vm1056, %v1050, 0.0
        %v1069 = vsel %vm1055, %v1043, 0.0
        %v1070 = vsel %vm1056, %v1051, 0.0
        %v1071 = vsel %vm1055, %v1044, 0.0
        %v1072 = vsel %vm1056, %v1052, 0.0
        %1073 = vset.pattern.permute.xlu0 6
        %1074 = vperm.xlu0 %1073, %v206
        %v1075 = vpop.permute.xlu0 %1074
        %1077 = vset.pattern.permute.xlu0 6
        %1078 = vperm.xlu0 %1077, %v207
        %v1079 = vpop.permute.xlu0 %1078
        %1081 = vset.pattern.permute.xlu0 6
        %1082 = vperm.xlu0 %1081, %v208
        %v1083 = vpop.permute.xlu0 %1082
        %1085 = vset.pattern.permute.xlu0 6
        %1086 = vperm.xlu0 %1085, %v209
        %v1087 = vpop.permute.xlu0 %1086
        %1089 = vset.pattern.permute.xlu0 6
        %1090 = vperm.xlu0 %1089, %v210
        %v1091 = vpop.permute.xlu0 %1090
        %1093 = vset.pattern.permute.xlu0 6
        %1094 = vperm.xlu0 %1093, %v211
        %v1095 = vpop.permute.xlu0 %1094
        %1097 = vset.pattern.permute.xlu0 6
        %1098 = vperm.xlu0 %1097, %v212
        %v1099 = vpop.permute.xlu0 %1098
        %1101 = vset.pattern.permute.xlu0 6
        %1102 = vperm.xlu0 %1101, %v213
        %v1103 = vpop.permute.xlu0 %1102
        %v1105 = vmul.f32 %v1057, %v1075
        %v1106 = vmul.f32 %v1058, %v1075
        %v1107 = vmul.f32 %v1059, %v1079
        %v1108 = vmul.f32 %v1060, %v1079
        %v1109 = vmul.f32 %v1061, %v1083
        %v1110 = vmul.f32 %v1062, %v1083
        %v1111 = vmul.f32 %v1063, %v1087
        %v1112 = vmul.f32 %v1064, %v1087
        %v1113 = vmul.f32 %v1065, %v1091
        %v1114 = vmul.f32 %v1066, %v1091
        %v1115 = vmul.f32 %v1067, %v1095
        %v1116 = vmul.f32 %v1068, %v1095
        %v1117 = vmul.f32 %v1069, %v1099
        %v1118 = vmul.f32 %v1070, %v1099
        %v1119 = vmul.f32 %v1071, %v1103
        %v1120 = vmul.f32 %v1072, %v1103
        %v1121 = vadd.f32 %v988, %v1105
        %v1122 = vadd.f32 %v989, %v1106
        %v1123 = vadd.f32 %v990, %v1107
        %v1124 = vadd.f32 %v991, %v1108
        %v1125 = vadd.f32 %v992, %v1109
        %v1126 = vadd.f32 %v993, %v1110
        %v1127 = vadd.f32 %v994, %v1111
        %v1128 = vadd.f32 %v995, %v1112
        %v1129 = vadd.f32 %v996, %v1113
        %v1130 = vadd.f32 %v997, %v1114
        %v1131 = vadd.f32 %v998, %v1115
        %v1132 = vadd.f32 %v999, %v1116
        %v1133 = vadd.f32 %v1000, %v1117
        %v1134 = vadd.f32 %v1001, %v1118
        %v1135 = vadd.f32 %v1002, %v1119
        %v1136 = vadd.f32 %v1003, %v1120
        %1137 = vrot.lane.b32.xlu0 %v408, 113
        %v1138 = vpop.permute.xlu0 %1137
        %1139 = vrot.lane.b32.xlu0 %v410, 113
        %v1140 = vpop.permute.xlu0 %1139
        %1141 = vrot.lane.b32.xlu0 %v412, 113
        %v1142 = vpop.permute.xlu0 %1141
        %1143 = vrot.lane.b32.xlu0 %v414, 113
        %v1144 = vpop.permute.xlu0 %1143
        %1145 = vrot.lane.b32.xlu0 %v416, 113
        %v1146 = vpop.permute.xlu0 %1145
        %1147 = vrot.lane.b32.xlu0 %v418, 113
        %v1148 = vpop.permute.xlu0 %1147
        %1149 = vrot.lane.b32.xlu0 %v420, 113
        %v1150 = vpop.permute.xlu0 %1149
        %1151 = vrot.lane.b32.xlu0 %v422, 113
        %v1152 = vpop.permute.xlu0 %1151
        %1153 = vrot.lane.b32.xlu0 %v409, 113
        %v1154 = vpop.permute.xlu0 %1153
        %1155 = vrot.lane.b32.xlu0 %v411, 113
        %v1156 = vpop.permute.xlu0 %1155
        %1157 = vrot.lane.b32.xlu0 %v413, 113
        %v1158 = vpop.permute.xlu0 %1157
        %1159 = vrot.lane.b32.xlu0 %v415, 113
        %v1160 = vpop.permute.xlu0 %1159
        %1161 = vrot.lane.b32.xlu0 %v417, 113
        %v1162 = vpop.permute.xlu0 %1161
        %1163 = vrot.lane.b32.xlu0 %v419, 113
        %v1164 = vpop.permute.xlu0 %1163
        %1165 = vrot.lane.b32.xlu0 %v421, 113
        %v1166 = vpop.permute.xlu0 %1165
        %1167 = vrot.lane.b32.xlu0 %v423, 113
        %v1168 = vpop.permute.xlu0 %1167
        %vm1169 = vcmp.lt.s32.totalorder %v170, 113
        %v1170 = vsel %vm1169, %v1138, %v1154
        %v1171 = vsel %vm1169, %v1140, %v1156
        %v1172 = vsel %vm1169, %v1142, %v1158
        %v1173 = vsel %vm1169, %v1144, %v1160
        %v1174 = vsel %vm1169, %v1146, %v1162
        %v1175 = vsel %vm1169, %v1148, %v1164
        %v1176 = vsel %vm1169, %v1150, %v1166
        %v1177 = vsel %vm1169, %v1152, %v1168
        %v1178 = vsel %vm1169, %v1154, %v1138
        %v1179 = vsel %vm1169, %v1156, %v1140
        %v1180 = vsel %vm1169, %v1158, %v1142
        %v1181 = vsel %vm1169, %v1160, %v1144
        %v1182 = vsel %vm1169, %v1162, %v1146
        %v1183 = vsel %vm1169, %v1164, %v1148
        %v1184 = vsel %vm1169, %v1166, %v1150
        %v1185 = vsel %vm1169, %v1168, %v1152
        %v1186 = vsel %vm186, 1, 0
        %v1187 = vsel %vm187, 1, 0
        %vm1188 = vcmp.eq.s32.totalorder %v1186, 1
        %vm1189 = vcmp.eq.s32.totalorder %v1187, 1
        %v1190 = vsel %vm1188, %v1170, 0.0
        %v1191 = vsel %vm1189, %v1178, 0.0
        %v1192 = vsel %vm1188, %v1171, 0.0
        %v1193 = vsel %vm1189, %v1179, 0.0
        %v1194 = vsel %vm1188, %v1172, 0.0
        %v1195 = vsel %vm1189, %v1180, 0.0
        %v1196 = vsel %vm1188, %v1173, 0.0
        %v1197 = vsel %vm1189, %v1181, 0.0
        %v1198 = vsel %vm1188, %v1174, 0.0
        %v1199 = vsel %vm1189, %v1182, 0.0
        %v1200 = vsel %vm1188, %v1175, 0.0
        %v1201 = vsel %vm1189, %v1183, 0.0
        %v1202 = vsel %vm1188, %v1176, 0.0
        %v1203 = vsel %vm1189, %v1184, 0.0
        %v1204 = vsel %vm1188, %v1177, 0.0
        %v1205 = vsel %vm1189, %v1185, 0.0
        %1206 = vset.pattern.permute.xlu0 7
        %1207 = vperm.xlu0 %1206, %v206
        %v1208 = vpop.permute.xlu0 %1207
        %1210 = vset.pattern.permute.xlu0 7
        %1211 = vperm.xlu0 %1210, %v207
        %v1212 = vpop.permute.xlu0 %1211
        %1214 = vset.pattern.permute.xlu0 7
        %1215 = vperm.xlu0 %1214, %v208
        %v1216 = vpop.permute.xlu0 %1215
        %1218 = vset.pattern.permute.xlu0 7
        %1219 = vperm.xlu0 %1218, %v209
        %v1220 = vpop.permute.xlu0 %1219
        %1222 = vset.pattern.permute.xlu0 7
        %1223 = vperm.xlu0 %1222, %v210
        %v1224 = vpop.permute.xlu0 %1223
        %1226 = vset.pattern.permute.xlu0 7
        %1227 = vperm.xlu0 %1226, %v211
        %v1228 = vpop.permute.xlu0 %1227
        %1230 = vset.pattern.permute.xlu0 7
        %1231 = vperm.xlu0 %1230, %v212
        %v1232 = vpop.permute.xlu0 %1231
        %1234 = vset.pattern.permute.xlu0 7
        %1235 = vperm.xlu0 %1234, %v213
        %v1236 = vpop.permute.xlu0 %1235
        %v1238 = vmul.f32 %v1190, %v1208
        %v1239 = vmul.f32 %v1191, %v1208
        %v1240 = vmul.f32 %v1192, %v1212
        %v1241 = vmul.f32 %v1193, %v1212
        %v1242 = vmul.f32 %v1194, %v1216
        %v1243 = vmul.f32 %v1195, %v1216
        %v1244 = vmul.f32 %v1196, %v1220
        %v1245 = vmul.f32 %v1197, %v1220
        %v1246 = vmul.f32 %v1198, %v1224
        %v1247 = vmul.f32 %v1199, %v1224
        %v1248 = vmul.f32 %v1200, %v1228
        %v1249 = vmul.f32 %v1201, %v1228
        %v1250 = vmul.f32 %v1202, %v1232
        %v1251 = vmul.f32 %v1203, %v1232
        %v1252 = vmul.f32 %v1204, %v1236
        %v1253 = vmul.f32 %v1205, %v1236
        %v1254 = vadd.f32 %v1121, %v1238
        %v1255 = vadd.f32 %v1122, %v1239
        %v1256 = vadd.f32 %v1123, %v1240
        %v1257 = vadd.f32 %v1124, %v1241
        %v1258 = vadd.f32 %v1125, %v1242
        %v1259 = vadd.f32 %v1126, %v1243
        %v1260 = vadd.f32 %v1127, %v1244
        %v1261 = vadd.f32 %v1128, %v1245
        %v1262 = vadd.f32 %v1129, %v1246
        %v1263 = vadd.f32 %v1130, %v1247
        %v1264 = vadd.f32 %v1131, %v1248
        %v1265 = vadd.f32 %v1132, %v1249
        %v1266 = vadd.f32 %v1133, %v1250
        %v1267 = vadd.f32 %v1134, %v1251
        %v1268 = vadd.f32 %v1135, %v1252
        %v1269 = vadd.f32 %v1136, %v1253
        %1270 = vrot.lane.b32.xlu0 %v408, 112
        %v1271 = vpop.permute.xlu0 %1270
        %1272 = vrot.lane.b32.xlu0 %v410, 112
        %v1273 = vpop.permute.xlu0 %1272
        %1274 = vrot.lane.b32.xlu0 %v412, 112
        %v1275 = vpop.permute.xlu0 %1274
        %1276 = vrot.lane.b32.xlu0 %v414, 112
        %v1277 = vpop.permute.xlu0 %1276
        %1278 = vrot.lane.b32.xlu0 %v416, 112
        %v1279 = vpop.permute.xlu0 %1278
        %1280 = vrot.lane.b32.xlu0 %v418, 112
        %v1281 = vpop.permute.xlu0 %1280
        %1282 = vrot.lane.b32.xlu0 %v420, 112
        %v1283 = vpop.permute.xlu0 %1282
        %1284 = vrot.lane.b32.xlu0 %v422, 112
        %v1285 = vpop.permute.xlu0 %1284
        %1286 = vrot.lane.b32.xlu0 %v409, 112
        %v1287 = vpop.permute.xlu0 %1286
        %1288 = vrot.lane.b32.xlu0 %v411, 112
        %v1289 = vpop.permute.xlu0 %1288
        %1290 = vrot.lane.b32.xlu0 %v413, 112
        %v1291 = vpop.permute.xlu0 %1290
        %1292 = vrot.lane.b32.xlu0 %v415, 112
        %v1293 = vpop.permute.xlu0 %1292
        %1294 = vrot.lane.b32.xlu0 %v417, 112
        %v1295 = vpop.permute.xlu0 %1294
        %1296 = vrot.lane.b32.xlu0 %v419, 112
        %v1297 = vpop.permute.xlu0 %1296
        %1298 = vrot.lane.b32.xlu0 %v421, 112
        %v1299 = vpop.permute.xlu0 %1298
        %1300 = vrot.lane.b32.xlu0 %v423, 112
        %v1301 = vpop.permute.xlu0 %1300
        %vm1302 = vcmp.lt.s32.totalorder %v170, 112
        %v1303 = vsel %vm1302, %v1271, %v1287
        %v1304 = vsel %vm1302, %v1273, %v1289
        %v1305 = vsel %vm1302, %v1275, %v1291
        %v1306 = vsel %vm1302, %v1277, %v1293
        %v1307 = vsel %vm1302, %v1279, %v1295
        %v1308 = vsel %vm1302, %v1281, %v1297
        %v1309 = vsel %vm1302, %v1283, %v1299
        %v1310 = vsel %vm1302, %v1285, %v1301
        %v1311 = vsel %vm1302, %v1287, %v1271
        %v1312 = vsel %vm1302, %v1289, %v1273
        %v1313 = vsel %vm1302, %v1291, %v1275
        %v1314 = vsel %vm1302, %v1293, %v1277
        %v1315 = vsel %vm1302, %v1295, %v1279
        %v1316 = vsel %vm1302, %v1297, %v1281
        %v1317 = vsel %vm1302, %v1299, %v1283
        %v1318 = vsel %vm1302, %v1301, %v1285
        %v1319 = vsel %vm176, 1, 0
        %v1320 = vsel %vm177, 1, 0
        %vm1321 = vcmp.eq.s32.totalorder %v1319, 1
        %vm1322 = vcmp.eq.s32.totalorder %v1320, 1
        %v1323 = vsel %vm1321, %v1303, 0.0
        %v1324 = vsel %vm1322, %v1311, 0.0
        %v1325 = vsel %vm1321, %v1304, 0.0
        %v1326 = vsel %vm1322, %v1312, 0.0
        %v1327 = vsel %vm1321, %v1305, 0.0
        %v1328 = vsel %vm1322, %v1313, 0.0
        %v1329 = vsel %vm1321, %v1306, 0.0
        %v1330 = vsel %vm1322, %v1314, 0.0
        %v1331 = vsel %vm1321, %v1307, 0.0
        %v1332 = vsel %vm1322, %v1315, 0.0
        %v1333 = vsel %vm1321, %v1308, 0.0
        %v1334 = vsel %vm1322, %v1316, 0.0
        %v1335 = vsel %vm1321, %v1309, 0.0
        %v1336 = vsel %vm1322, %v1317, 0.0
        %v1337 = vsel %vm1321, %v1310, 0.0
        %v1338 = vsel %vm1322, %v1318, 0.0
        %1339 = vset.pattern.permute.xlu0 8
        %1340 = vperm.xlu0 %1339, %v206
        %v1341 = vpop.permute.xlu0 %1340
        %1343 = vset.pattern.permute.xlu0 8
        %1344 = vperm.xlu0 %1343, %v207
        %v1345 = vpop.permute.xlu0 %1344
        %1347 = vset.pattern.permute.xlu0 8
        %1348 = vperm.xlu0 %1347, %v208
        %v1349 = vpop.permute.xlu0 %1348
        %1351 = vset.pattern.permute.xlu0 8
        %1352 = vperm.xlu0 %1351, %v209
        %v1353 = vpop.permute.xlu0 %1352
        %1355 = vset.pattern.permute.xlu0 8
        %1356 = vperm.xlu0 %1355, %v210
        %v1357 = vpop.permute.xlu0 %1356
        %1359 = vset.pattern.permute.xlu0 8
        %1360 = vperm.xlu0 %1359, %v211
        %v1361 = vpop.permute.xlu0 %1360
        %1363 = vset.pattern.permute.xlu0 8
        %1364 = vperm.xlu0 %1363, %v212
        %v1365 = vpop.permute.xlu0 %1364
        %1367 = vset.pattern.permute.xlu0 8
        %1368 = vperm.xlu0 %1367, %v213
        %v1369 = vpop.permute.xlu0 %1368
        %v1371 = vmul.f32 %v1323, %v1341
        %v1372 = vmul.f32 %v1324, %v1341
        %v1373 = vmul.f32 %v1325, %v1345
        %v1374 = vmul.f32 %v1326, %v1345
        %v1375 = vmul.f32 %v1327, %v1349
        %v1376 = vmul.f32 %v1328, %v1349
        %v1377 = vmul.f32 %v1329, %v1353
        %v1378 = vmul.f32 %v1330, %v1353
        %v1379 = vmul.f32 %v1331, %v1357
        %v1380 = vmul.f32 %v1332, %v1357
        %v1381 = vmul.f32 %v1333, %v1361
        %v1382 = vmul.f32 %v1334, %v1361
        %v1383 = vmul.f32 %v1335, %v1365
        %v1384 = vmul.f32 %v1336, %v1365
        %v1385 = vmul.f32 %v1337, %v1369
        %v1386 = vmul.f32 %v1338, %v1369
        %v1387 = vadd.f32 %v1254, %v1371
        %v1388 = vadd.f32 %v1255, %v1372
        %v1389 = vadd.f32 %v1256, %v1373
        %v1390 = vadd.f32 %v1257, %v1374
        %v1391 = vadd.f32 %v1258, %v1375
        %v1392 = vadd.f32 %v1259, %v1376
        %v1393 = vadd.f32 %v1260, %v1377
        %v1394 = vadd.f32 %v1261, %v1378
        %v1395 = vadd.f32 %v1262, %v1379
        %v1396 = vadd.f32 %v1263, %v1380
        %v1397 = vadd.f32 %v1264, %v1381
        %v1398 = vadd.f32 %v1265, %v1382
        %v1399 = vadd.f32 %v1266, %v1383
        %v1400 = vadd.f32 %v1267, %v1384
        %v1401 = vadd.f32 %v1268, %v1385
        %v1402 = vadd.f32 %v1269, %v1386
        %1403 = vrot.lane.b32.xlu0 %v408, 111
        %v1404 = vpop.permute.xlu0 %1403
        %1405 = vrot.lane.b32.xlu0 %v410, 111
        %v1406 = vpop.permute.xlu0 %1405
        %1407 = vrot.lane.b32.xlu0 %v412, 111
        %v1408 = vpop.permute.xlu0 %1407
        %1409 = vrot.lane.b32.xlu0 %v414, 111
        %v1410 = vpop.permute.xlu0 %1409
        %1411 = vrot.lane.b32.xlu0 %v416, 111
        %v1412 = vpop.permute.xlu0 %1411
        %1413 = vrot.lane.b32.xlu0 %v418, 111
        %v1414 = vpop.permute.xlu0 %1413
        %1415 = vrot.lane.b32.xlu0 %v420, 111
        %v1416 = vpop.permute.xlu0 %1415
        %1417 = vrot.lane.b32.xlu0 %v422, 111
        %v1418 = vpop.permute.xlu0 %1417
        %1419 = vrot.lane.b32.xlu0 %v409, 111
        %v1420 = vpop.permute.xlu0 %1419
        %1421 = vrot.lane.b32.xlu0 %v411, 111
        %v1422 = vpop.permute.xlu0 %1421
        %1423 = vrot.lane.b32.xlu0 %v413, 111
        %v1424 = vpop.permute.xlu0 %1423
        %1425 = vrot.lane.b32.xlu0 %v415, 111
        %v1426 = vpop.permute.xlu0 %1425
        %1427 = vrot.lane.b32.xlu0 %v417, 111
        %v1428 = vpop.permute.xlu0 %1427
        %1429 = vrot.lane.b32.xlu0 %v419, 111
        %v1430 = vpop.permute.xlu0 %1429
        %1431 = vrot.lane.b32.xlu0 %v421, 111
        %v1432 = vpop.permute.xlu0 %1431
        %1433 = vrot.lane.b32.xlu0 %v423, 111
        %v1434 = vpop.permute.xlu0 %1433
        %vm1435 = vcmp.lt.s32.totalorder %v170, 111
        %v1436 = vsel %vm1435, %v1404, %v1420
        %v1437 = vsel %vm1435, %v1406, %v1422
        %v1438 = vsel %vm1435, %v1408, %v1424
        %v1439 = vsel %vm1435, %v1410, %v1426
        %v1440 = vsel %vm1435, %v1412, %v1428
        %v1441 = vsel %vm1435, %v1414, %v1430
        %v1442 = vsel %vm1435, %v1416, %v1432
        %v1443 = vsel %vm1435, %v1418, %v1434
        %v1444 = vsel %vm1435, %v1420, %v1404
        %v1445 = vsel %vm1435, %v1422, %v1406
        %v1446 = vsel %vm1435, %v1424, %v1408
        %v1447 = vsel %vm1435, %v1426, %v1410
        %v1448 = vsel %vm1435, %v1428, %v1412
        %v1449 = vsel %vm1435, %v1430, %v1414
        %v1450 = vsel %vm1435, %v1432, %v1416
        %v1451 = vsel %vm1435, %v1434, %v1418
        %v1452 = vsel %vm188, 1, 0
        %v1453 = vsel %vm189, 1, 0
        %vm1454 = vcmp.eq.s32.totalorder %v1452, 1
        %vm1455 = vcmp.eq.s32.totalorder %v1453, 1
        %v1456 = vsel %vm1454, %v1436, 0.0
        %v1457 = vsel %vm1455, %v1444, 0.0
        %v1458 = vsel %vm1454, %v1437, 0.0
        %v1459 = vsel %vm1455, %v1445, 0.0
        %v1460 = vsel %vm1454, %v1438, 0.0
        %v1461 = vsel %vm1455, %v1446, 0.0
        %v1462 = vsel %vm1454, %v1439, 0.0
        %v1463 = vsel %vm1455, %v1447, 0.0
        %v1464 = vsel %vm1454, %v1440, 0.0
        %v1465 = vsel %vm1455, %v1448, 0.0
        %v1466 = vsel %vm1454, %v1441, 0.0
        %v1467 = vsel %vm1455, %v1449, 0.0
        %v1468 = vsel %vm1454, %v1442, 0.0
        %v1469 = vsel %vm1455, %v1450, 0.0
        %v1470 = vsel %vm1454, %v1443, 0.0
        %v1471 = vsel %vm1455, %v1451, 0.0
        %1472 = vset.pattern.permute.xlu0 9
        %1473 = vperm.xlu0 %1472, %v206
        %v1474 = vpop.permute.xlu0 %1473
        %1476 = vset.pattern.permute.xlu0 9
        %1477 = vperm.xlu0 %1476, %v207
        %v1478 = vpop.permute.xlu0 %1477
        %1480 = vset.pattern.permute.xlu0 9
        %1481 = vperm.xlu0 %1480, %v208
        %v1482 = vpop.permute.xlu0 %1481
        %1484 = vset.pattern.permute.xlu0 9
        %1485 = vperm.xlu0 %1484, %v209
        %v1486 = vpop.permute.xlu0 %1485
        %1488 = vset.pattern.permute.xlu0 9
        %1489 = vperm.xlu0 %1488, %v210
        %v1490 = vpop.permute.xlu0 %1489
        %1492 = vset.pattern.permute.xlu0 9
        %1493 = vperm.xlu0 %1492, %v211
        %v1494 = vpop.permute.xlu0 %1493
        %1496 = vset.pattern.permute.xlu0 9
        %1497 = vperm.xlu0 %1496, %v212
        %v1498 = vpop.permute.xlu0 %1497
        %1500 = vset.pattern.permute.xlu0 9
        %1501 = vperm.xlu0 %1500, %v213
        %v1502 = vpop.permute.xlu0 %1501
        %v1504 = vmul.f32 %v1456, %v1474
        %v1505 = vmul.f32 %v1457, %v1474
        %v1506 = vmul.f32 %v1458, %v1478
        %v1507 = vmul.f32 %v1459, %v1478
        %v1508 = vmul.f32 %v1460, %v1482
        %v1509 = vmul.f32 %v1461, %v1482
        %v1510 = vmul.f32 %v1462, %v1486
        %v1511 = vmul.f32 %v1463, %v1486
        %v1512 = vmul.f32 %v1464, %v1490
        %v1513 = vmul.f32 %v1465, %v1490
        %v1514 = vmul.f32 %v1466, %v1494
        %v1515 = vmul.f32 %v1467, %v1494
        %v1516 = vmul.f32 %v1468, %v1498
        %v1517 = vmul.f32 %v1469, %v1498
        %v1518 = vmul.f32 %v1470, %v1502
        %v1519 = vmul.f32 %v1471, %v1502
        %v1520 = vadd.f32 %v1387, %v1504
        %v1521 = vadd.f32 %v1388, %v1505
        %v1522 = vadd.f32 %v1389, %v1506
        %v1523 = vadd.f32 %v1390, %v1507
        %v1524 = vadd.f32 %v1391, %v1508
        %v1525 = vadd.f32 %v1392, %v1509
        %v1526 = vadd.f32 %v1393, %v1510
        %v1527 = vadd.f32 %v1394, %v1511
        %v1528 = vadd.f32 %v1395, %v1512
        %v1529 = vadd.f32 %v1396, %v1513
        %v1530 = vadd.f32 %v1397, %v1514
        %v1531 = vadd.f32 %v1398, %v1515
        %v1532 = vadd.f32 %v1399, %v1516
        %v1533 = vadd.f32 %v1400, %v1517
        %v1534 = vadd.f32 %v1401, %v1518
        %v1535 = vadd.f32 %v1402, %v1519
        %1536 = vset.pattern.permute.xlu0 10
        %1537 = vperm.xlu0 %1536, %v206
        %v1538 = vpop.permute.xlu0 %1537
        %1540 = vset.pattern.permute.xlu0 10
        %1541 = vperm.xlu0 %1540, %v207
        %v1542 = vpop.permute.xlu0 %1541
        %1544 = vset.pattern.permute.xlu0 10
        %1545 = vperm.xlu0 %1544, %v208
        %v1546 = vpop.permute.xlu0 %1545
        %1548 = vset.pattern.permute.xlu0 10
        %1549 = vperm.xlu0 %1548, %v209
        %v1550 = vpop.permute.xlu0 %1549
        %1552 = vset.pattern.permute.xlu0 10
        %1553 = vperm.xlu0 %1552, %v210
        %v1554 = vpop.permute.xlu0 %1553
        %1556 = vset.pattern.permute.xlu0 10
        %1557 = vperm.xlu0 %1556, %v211
        %v1558 = vpop.permute.xlu0 %1557
        %1560 = vset.pattern.permute.xlu0 10
        %1561 = vperm.xlu0 %1560, %v212
        %v1562 = vpop.permute.xlu0 %1561
        %1564 = vset.pattern.permute.xlu0 10
        %1565 = vperm.xlu0 %1564, %v213
        %v1566 = vpop.permute.xlu0 %1565
        %v1568 = vadd.f32 %v1520, %v1538
        %v1569 = vadd.f32 %v1521, %v1538
        %v1570 = vadd.f32 %v1522, %v1542
        %v1571 = vadd.f32 %v1523, %v1542
        %v1572 = vadd.f32 %v1524, %v1546
        %v1573 = vadd.f32 %v1525, %v1546
        %v1574 = vadd.f32 %v1526, %v1550
        %v1575 = vadd.f32 %v1527, %v1550
        %v1576 = vadd.f32 %v1528, %v1554
        %v1577 = vadd.f32 %v1529, %v1554
        %v1578 = vadd.f32 %v1530, %v1558
        %v1579 = vadd.f32 %v1531, %v1558
        %v1580 = vadd.f32 %v1532, %v1562
        %v1581 = vadd.f32 %v1533, %v1562
        %v1582 = vadd.f32 %v1534, %v1566
        %v1583 = vadd.f32 %v1535, %v1566
        %v1584 = vmax.f32 %v1568, 0.0
        %v1585 = vmax.f32 %v1569, 0.0
        %v1586 = vmax.f32 %v1570, 0.0
        %v1587 = vmax.f32 %v1571, 0.0
        %v1588 = vmax.f32 %v1572, 0.0
        %v1589 = vmax.f32 %v1573, 0.0
        %v1590 = vmax.f32 %v1574, 0.0
        %v1591 = vmax.f32 %v1575, 0.0
        %v1592 = vmax.f32 %v1576, 0.0
        %v1593 = vmax.f32 %v1577, 0.0
        %v1594 = vmax.f32 %v1578, 0.0
        %v1595 = vmax.f32 %v1579, 0.0
        %v1596 = vmax.f32 %v1580, 0.0
        %v1597 = vmax.f32 %v1581, 0.0
        %v1598 = vmax.f32 %v1582, 0.0
        %v1599 = vmax.f32 %v1583, 0.0
        %v1600 = vmin.f32 %v1584, 6.0
        %v1601 = vmin.f32 %v1585, 6.0
        %v1602 = vmin.f32 %v1586, 6.0
        %v1603 = vmin.f32 %v1587, 6.0
        %v1604 = vmin.f32 %v1588, 6.0
        %v1605 = vmin.f32 %v1589, 6.0
        %v1606 = vmin.f32 %v1590, 6.0
        %v1607 = vmin.f32 %v1591, 6.0
        %v1608 = vmin.f32 %v1592, 6.0
        %v1609 = vmin.f32 %v1593, 6.0
        %v1610 = vmin.f32 %v1594, 6.0
        %v1611 = vmin.f32 %v1595, 6.0
        %v1612 = vmin.f32 %v1596, 6.0
        %v1613 = vmin.f32 %v1597, 6.0
        %v1614 = vmin.f32 %v1598, 6.0
        %v1615 = vmin.f32 %v1599, 6.0
        %v1616 = vld [vmem:[%s1 + $0x40] sm:$0xff]
        %v1617 = vld [vmem:[%s1 + $0x48] sm:$0xff]
        %v1618 = vld [vmem:[%s1 + $0x50] sm:$0xff]
        %v1619 = vld [vmem:[%s1 + $0x58] sm:$0xff]
        %v1620 = vld [vmem:[%s2] sm:$0xff]
        %v1621 = vld [vmem:[%s2 + $0x8] sm:$0xff]
        %v1622 = vld [vmem:[%s2 + $0x10] sm:$0xff]
        %v1623 = vld [vmem:[%s2 + $0x18] sm:$0xff]
        %1625 = vset.pattern.permute.xlu0 11
        %1626 = vperm.xlu0 %1625, %v1620
        %v1627 = vpop.permute.xlu0 %1626
        %1630 = vset.pattern.permute.xlu0 11
        %1631 = vperm.xlu0 %1630, %v1621
        %v1632 = vpop.permute.xlu0 %1631
        %1635 = vset.pattern.permute.xlu0 11
        %1636 = vperm.xlu0 %1635, %v1622
        %v1637 = vpop.permute.xlu0 %1636
        %1640 = vset.pattern.permute.xlu0 11
        %1641 = vperm.xlu0 %1640, %v1623
        %v1642 = vpop.permute.xlu0 %1641
        %vm1644 = vcmask 523264
        %v1646 = vsel %vm1644, %v1616, 0
        %v1649 = vsel %vm1644, %v1617, 0
        %v1652 = vsel %vm1644, %v1618, 0
        %v1655 = vsel %vm1644, %v1619, 0
        %1657 = vmatprep.subr.mxu0 0.0
        %1658 = vmatpush1.msra.mxu0 0.0
        %1659 = vmatprep.subr.mxu0 0.0
        %1660 = vmatpush1.msra.mxu0 0.0
        %1661 = vmatprep.subr.mxu0 0.0
        %1662 = vmatpush1.msra.mxu0 0.0
        %1663 = vmatprep.subr.mxu0 0.0
        %1664 = vmatpush1.msra.mxu0 0.0
        %1665 = vmatprep.subr.mxu0 0.0
        %1666 = vmatpush1.msra.mxu0 0.0
        %1667 = vmatprep.subr.mxu0 0.0
        %1668 = vmatpush1.msra.mxu0 0.0
        %1669 = vmatprep.subr.mxu0 0.0
        %1670 = vmatpush1.msra.mxu0 0.0
        %1671 = vmatprep.subr.mxu0 0.0
        %1672 = vmatpush1.msra.mxu0 0.0
        %1673 = vmatprep.subr.mxu0 %v1615
        %1674 = vmatpush1.msra.mxu0 %v1614
        %1675 = vmatprep.subr.mxu0 %v1613
        %1676 = vmatpush1.msra.mxu0 %v1612
        %1677 = vmatprep.subr.mxu0 %v1611
        %1678 = vmatpush1.msra.mxu0 %v1610
        %1679 = vmatprep.subr.mxu0 %v1609
        %1680 = vmatpush1.msra.mxu0 %v1608
        %1681 = vmatprep.subr.mxu0 %v1607
        %1682 = vmatpush1.msra.mxu0 %v1606
        %1683 = vmatprep.subr.mxu0 %v1605
        %1684 = vmatpush1.msra.mxu0 %v1604
        %1685 = vmatprep.subr.mxu0 %v1603
        %1686 = vmatpush1.msra.mxu0 %v1602
        %1687 = vmatprep.subr.mxu0 %v1601
        %1688 = vmatpush1.msra.mxu0 %v1600
        %1689 = vmatprep.subr.mxu0 0.0
        %1690 = vmatpush2.msra.mxu0 0.0
        %1691 = vmatprep.subr.mxu0 0.0
        %1692 = vmatpush2.msra.mxu0 0.0
        %1693 = vmatprep.subr.mxu0 0.0
        %1694 = vmatpush2.msra.mxu0 0.0
        %1695 = vmatprep.subr.mxu0 0.0
        %1696 = vmatpush2.msra.mxu0 0.0
        %1697 = vmatprep.subr.mxu0 0.0
        %1698 = vmatpush2.msra.mxu0 0.0
        %1699 = vmatprep.subr.mxu0 0.0
        %1700 = vmatpush2.msra.mxu0 0.0
        %1701 = vmatprep.subr.mxu0 0.0
        %1702 = vmatpush2.msra.mxu0 0.0
        %1703 = vmatprep.subr.mxu0 0.0
        %1704 = vmatpush2.msra.mxu0 0.0
        %1705 = vmatprep.subr.mxu0 0.0
        %1706 = vmatpush2.msra.mxu0 0.0
        %1707 = vmatprep.subr.mxu0 0.0
        %1708 = vmatpush2.msra.mxu0 0.0
        %1709 = vmatprep.subr.mxu0 0.0
        %1710 = vmatpush2.msra.mxu0 0.0
        %1711 = vmatprep.subr.mxu0 0.0
        %1712 = vmatpush2.msra.mxu0 0.0
        %1713 = vmatprep.subr.mxu0 0.0
        %1714 = vmatpush2.msra.mxu0 0.0
        %1715 = vmatprep.subr.mxu0 0.0
        %1716 = vmatpush2.msra.mxu0 0.0
        %1717 = vmatprep.subr.mxu0 0.0
        %1718 = vmatpush2.msra.mxu0 0.0
        %1719 = vmatprep.subr.mxu0 0.0
        %1720 = vmatpush2.msra.mxu0 0.0
        %1721 = vmatprep.mubr.f32.mxu0 0.0
        %1722 = vmatmul.mubr.f32.gmra.mxu0 %v1646
        %v1723 = vpop.f32.mrf.mxu0
        %v1724 = vadd.f32 %v1627, %v1723
        %v1725 = vpop.f32.mrf.mxu0
        %v1726 = vadd.f32 %v1627, %v1725
        %1727 = vmatprep.mubr.f32.mxu0 0.0
        %1728 = vmatmul.mubr.f32.gmra.mxu0 %v1649
        %v1729 = vpop.f32.mrf.mxu0
        %v1730 = vadd.f32 %v1632, %v1729
        %v1731 = vpop.f32.mrf.mxu0
        %v1732 = vadd.f32 %v1632, %v1731
        %1733 = vmatprep.mubr.f32.mxu0 0.0
        %1734 = vmatmul.mubr.f32.gmra.mxu0 %v1652
        %v1735 = vpop.f32.mrf.mxu0
        %v1736 = vadd.f32 %v1637, %v1735
        %v1737 = vpop.f32.mrf.mxu0
        %v1738 = vadd.f32 %v1637, %v1737
        %1739 = vmatprep.mubr.f32.mxu0 0.0
        %1740 = vmatmul.mubr.f32.gmra.mxu0 %v1655
        %v1741 = vpop.f32.mrf.mxu0
        %v1742 = vadd.f32 %v1642, %v1741
        %v1743 = vpop.f32.mrf.mxu0
        %v1744 = vadd.f32 %v1642, %v1743
        %1745 = vdwg.mxu0
        %v1746 = vadd.f32 %v1724, %v190
        %v1747 = vadd.f32 %v1726, %v191
        %v1748 = vadd.f32 %v1730, %v192
        %v1749 = vadd.f32 %v1732, %v193
        %v1750 = vadd.f32 %v1736, %v194
        %v1751 = vadd.f32 %v1738, %v195
        %v1752 = vadd.f32 %v1742, %v196
        %v1753 = vadd.f32 %v1744, %v197
        %1754 = vrot.lane.b32.xlu0 %v190, 17
        %v1755 = vpop.permute.xlu0 %1754
        %1756 = vrot.lane.b32.xlu0 %v192, 17
        %v1757 = vpop.permute.xlu0 %1756
        %1758 = vrot.lane.b32.xlu0 %v194, 17
        %v1759 = vpop.permute.xlu0 %1758
        %1760 = vrot.lane.b32.xlu0 %v196, 17
        %v1761 = vpop.permute.xlu0 %1760
        %1762 = vrot.lane.b32.xlu0 %v1746, 17
        %v1763 = vpop.permute.xlu0 %1762
        %1764 = vrot.lane.b32.xlu0 %v1748, 17
        %v1765 = vpop.permute.xlu0 %1764
        %1766 = vrot.lane.b32.xlu0 %v1750, 17
        %v1767 = vpop.permute.xlu0 %1766
        %1768 = vrot.lane.b32.xlu0 %v1752, 17
        %v1769 = vpop.permute.xlu0 %1768
        %1770 = vrot.lane.b32.xlu0 %v191, 17
        %v1771 = vpop.permute.xlu0 %1770
        %1772 = vrot.lane.b32.xlu0 %v193, 17
        %v1773 = vpop.permute.xlu0 %1772
        %1774 = vrot.lane.b32.xlu0 %v195, 17
        %v1775 = vpop.permute.xlu0 %1774
        %1776 = vrot.lane.b32.xlu0 %v197, 17
        %v1777 = vpop.permute.xlu0 %1776
        %1778 = vrot.lane.b32.xlu0 %v1747, 17
        %v1779 = vpop.permute.xlu0 %1778
        %1780 = vrot.lane.b32.xlu0 %v1749, 17
        %v1781 = vpop.permute.xlu0 %1780
        %1782 = vrot.lane.b32.xlu0 %v1751, 17
        %v1783 = vpop.permute.xlu0 %1782
        %1784 = vrot.lane.b32.xlu0 %v1753, 17
        %v1785 = vpop.permute.xlu0 %1784
        %v1786 = vsel %vm456, %v1755, %v1771
        %v1787 = vsel %vm456, %v1757, %v1773
        %v1788 = vsel %vm456, %v1759, %v1775
        %v1789 = vsel %vm456, %v1761, %v1777
        %v1790 = vsel %vm456, %v1763, %v1779
        %v1791 = vsel %vm456, %v1765, %v1781
        %v1792 = vsel %vm456, %v1767, %v1783
        %v1793 = vsel %vm456, %v1769, %v1785
        %v1794 = vsel %vm456, %v1771, %v1755
        %v1795 = vsel %vm456, %v1773, %v1757
        %v1796 = vsel %vm456, %v1775, %v1759
        %v1797 = vsel %vm456, %v1777, %v1761
        %v1798 = vsel %vm456, %v1779, %v1763
        %v1799 = vsel %vm456, %v1781, %v1765
        %v1800 = vsel %vm456, %v1783, %v1767
        %v1801 = vsel %vm456, %v1785, %v1769
        %v1802 = vsel %vm475, %v1794, 0.0
        %v1803 = vsel %vm476, %v1786, 0.0
        %v1804 = vsel %vm475, %v1795, 0.0
        %v1805 = vsel %vm476, %v1787, 0.0
        %v1806 = vsel %vm475, %v1796, 0.0
        %v1807 = vsel %vm476, %v1788, 0.0
        %v1808 = vsel %vm475, %v1797, 0.0
        %v1809 = vsel %vm476, %v1789, 0.0
        %v1810 = vsel %vm475, %v1798, 0.0
        %v1811 = vsel %vm476, %v1790, 0.0
        %v1812 = vsel %vm475, %v1799, 0.0
        %v1813 = vsel %vm476, %v1791, 0.0
        %v1814 = vsel %vm475, %v1800, 0.0
        %v1815 = vsel %vm476, %v1792, 0.0
        %v1816 = vsel %vm475, %v1801, 0.0
        %v1817 = vsel %vm476, %v1793, 0.0
        %1818 = vset.pattern.permute.xlu0 12
        %1819 = vperm.xlu0 %1818, %v206
        %v1820 = vpop.permute.xlu0 %1819
        %1822 = vset.pattern.permute.xlu0 12
        %1823 = vperm.xlu0 %1822, %v207
        %v1824 = vpop.permute.xlu0 %1823
        %1826 = vset.pattern.permute.xlu0 12
        %1827 = vperm.xlu0 %1826, %v208
        %v1828 = vpop.permute.xlu0 %1827
        %1830 = vset.pattern.permute.xlu0 12
        %1831 = vperm.xlu0 %1830, %v209
        %v1832 = vpop.permute.xlu0 %1831
        %1834 = vset.pattern.permute.xlu0 12
        %1835 = vperm.xlu0 %1834, %v210
        %v1836 = vpop.permute.xlu0 %1835
        %1838 = vset.pattern.permute.xlu0 12
        %1839 = vperm.xlu0 %1838, %v211
        %v1840 = vpop.permute.xlu0 %1839
        %1842 = vset.pattern.permute.xlu0 12
        %1843 = vperm.xlu0 %1842, %v212
        %v1844 = vpop.permute.xlu0 %1843
        %1846 = vset.pattern.permute.xlu0 12
        %1847 = vperm.xlu0 %1846, %v213
        %v1848 = vpop.permute.xlu0 %1847
        %v1850 = vmul.f32 %v1802, %v1820
        %v1851 = vmul.f32 %v1803, %v1820
        %v1852 = vmul.f32 %v1804, %v1824
        %v1853 = vmul.f32 %v1805, %v1824
        %v1854 = vmul.f32 %v1806, %v1828
        %v1855 = vmul.f32 %v1807, %v1828
        %v1856 = vmul.f32 %v1808, %v1832
        %v1857 = vmul.f32 %v1809, %v1832
        %v1858 = vmul.f32 %v1810, %v1836
        %v1859 = vmul.f32 %v1811, %v1836
        %v1860 = vmul.f32 %v1812, %v1840
        %v1861 = vmul.f32 %v1813, %v1840
        %v1862 = vmul.f32 %v1814, %v1844
        %v1863 = vmul.f32 %v1815, %v1844
        %v1864 = vmul.f32 %v1816, %v1848
        %v1865 = vmul.f32 %v1817, %v1848
        %1866 = vrot.lane.b32.xlu0 %v190, 16
        %v1867 = vpop.permute.xlu0 %1866
        %1868 = vrot.lane.b32.xlu0 %v192, 16
        %v1869 = vpop.permute.xlu0 %1868
        %1870 = vrot.lane.b32.xlu0 %v194, 16
        %v1871 = vpop.permute.xlu0 %1870
        %1872 = vrot.lane.b32.xlu0 %v196, 16
        %v1873 = vpop.permute.xlu0 %1872
        %1874 = vrot.lane.b32.xlu0 %v1746, 16
        %v1875 = vpop.permute.xlu0 %1874
        %1876 = vrot.lane.b32.xlu0 %v1748, 16
        %v1877 = vpop.permute.xlu0 %1876
        %1878 = vrot.lane.b32.xlu0 %v1750, 16
        %v1879 = vpop.permute.xlu0 %1878
        %1880 = vrot.lane.b32.xlu0 %v1752, 16
        %v1881 = vpop.permute.xlu0 %1880
        %1882 = vrot.lane.b32.xlu0 %v191, 16
        %v1883 = vpop.permute.xlu0 %1882
        %1884 = vrot.lane.b32.xlu0 %v193, 16
        %v1885 = vpop.permute.xlu0 %1884
        %1886 = vrot.lane.b32.xlu0 %v195, 16
        %v1887 = vpop.permute.xlu0 %1886
        %1888 = vrot.lane.b32.xlu0 %v197, 16
        %v1889 = vpop.permute.xlu0 %1888
        %1890 = vrot.lane.b32.xlu0 %v1747, 16
        %v1891 = vpop.permute.xlu0 %1890
        %1892 = vrot.lane.b32.xlu0 %v1749, 16
        %v1893 = vpop.permute.xlu0 %1892
        %1894 = vrot.lane.b32.xlu0 %v1751, 16
        %v1895 = vpop.permute.xlu0 %1894
        %1896 = vrot.lane.b32.xlu0 %v1753, 16
        %v1897 = vpop.permute.xlu0 %1896
        %v1898 = vsel %vm573, %v1867, %v1883
        %v1899 = vsel %vm573, %v1869, %v1885
        %v1900 = vsel %vm573, %v1871, %v1887
        %v1901 = vsel %vm573, %v1873, %v1889
        %v1902 = vsel %vm573, %v1875, %v1891
        %v1903 = vsel %vm573, %v1877, %v1893
        %v1904 = vsel %vm573, %v1879, %v1895
        %v1905 = vsel %vm573, %v1881, %v1897
        %v1906 = vsel %vm573, %v1883, %v1867
        %v1907 = vsel %vm573, %v1885, %v1869
        %v1908 = vsel %vm573, %v1887, %v1871
        %v1909 = vsel %vm573, %v1889, %v1873
        %v1910 = vsel %vm573, %v1891, %v1875
        %v1911 = vsel %vm573, %v1893, %v1877
        %v1912 = vsel %vm573, %v1895, %v1879
        %v1913 = vsel %vm573, %v1897, %v1881
        %v1914 = vsel %vm592, %v1906, 0.0
        %v1915 = vsel %vm593, %v1898, 0.0
        %v1916 = vsel %vm592, %v1907, 0.0
        %v1917 = vsel %vm593, %v1899, 0.0
        %v1918 = vsel %vm592, %v1908, 0.0
        %v1919 = vsel %vm593, %v1900, 0.0
        %v1920 = vsel %vm592, %v1909, 0.0
        %v1921 = vsel %vm593, %v1901, 0.0
        %v1922 = vsel %vm592, %v1910, 0.0
        %v1923 = vsel %vm593, %v1902, 0.0
        %v1924 = vsel %vm592, %v1911, 0.0
        %v1925 = vsel %vm593, %v1903, 0.0
        %v1926 = vsel %vm592, %v1912, 0.0
        %v1927 = vsel %vm593, %v1904, 0.0
        %v1928 = vsel %vm592, %v1913, 0.0
        %v1929 = vsel %vm593, %v1905, 0.0
        %1930 = vset.pattern.permute.xlu0 13
        %1931 = vperm.xlu0 %1930, %v206
        %v1932 = vpop.permute.xlu0 %1931
        %1934 = vset.pattern.permute.xlu0 13
        %1935 = vperm.xlu0 %1934, %v207
        %v1936 = vpop.permute.xlu0 %1935
        %1938 = vset.pattern.permute.xlu0 13
        %1939 = vperm.xlu0 %1938, %v208
        %v1940 = vpop.permute.xlu0 %1939
        %1942 = vset.pattern.permute.xlu0 13
        %1943 = vperm.xlu0 %1942, %v209
        %v1944 = vpop.permute.xlu0 %1943
        %1946 = vset.pattern.permute.xlu0 13
        %1947 = vperm.xlu0 %1946, %v210
        %v1948 = vpop.permute.xlu0 %1947
        %1950 = vset.pattern.permute.xlu0 13
        %1951 = vperm.xlu0 %1950, %v211
        %v1952 = vpop.permute.xlu0 %1951
        %1954 = vset.pattern.permute.xlu0 13
        %1955 = vperm.xlu0 %1954, %v212
        %v1956 = vpop.permute.xlu0 %1955
        %1958 = vset.pattern.permute.xlu0 13
        %1959 = vperm.xlu0 %1958, %v213
        %v1960 = vpop.permute.xlu0 %1959
        %v1962 = vmul.f32 %v1914, %v1932
        %v1963 = vmul.f32 %v1915, %v1932
        %v1964 = vmul.f32 %v1916, %v1936
        %v1965 = vmul.f32 %v1917, %v1936
        %v1966 = vmul.f32 %v1918, %v1940
        %v1967 = vmul.f32 %v1919, %v1940
        %v1968 = vmul.f32 %v1920, %v1944
        %v1969 = vmul.f32 %v1921, %v1944
        %v1970 = vmul.f32 %v1922, %v1948
        %v1971 = vmul.f32 %v1923, %v1948
        %v1972 = vmul.f32 %v1924, %v1952
        %v1973 = vmul.f32 %v1925, %v1952
        %v1974 = vmul.f32 %v1926, %v1956
        %v1975 = vmul.f32 %v1927, %v1956
        %v1976 = vmul.f32 %v1928, %v1960
        %v1977 = vmul.f32 %v1929, %v1960
        %v1978 = vadd.f32 %v1850, %v1962
        %v1979 = vadd.f32 %v1851, %v1963
        %v1980 = vadd.f32 %v1852, %v1964
        %v1981 = vadd.f32 %v1853, %v1965
        %v1982 = vadd.f32 %v1854, %v1966
        %v1983 = vadd.f32 %v1855, %v1967
        %v1984 = vadd.f32 %v1856, %v1968
        %v1985 = vadd.f32 %v1857, %v1969
        %v1986 = vadd.f32 %v1858, %v1970
        %v1987 = vadd.f32 %v1859, %v1971
        %v1988 = vadd.f32 %v1860, %v1972
        %v1989 = vadd.f32 %v1861, %v1973
        %v1990 = vadd.f32 %v1862, %v1974
        %v1991 = vadd.f32 %v1863, %v1975
        %v1992 = vadd.f32 %v1864, %v1976
        %v1993 = vadd.f32 %v1865, %v1977
        %1994 = vrot.lane.b32.xlu0 %v190, 15
        %v1995 = vpop.permute.xlu0 %1994
        %1996 = vrot.lane.b32.xlu0 %v192, 15
        %v1997 = vpop.permute.xlu0 %1996
        %1998 = vrot.lane.b32.xlu0 %v194, 15
        %v1999 = vpop.permute.xlu0 %1998
        %2000 = vrot.lane.b32.xlu0 %v196, 15
        %v2001 = vpop.permute.xlu0 %2000
        %2002 = vrot.lane.b32.xlu0 %v1746, 15
        %v2003 = vpop.permute.xlu0 %2002
        %2004 = vrot.lane.b32.xlu0 %v1748, 15
        %v2005 = vpop.permute.xlu0 %2004
        %2006 = vrot.lane.b32.xlu0 %v1750, 15
        %v2007 = vpop.permute.xlu0 %2006
        %2008 = vrot.lane.b32.xlu0 %v1752, 15
        %v2009 = vpop.permute.xlu0 %2008
        %2010 = vrot.lane.b32.xlu0 %v191, 15
        %v2011 = vpop.permute.xlu0 %2010
        %2012 = vrot.lane.b32.xlu0 %v193, 15
        %v2013 = vpop.permute.xlu0 %2012
        %2014 = vrot.lane.b32.xlu0 %v195, 15
        %v2015 = vpop.permute.xlu0 %2014
        %2016 = vrot.lane.b32.xlu0 %v197, 15
        %v2017 = vpop.permute.xlu0 %2016
        %2018 = vrot.lane.b32.xlu0 %v1747, 15
        %v2019 = vpop.permute.xlu0 %2018
        %2020 = vrot.lane.b32.xlu0 %v1749, 15
        %v2021 = vpop.permute.xlu0 %2020
        %2022 = vrot.lane.b32.xlu0 %v1751, 15
        %v2023 = vpop.permute.xlu0 %2022
        %2024 = vrot.lane.b32.xlu0 %v1753, 15
        %v2025 = vpop.permute.xlu0 %2024
        %v2026 = vsel %vm706, %v1995, %v2011
        %v2027 = vsel %vm706, %v1997, %v2013
        %v2028 = vsel %vm706, %v1999, %v2015
        %v2029 = vsel %vm706, %v2001, %v2017
        %v2030 = vsel %vm706, %v2003, %v2019
        %v2031 = vsel %vm706, %v2005, %v2021
        %v2032 = vsel %vm706, %v2007, %v2023
        %v2033 = vsel %vm706, %v2009, %v2025
        %v2034 = vsel %vm706, %v2011, %v1995
        %v2035 = vsel %vm706, %v2013, %v1997
        %v2036 = vsel %vm706, %v2015, %v1999
        %v2037 = vsel %vm706, %v2017, %v2001
        %v2038 = vsel %vm706, %v2019, %v2003
        %v2039 = vsel %vm706, %v2021, %v2005
        %v2040 = vsel %vm706, %v2023, %v2007
        %v2041 = vsel %vm706, %v2025, %v2009
        %v2042 = vsel %vm725, %v2034, 0.0
        %v2043 = vsel %vm726, %v2026, 0.0
        %v2044 = vsel %vm725, %v2035, 0.0
        %v2045 = vsel %vm726, %v2027, 0.0
        %v2046 = vsel %vm725, %v2036, 0.0
        %v2047 = vsel %vm726, %v2028, 0.0
        %v2048 = vsel %vm725, %v2037, 0.0
        %v2049 = vsel %vm726, %v2029, 0.0
        %v2050 = vsel %vm725, %v2038, 0.0
        %v2051 = vsel %vm726, %v2030, 0.0
        %v2052 = vsel %vm725, %v2039, 0.0
        %v2053 = vsel %vm726, %v2031, 0.0
        %v2054 = vsel %vm725, %v2040, 0.0
        %v2055 = vsel %vm726, %v2032, 0.0
        %v2056 = vsel %vm725, %v2041, 0.0
        %v2057 = vsel %vm726, %v2033, 0.0
        %2058 = vset.pattern.permute.xlu0 14
        %2059 = vperm.xlu0 %2058, %v206
        %v2060 = vpop.permute.xlu0 %2059
        %2062 = vset.pattern.permute.xlu0 14
        %2063 = vperm.xlu0 %2062, %v207
        %v2064 = vpop.permute.xlu0 %2063
        %2066 = vset.pattern.permute.xlu0 14
        %2067 = vperm.xlu0 %2066, %v208
        %v2068 = vpop.permute.xlu0 %2067
        %2070 = vset.pattern.permute.xlu0 14
        %2071 = vperm.xlu0 %2070, %v209
        %v2072 = vpop.permute.xlu0 %2071
        %2074 = vset.pattern.permute.xlu0 14
        %2075 = vperm.xlu0 %2074, %v210
        %v2076 = vpop.permute.xlu0 %2075
        %2078 = vset.pattern.permute.xlu0 14
        %2079 = vperm.xlu0 %2078, %v211
        %v2080 = vpop.permute.xlu0 %2079
        %2082 = vset.pattern.permute.xlu0 14
        %2083 = vperm.xlu0 %2082, %v212
        %v2084 = vpop.permute.xlu0 %2083
        %2086 = vset.pattern.permute.xlu0 14
        %2087 = vperm.xlu0 %2086, %v213
        %v2088 = vpop.permute.xlu0 %2087
        %v2090 = vmul.f32 %v2042, %v2060
        %v2091 = vmul.f32 %v2043, %v2060
        %v2092 = vmul.f32 %v2044, %v2064
        %v2093 = vmul.f32 %v2045, %v2064
        %v2094 = vmul.f32 %v2046, %v2068
        %v2095 = vmul.f32 %v2047, %v2068
        %v2096 = vmul.f32 %v2048, %v2072
        %v2097 = vmul.f32 %v2049, %v2072
        %v2098 = vmul.f32 %v2050, %v2076
        %v2099 = vmul.f32 %v2051, %v2076
        %v2100 = vmul.f32 %v2052, %v2080
        %v2101 = vmul.f32 %v2053, %v2080
        %v2102 = vmul.f32 %v2054, %v2084
        %v2103 = vmul.f32 %v2055, %v2084
        %v2104 = vmul.f32 %v2056, %v2088
        %v2105 = vmul.f32 %v2057, %v2088
        %v2106 = vadd.f32 %v1978, %v2090
        %v2107 = vadd.f32 %v1979, %v2091
        %v2108 = vadd.f32 %v1980, %v2092
        %v2109 = vadd.f32 %v1981, %v2093
        %v2110 = vadd.f32 %v1982, %v2094
        %v2111 = vadd.f32 %v1983, %v2095
        %v2112 = vadd.f32 %v1984, %v2096
        %v2113 = vadd.f32 %v1985, %v2097
        %v2114 = vadd.f32 %v1986, %v2098
        %v2115 = vadd.f32 %v1987, %v2099
        %v2116 = vadd.f32 %v1988, %v2100
        %v2117 = vadd.f32 %v1989, %v2101
        %v2118 = vadd.f32 %v1990, %v2102
        %v2119 = vadd.f32 %v1991, %v2103
        %v2120 = vadd.f32 %v1992, %v2104
        %v2121 = vadd.f32 %v1993, %v2105
        %2122 = vrot.lane.b32.xlu0 %v190, 1
        %v2123 = vpop.permute.xlu0 %2122
        %2124 = vrot.lane.b32.xlu0 %v192, 1
        %v2125 = vpop.permute.xlu0 %2124
        %2126 = vrot.lane.b32.xlu0 %v194, 1
        %v2127 = vpop.permute.xlu0 %2126
        %2128 = vrot.lane.b32.xlu0 %v196, 1
        %v2129 = vpop.permute.xlu0 %2128
        %2130 = vrot.lane.b32.xlu0 %v1746, 1
        %v2131 = vpop.permute.xlu0 %2130
        %2132 = vrot.lane.b32.xlu0 %v1748, 1
        %v2133 = vpop.permute.xlu0 %2132
        %2134 = vrot.lane.b32.xlu0 %v1750, 1
        %v2135 = vpop.permute.xlu0 %2134
        %2136 = vrot.lane.b32.xlu0 %v1752, 1
        %v2137 = vpop.permute.xlu0 %2136
        %2138 = vrot.lane.b32.xlu0 %v191, 1
        %v2139 = vpop.permute.xlu0 %2138
        %2140 = vrot.lane.b32.xlu0 %v193, 1
        %v2141 = vpop.permute.xlu0 %2140
        %2142 = vrot.lane.b32.xlu0 %v195, 1
        %v2143 = vpop.permute.xlu0 %2142
        %2144 = vrot.lane.b32.xlu0 %v197, 1
        %v2145 = vpop.permute.xlu0 %2144
        %2146 = vrot.lane.b32.xlu0 %v1747, 1
        %v2147 = vpop.permute.xlu0 %2146
        %2148 = vrot.lane.b32.xlu0 %v1749, 1
        %v2149 = vpop.permute.xlu0 %2148
        %2150 = vrot.lane.b32.xlu0 %v1751, 1
        %v2151 = vpop.permute.xlu0 %2150
        %2152 = vrot.lane.b32.xlu0 %v1753, 1
        %v2153 = vpop.permute.xlu0 %2152
        %v2154 = vsel %vm839, %v2123, %v2139
        %v2155 = vsel %vm839, %v2125, %v2141
        %v2156 = vsel %vm839, %v2127, %v2143
        %v2157 = vsel %vm839, %v2129, %v2145
        %v2158 = vsel %vm839, %v2131, %v2147
        %v2159 = vsel %vm839, %v2133, %v2149
        %v2160 = vsel %vm839, %v2135, %v2151
        %v2161 = vsel %vm839, %v2137, %v2153
        %v2162 = vsel %vm839, %v2139, %v2123
        %v2163 = vsel %vm839, %v2141, %v2125
        %v2164 = vsel %vm839, %v2143, %v2127
        %v2165 = vsel %vm839, %v2145, %v2129
        %v2166 = vsel %vm839, %v2147, %v2131
        %v2167 = vsel %vm839, %v2149, %v2133
        %v2168 = vsel %vm839, %v2151, %v2135
        %v2169 = vsel %vm839, %v2153, %v2137
        %v2170 = vsel %vm858, %v2162, 0.0
        %v2171 = vsel %vm859, %v2154, 0.0
        %v2172 = vsel %vm858, %v2163, 0.0
        %v2173 = vsel %vm859, %v2155, 0.0
        %v2174 = vsel %vm858, %v2164, 0.0
        %v2175 = vsel %vm859, %v2156, 0.0
        %v2176 = vsel %vm858, %v2165, 0.0
        %v2177 = vsel %vm859, %v2157, 0.0
        %v2178 = vsel %vm858, %v2166, 0.0
        %v2179 = vsel %vm859, %v2158, 0.0
        %v2180 = vsel %vm858, %v2167, 0.0
        %v2181 = vsel %vm859, %v2159, 0.0
        %v2182 = vsel %vm858, %v2168, 0.0
        %v2183 = vsel %vm859, %v2160, 0.0
        %v2184 = vsel %vm858, %v2169, 0.0
        %v2185 = vsel %vm859, %v2161, 0.0
        %2186 = vset.pattern.permute.xlu0 15
        %2187 = vperm.xlu0 %2186, %v206
        %v2188 = vpop.permute.xlu0 %2187
        %2190 = vset.pattern.permute.xlu0 15
        %2191 = vperm.xlu0 %2190, %v207
        %v2192 = vpop.permute.xlu0 %2191
        %2194 = vset.pattern.permute.xlu0 15
        %2195 = vperm.xlu0 %2194, %v208
        %v2196 = vpop.permute.xlu0 %2195
        %2198 = vset.pattern.permute.xlu0 15
        %2199 = vperm.xlu0 %2198, %v209
        %v2200 = vpop.permute.xlu0 %2199
        %2202 = vset.pattern.permute.xlu0 15
        %2203 = vperm.xlu0 %2202, %v210
        %v2204 = vpop.permute.xlu0 %2203
        %2206 = vset.pattern.permute.xlu0 15
        %2207 = vperm.xlu0 %2206, %v211
        %v2208 = vpop.permute.xlu0 %2207
        %2210 = vset.pattern.permute.xlu0 15
        %2211 = vperm.xlu0 %2210, %v212
        %v2212 = vpop.permute.xlu0 %2211
        %2214 = vset.pattern.permute.xlu0 15
        %2215 = vperm.xlu0 %2214, %v213
        %v2216 = vpop.permute.xlu0 %2215
        %v2218 = vmul.f32 %v2170, %v2188
        %v2219 = vmul.f32 %v2171, %v2188
        %v2220 = vmul.f32 %v2172, %v2192
        %v2221 = vmul.f32 %v2173, %v2192
        %v2222 = vmul.f32 %v2174, %v2196
        %v2223 = vmul.f32 %v2175, %v2196
        %v2224 = vmul.f32 %v2176, %v2200
        %v2225 = vmul.f32 %v2177, %v2200
        %v2226 = vmul.f32 %v2178, %v2204
        %v2227 = vmul.f32 %v2179, %v2204
        %v2228 = vmul.f32 %v2180, %v2208
        %v2229 = vmul.f32 %v2181, %v2208
        %v2230 = vmul.f32 %v2182, %v2212
        %v2231 = vmul.f32 %v2183, %v2212
        %v2232 = vmul.f32 %v2184, %v2216
        %v2233 = vmul.f32 %v2185, %v2216
        %v2234 = vadd.f32 %v2106, %v2218
        %v2235 = vadd.f32 %v2107, %v2219
        %v2236 = vadd.f32 %v2108, %v2220
        %v2237 = vadd.f32 %v2109, %v2221
        %v2238 = vadd.f32 %v2110, %v2222
        %v2239 = vadd.f32 %v2111, %v2223
        %v2240 = vadd.f32 %v2112, %v2224
        %v2241 = vadd.f32 %v2113, %v2225
        %v2242 = vadd.f32 %v2114, %v2226
        %v2243 = vadd.f32 %v2115, %v2227
        %v2244 = vadd.f32 %v2116, %v2228
        %v2245 = vadd.f32 %v2117, %v2229
        %v2246 = vadd.f32 %v2118, %v2230
        %v2247 = vadd.f32 %v2119, %v2231
        %v2248 = vadd.f32 %v2120, %v2232
        %v2249 = vadd.f32 %v2121, %v2233
        %2250 = vset.pattern.permute.xlu0 16
        %2251 = vperm.xlu0 %2250, %v206
        %v2252 = vpop.permute.xlu0 %2251
        %2254 = vset.pattern.permute.xlu0 16
        %2255 = vperm.xlu0 %2254, %v207
        %v2256 = vpop.permute.xlu0 %2255
        %2258 = vset.pattern.permute.xlu0 16
        %2259 = vperm.xlu0 %2258, %v208
        %v2260 = vpop.permute.xlu0 %2259
        %2262 = vset.pattern.permute.xlu0 16
        %2263 = vperm.xlu0 %2262, %v209
        %v2264 = vpop.permute.xlu0 %2263
        %2266 = vset.pattern.permute.xlu0 16
        %2267 = vperm.xlu0 %2266, %v210
        %v2268 = vpop.permute.xlu0 %2267
        %2270 = vset.pattern.permute.xlu0 16
        %2271 = vperm.xlu0 %2270, %v211
        %v2272 = vpop.permute.xlu0 %2271
        %2274 = vset.pattern.permute.xlu0 16
        %2275 = vperm.xlu0 %2274, %v212
        %v2276 = vpop.permute.xlu0 %2275
        %2278 = vset.pattern.permute.xlu0 16
        %2279 = vperm.xlu0 %2278, %v213
        %v2280 = vpop.permute.xlu0 %2279
        %v2282 = vmul.f32 %v190, %v2252
        %v2283 = vmul.f32 %v191, %v2252
        %v2284 = vmul.f32 %v192, %v2256
        %v2285 = vmul.f32 %v193, %v2256
        %v2286 = vmul.f32 %v194, %v2260
        %v2287 = vmul.f32 %v195, %v2260
        %v2288 = vmul.f32 %v196, %v2264
        %v2289 = vmul.f32 %v197, %v2264
        %v2290 = vmul.f32 %v1746, %v2268
        %v2291 = vmul.f32 %v1747, %v2268
        %v2292 = vmul.f32 %v1748, %v2272
        %v2293 = vmul.f32 %v1749, %v2272
        %v2294 = vmul.f32 %v1750, %v2276
        %v2295 = vmul.f32 %v1751, %v2276
        %v2296 = vmul.f32 %v1752, %v2280
        %v2297 = vmul.f32 %v1753, %v2280
        %v2298 = vadd.f32 %v2234, %v2282
        %v2299 = vadd.f32 %v2235, %v2283
        %v2300 = vadd.f32 %v2236, %v2284
        %v2301 = vadd.f32 %v2237, %v2285
        %v2302 = vadd.f32 %v2238, %v2286
        %v2303 = vadd.f32 %v2239, %v2287
        %v2304 = vadd.f32 %v2240, %v2288
        %v2305 = vadd.f32 %v2241, %v2289
        %v2306 = vadd.f32 %v2242, %v2290
        %v2307 = vadd.f32 %v2243, %v2291
        %v2308 = vadd.f32 %v2244, %v2292
        %v2309 = vadd.f32 %v2245, %v2293
        %v2310 = vadd.f32 %v2246, %v2294
        %v2311 = vadd.f32 %v2247, %v2295
        %v2312 = vadd.f32 %v2248, %v2296
        %v2313 = vadd.f32 %v2249, %v2297
        %2314 = vrot.lane.b32.xlu0 %v190, 127
        %v2315 = vpop.permute.xlu0 %2314
        %2316 = vrot.lane.b32.xlu0 %v192, 127
        %v2317 = vpop.permute.xlu0 %2316
        %2318 = vrot.lane.b32.xlu0 %v194, 127
        %v2319 = vpop.permute.xlu0 %2318
        %2320 = vrot.lane.b32.xlu0 %v196, 127
        %v2321 = vpop.permute.xlu0 %2320
        %2322 = vrot.lane.b32.xlu0 %v1746, 127
        %v2323 = vpop.permute.xlu0 %2322
        %2324 = vrot.lane.b32.xlu0 %v1748, 127
        %v2325 = vpop.permute.xlu0 %2324
        %2326 = vrot.lane.b32.xlu0 %v1750, 127
        %v2327 = vpop.permute.xlu0 %2326
        %2328 = vrot.lane.b32.xlu0 %v1752, 127
        %v2329 = vpop.permute.xlu0 %2328
        %2330 = vrot.lane.b32.xlu0 %v191, 127
        %v2331 = vpop.permute.xlu0 %2330
        %2332 = vrot.lane.b32.xlu0 %v193, 127
        %v2333 = vpop.permute.xlu0 %2332
        %2334 = vrot.lane.b32.xlu0 %v195, 127
        %v2335 = vpop.permute.xlu0 %2334
        %2336 = vrot.lane.b32.xlu0 %v197, 127
        %v2337 = vpop.permute.xlu0 %2336
        %2338 = vrot.lane.b32.xlu0 %v1747, 127
        %v2339 = vpop.permute.xlu0 %2338
        %2340 = vrot.lane.b32.xlu0 %v1749, 127
        %v2341 = vpop.permute.xlu0 %2340
        %2342 = vrot.lane.b32.xlu0 %v1751, 127
        %v2343 = vpop.permute.xlu0 %2342
        %2344 = vrot.lane.b32.xlu0 %v1753, 127
        %v2345 = vpop.permute.xlu0 %2344
        %v2346 = vsel %vm1036, %v2315, %v2331
        %v2347 = vsel %vm1036, %v2317, %v2333
        %v2348 = vsel %vm1036, %v2319, %v2335
        %v2349 = vsel %vm1036, %v2321, %v2337
        %v2350 = vsel %vm1036, %v2323, %v2339
        %v2351 = vsel %vm1036, %v2325, %v2341
        %v2352 = vsel %vm1036, %v2327, %v2343
        %v2353 = vsel %vm1036, %v2329, %v2345
        %v2354 = vsel %vm1036, %v2331, %v2315
        %v2355 = vsel %vm1036, %v2333, %v2317
        %v2356 = vsel %vm1036, %v2335, %v2319
        %v2357 = vsel %vm1036, %v2337, %v2321
        %v2358 = vsel %vm1036, %v2339, %v2323
        %v2359 = vsel %vm1036, %v2341, %v2325
        %v2360 = vsel %vm1036, %v2343, %v2327
        %v2361 = vsel %vm1036, %v2345, %v2329
        %v2362 = vsel %vm1055, %v2346, 0.0
        %v2363 = vsel %vm1056, %v2354, 0.0
        %v2364 = vsel %vm1055, %v2347, 0.0
        %v2365 = vsel %vm1056, %v2355, 0.0
        %v2366 = vsel %vm1055, %v2348, 0.0
        %v2367 = vsel %vm1056, %v2356, 0.0
        %v2368 = vsel %vm1055, %v2349, 0.0
        %v2369 = vsel %vm1056, %v2357, 0.0
        %v2370 = vsel %vm1055, %v2350, 0.0
        %v2371 = vsel %vm1056, %v2358, 0.0
        %v2372 = vsel %vm1055, %v2351, 0.0
        %v2373 = vsel %vm1056, %v2359, 0.0
        %v2374 = vsel %vm1055, %v2352, 0.0
        %v2375 = vsel %vm1056, %v2360, 0.0
        %v2376 = vsel %vm1055, %v2353, 0.0
        %v2377 = vsel %vm1056, %v2361, 0.0
        %2378 = vset.pattern.permute.xlu0 17
        %2379 = vperm.xlu0 %2378, %v206
        %v2380 = vpop.permute.xlu0 %2379
        %2382 = vset.pattern.permute.xlu0 17
        %2383 = vperm.xlu0 %2382, %v207
        %v2384 = vpop.permute.xlu0 %2383
        %2386 = vset.pattern.permute.xlu0 17
        %2387 = vperm.xlu0 %2386, %v208
        %v2388 = vpop.permute.xlu0 %2387
        %2390 = vset.pattern.permute.xlu0 17
        %2391 = vperm.xlu0 %2390, %v209
        %v2392 = vpop.permute.xlu0 %2391
        %2394 = vset.pattern.permute.xlu0 17
        %2395 = vperm.xlu0 %2394, %v210
        %v2396 = vpop.permute.xlu0 %2395
        %2398 = vset.pattern.permute.xlu0 17
        %2399 = vperm.xlu0 %2398, %v211
        %v2400 = vpop.permute.xlu0 %2399
        %2402 = vset.pattern.permute.xlu0 17
        %2403 = vperm.xlu0 %2402, %v212
        %v2404 = vpop.permute.xlu0 %2403
        %2406 = vset.pattern.permute.xlu0 17
        %2407 = vperm.xlu0 %2406, %v213
        %v2408 = vpop.permute.xlu0 %2407
        %v2410 = vmul.f32 %v2362, %v2380
        %v2411 = vmul.f32 %v2363, %v2380
        %v2412 = vmul.f32 %v2364, %v2384
        %v2413 = vmul.f32 %v2365, %v2384
        %v2414 = vmul.f32 %v2366, %v2388
        %v2415 = vmul.f32 %v2367, %v2388
        %v2416 = vmul.f32 %v2368, %v2392
        %v2417 = vmul.f32 %v2369, %v2392
        %v2418 = vmul.f32 %v2370, %v2396
        %v2419 = vmul.f32 %v2371, %v2396
        %v2420 = vmul.f32 %v2372, %v2400
        %v2421 = vmul.f32 %v2373, %v2400
        %v2422 = vmul.f32 %v2374, %v2404
        %v2423 = vmul.f32 %v2375, %v2404
        %v2424 = vmul.f32 %v2376, %v2408
        %v2425 = vmul.f32 %v2377, %v2408
        %v2426 = vadd.f32 %v2298, %v2410
        %v2427 = vadd.f32 %v2299, %v2411
        %v2428 = vadd.f32 %v2300, %v2412
        %v2429 = vadd.f32 %v2301, %v2413
        %v2430 = vadd.f32 %v2302, %v2414
        %v2431 = vadd.f32 %v2303, %v2415
        %v2432 = vadd.f32 %v2304, %v2416
        %v2433 = vadd.f32 %v2305, %v2417
        %v2434 = vadd.f32 %v2306, %v2418
        %v2435 = vadd.f32 %v2307, %v2419
        %v2436 = vadd.f32 %v2308, %v2420
        %v2437 = vadd.f32 %v2309, %v2421
        %v2438 = vadd.f32 %v2310, %v2422
        %v2439 = vadd.f32 %v2311, %v2423
        %v2440 = vadd.f32 %v2312, %v2424
        %v2441 = vadd.f32 %v2313, %v2425
        %2442 = vrot.lane.b32.xlu0 %v190, 113
        %v2443 = vpop.permute.xlu0 %2442
        %2444 = vrot.lane.b32.xlu0 %v192, 113
        %v2445 = vpop.permute.xlu0 %2444
        %2446 = vrot.lane.b32.xlu0 %v194, 113
        %v2447 = vpop.permute.xlu0 %2446
        %2448 = vrot.lane.b32.xlu0 %v196, 113
        %v2449 = vpop.permute.xlu0 %2448
        %2450 = vrot.lane.b32.xlu0 %v1746, 113
        %v2451 = vpop.permute.xlu0 %2450
        %2452 = vrot.lane.b32.xlu0 %v1748, 113
        %v2453 = vpop.permute.xlu0 %2452
        %2454 = vrot.lane.b32.xlu0 %v1750, 113
        %v2455 = vpop.permute.xlu0 %2454
        %2456 = vrot.lane.b32.xlu0 %v1752, 113
        %v2457 = vpop.permute.xlu0 %2456
        %2458 = vrot.lane.b32.xlu0 %v191, 113
        %v2459 = vpop.permute.xlu0 %2458
        %2460 = vrot.lane.b32.xlu0 %v193, 113
        %v2461 = vpop.permute.xlu0 %2460
        %2462 = vrot.lane.b32.xlu0 %v195, 113
        %v2463 = vpop.permute.xlu0 %2462
        %2464 = vrot.lane.b32.xlu0 %v197, 113
        %v2465 = vpop.permute.xlu0 %2464
        %2466 = vrot.lane.b32.xlu0 %v1747, 113
        %v2467 = vpop.permute.xlu0 %2466
        %2468 = vrot.lane.b32.xlu0 %v1749, 113
        %v2469 = vpop.permute.xlu0 %2468
        %2470 = vrot.lane.b32.xlu0 %v1751, 113
        %v2471 = vpop.permute.xlu0 %2470
        %2472 = vrot.lane.b32.xlu0 %v1753, 113
        %v2473 = vpop.permute.xlu0 %2472
        %v2474 = vsel %vm1169, %v2443, %v2459
        %v2475 = vsel %vm1169, %v2445, %v2461
        %v2476 = vsel %vm1169, %v2447, %v2463
        %v2477 = vsel %vm1169, %v2449, %v2465
        %v2478 = vsel %vm1169, %v2451, %v2467
        %v2479 = vsel %vm1169, %v2453, %v2469
        %v2480 = vsel %vm1169, %v2455, %v2471
        %v2481 = vsel %vm1169, %v2457, %v2473
        %v2482 = vsel %vm1169, %v2459, %v2443
        %v2483 = vsel %vm1169, %v2461, %v2445
        %v2484 = vsel %vm1169, %v2463, %v2447
        %v2485 = vsel %vm1169, %v2465, %v2449
        %v2486 = vsel %vm1169, %v2467, %v2451
        %v2487 = vsel %vm1169, %v2469, %v2453
        %v2488 = vsel %vm1169, %v2471, %v2455
        %v2489 = vsel %vm1169, %v2473, %v2457
        %v2490 = vsel %vm1188, %v2474, 0.0
        %v2491 = vsel %vm1189, %v2482, 0.0
        %v2492 = vsel %vm1188, %v2475, 0.0
        %v2493 = vsel %vm1189, %v2483, 0.0
        %v2494 = vsel %vm1188, %v2476, 0.0
        %v2495 = vsel %vm1189, %v2484, 0.0
        %v2496 = vsel %vm1188, %v2477, 0.0
        %v2497 = vsel %vm1189, %v2485, 0.0
        %v2498 = vsel %vm1188, %v2478, 0.0
        %v2499 = vsel %vm1189, %v2486, 0.0
        %v2500 = vsel %vm1188, %v2479, 0.0
        %v2501 = vsel %vm1189, %v2487, 0.0
        %v2502 = vsel %vm1188, %v2480, 0.0
        %v2503 = vsel %vm1189, %v2488, 0.0
        %v2504 = vsel %vm1188, %v2481, 0.0
        %v2505 = vsel %vm1189, %v2489, 0.0
        %2506 = vset.pattern.permute.xlu0 18
        %2507 = vperm.xlu0 %2506, %v206
        %v2508 = vpop.permute.xlu0 %2507
        %2510 = vset.pattern.permute.xlu0 18
        %2511 = vperm.xlu0 %2510, %v207
        %v2512 = vpop.permute.xlu0 %2511
        %2514 = vset.pattern.permute.xlu0 18
        %2515 = vperm.xlu0 %2514, %v208
        %v2516 = vpop.permute.xlu0 %2515
        %2518 = vset.pattern.permute.xlu0 18
        %2519 = vperm.xlu0 %2518, %v209
        %v2520 = vpop.permute.xlu0 %2519
        %2522 = vset.pattern.permute.xlu0 18
        %2523 = vperm.xlu0 %2522, %v210
        %v2524 = vpop.permute.xlu0 %2523
        %2526 = vset.pattern.permute.xlu0 18
        %2527 = vperm.xlu0 %2526, %v211
        %v2528 = vpop.permute.xlu0 %2527
        %2530 = vset.pattern.permute.xlu0 18
        %2531 = vperm.xlu0 %2530, %v212
        %v2532 = vpop.permute.xlu0 %2531
        %2534 = vset.pattern.permute.xlu0 18
        %2535 = vperm.xlu0 %2534, %v213
        %v2536 = vpop.permute.xlu0 %2535
        %v2538 = vmul.f32 %v2490, %v2508
        %v2539 = vmul.f32 %v2491, %v2508
        %v2540 = vmul.f32 %v2492, %v2512
        %v2541 = vmul.f32 %v2493, %v2512
        %v2542 = vmul.f32 %v2494, %v2516
        %v2543 = vmul.f32 %v2495, %v2516
        %v2544 = vmul.f32 %v2496, %v2520
        %v2545 = vmul.f32 %v2497, %v2520
        %v2546 = vmul.f32 %v2498, %v2524
        %v2547 = vmul.f32 %v2499, %v2524
        %v2548 = vmul.f32 %v2500, %v2528
        %v2549 = vmul.f32 %v2501, %v2528
        %v2550 = vmul.f32 %v2502, %v2532
        %v2551 = vmul.f32 %v2503, %v2532
        %v2552 = vmul.f32 %v2504, %v2536
        %v2553 = vmul.f32 %v2505, %v2536
        %v2554 = vadd.f32 %v2426, %v2538
        %v2555 = vadd.f32 %v2427, %v2539
        %v2556 = vadd.f32 %v2428, %v2540
        %v2557 = vadd.f32 %v2429, %v2541
        %v2558 = vadd.f32 %v2430, %v2542
        %v2559 = vadd.f32 %v2431, %v2543
        %v2560 = vadd.f32 %v2432, %v2544
        %v2561 = vadd.f32 %v2433, %v2545
        %v2562 = vadd.f32 %v2434, %v2546
        %v2563 = vadd.f32 %v2435, %v2547
        %v2564 = vadd.f32 %v2436, %v2548
        %v2565 = vadd.f32 %v2437, %v2549
        %v2566 = vadd.f32 %v2438, %v2550
        %v2567 = vadd.f32 %v2439, %v2551
        %v2568 = vadd.f32 %v2440, %v2552
        %v2569 = vadd.f32 %v2441, %v2553
        %2570 = vrot.lane.b32.xlu0 %v190, 112
        %v2571 = vpop.permute.xlu0 %2570
        %2572 = vrot.lane.b32.xlu0 %v192, 112
        %v2573 = vpop.permute.xlu0 %2572
        %2574 = vrot.lane.b32.xlu0 %v194, 112
        %v2575 = vpop.permute.xlu0 %2574
        %2576 = vrot.lane.b32.xlu0 %v196, 112
        %v2577 = vpop.permute.xlu0 %2576
        %2578 = vrot.lane.b32.xlu0 %v1746, 112
        %v2579 = vpop.permute.xlu0 %2578
        %2580 = vrot.lane.b32.xlu0 %v1748, 112
        %v2581 = vpop.permute.xlu0 %2580
        %2582 = vrot.lane.b32.xlu0 %v1750, 112
        %v2583 = vpop.permute.xlu0 %2582
        %2584 = vrot.lane.b32.xlu0 %v1752, 112
        %v2585 = vpop.permute.xlu0 %2584
        %2586 = vrot.lane.b32.xlu0 %v191, 112
        %v2587 = vpop.permute.xlu0 %2586
        %2588 = vrot.lane.b32.xlu0 %v193, 112
        %v2589 = vpop.permute.xlu0 %2588
        %2590 = vrot.lane.b32.xlu0 %v195, 112
        %v2591 = vpop.permute.xlu0 %2590
        %2592 = vrot.lane.b32.xlu0 %v197, 112
        %v2593 = vpop.permute.xlu0 %2592
        %2594 = vrot.lane.b32.xlu0 %v1747, 112
        %v2595 = vpop.permute.xlu0 %2594
        %2596 = vrot.lane.b32.xlu0 %v1749, 112
        %v2597 = vpop.permute.xlu0 %2596
        %2598 = vrot.lane.b32.xlu0 %v1751, 112
        %v2599 = vpop.permute.xlu0 %2598
        %2600 = vrot.lane.b32.xlu0 %v1753, 112
        %v2601 = vpop.permute.xlu0 %2600
        %v2602 = vsel %vm1302, %v2571, %v2587
        %v2603 = vsel %vm1302, %v2573, %v2589
        %v2604 = vsel %vm1302, %v2575, %v2591
        %v2605 = vsel %vm1302, %v2577, %v2593
        %v2606 = vsel %vm1302, %v2579, %v2595
        %v2607 = vsel %vm1302, %v2581, %v2597
        %v2608 = vsel %vm1302, %v2583, %v2599
        %v2609 = vsel %vm1302, %v2585, %v2601
        %v2610 = vsel %vm1302, %v2587, %v2571
        %v2611 = vsel %vm1302, %v2589, %v2573
        %v2612 = vsel %vm1302, %v2591, %v2575
        %v2613 = vsel %vm1302, %v2593, %v2577
        %v2614 = vsel %vm1302, %v2595, %v2579
        %v2615 = vsel %vm1302, %v2597, %v2581
        %v2616 = vsel %vm1302, %v2599, %v2583
        %v2617 = vsel %vm1302, %v2601, %v2585
        %v2618 = vsel %vm1321, %v2602, 0.0
        %v2619 = vsel %vm1322, %v2610, 0.0
        %v2620 = vsel %vm1321, %v2603, 0.0
        %v2621 = vsel %vm1322, %v2611, 0.0
        %v2622 = vsel %vm1321, %v2604, 0.0
        %v2623 = vsel %vm1322, %v2612, 0.0
        %v2624 = vsel %vm1321, %v2605, 0.0
        %v2625 = vsel %vm1322, %v2613, 0.0
        %v2626 = vsel %vm1321, %v2606, 0.0
        %v2627 = vsel %vm1322, %v2614, 0.0
        %v2628 = vsel %vm1321, %v2607, 0.0
        %v2629 = vsel %vm1322, %v2615, 0.0
        %v2630 = vsel %vm1321, %v2608, 0.0
        %v2631 = vsel %vm1322, %v2616, 0.0
        %v2632 = vsel %vm1321, %v2609, 0.0
        %v2633 = vsel %vm1322, %v2617, 0.0
        %2634 = vset.pattern.permute.xlu0 19
        %2635 = vperm.xlu0 %2634, %v206
        %v2636 = vpop.permute.xlu0 %2635
        %2638 = vset.pattern.permute.xlu0 19
        %2639 = vperm.xlu0 %2638, %v207
        %v2640 = vpop.permute.xlu0 %2639
        %2642 = vset.pattern.permute.xlu0 19
        %2643 = vperm.xlu0 %2642, %v208
        %v2644 = vpop.permute.xlu0 %2643
        %2646 = vset.pattern.permute.xlu0 19
        %2647 = vperm.xlu0 %2646, %v209
        %v2648 = vpop.permute.xlu0 %2647
        %2650 = vset.pattern.permute.xlu0 19
        %2651 = vperm.xlu0 %2650, %v210
        %v2652 = vpop.permute.xlu0 %2651
        %2654 = vset.pattern.permute.xlu0 19
        %2655 = vperm.xlu0 %2654, %v211
        %v2656 = vpop.permute.xlu0 %2655
        %2658 = vset.pattern.permute.xlu0 19
        %2659 = vperm.xlu0 %2658, %v212
        %v2660 = vpop.permute.xlu0 %2659
        %2662 = vset.pattern.permute.xlu0 19
        %2663 = vperm.xlu0 %2662, %v213
        %v2664 = vpop.permute.xlu0 %2663
        %v2666 = vmul.f32 %v2618, %v2636
        %v2667 = vmul.f32 %v2619, %v2636
        %v2668 = vmul.f32 %v2620, %v2640
        %v2669 = vmul.f32 %v2621, %v2640
        %v2670 = vmul.f32 %v2622, %v2644
        %v2671 = vmul.f32 %v2623, %v2644
        %v2672 = vmul.f32 %v2624, %v2648
        %v2673 = vmul.f32 %v2625, %v2648
        %v2674 = vmul.f32 %v2626, %v2652
        %v2675 = vmul.f32 %v2627, %v2652
        %v2676 = vmul.f32 %v2628, %v2656
        %v2677 = vmul.f32 %v2629, %v2656
        %v2678 = vmul.f32 %v2630, %v2660
        %v2679 = vmul.f32 %v2631, %v2660
        %v2680 = vmul.f32 %v2632, %v2664
        %v2681 = vmul.f32 %v2633, %v2664
        %v2682 = vadd.f32 %v2554, %v2666
        %v2683 = vadd.f32 %v2555, %v2667
        %v2684 = vadd.f32 %v2556, %v2668
        %v2685 = vadd.f32 %v2557, %v2669
        %v2686 = vadd.f32 %v2558, %v2670
        %v2687 = vadd.f32 %v2559, %v2671
        %v2688 = vadd.f32 %v2560, %v2672
        %v2689 = vadd.f32 %v2561, %v2673
        %v2690 = vadd.f32 %v2562, %v2674
        %v2691 = vadd.f32 %v2563, %v2675
        %v2692 = vadd.f32 %v2564, %v2676
        %v2693 = vadd.f32 %v2565, %v2677
        %v2694 = vadd.f32 %v2566, %v2678
        %v2695 = vadd.f32 %v2567, %v2679
        %v2696 = vadd.f32 %v2568, %v2680
        %v2697 = vadd.f32 %v2569, %v2681
        %2698 = vrot.lane.b32.xlu0 %v190, 111
        %v2699 = vpop.permute.xlu0 %2698
        %2700 = vrot.lane.b32.xlu0 %v192, 111
        %v2701 = vpop.permute.xlu0 %2700
        %2702 = vrot.lane.b32.xlu0 %v194, 111
        %v2703 = vpop.permute.xlu0 %2702
        %2704 = vrot.lane.b32.xlu0 %v196, 111
        %v2705 = vpop.permute.xlu0 %2704
        %2706 = vrot.lane.b32.xlu0 %v1746, 111
        %v2707 = vpop.permute.xlu0 %2706
        %2708 = vrot.lane.b32.xlu0 %v1748, 111
        %v2709 = vpop.permute.xlu0 %2708
        %2710 = vrot.lane.b32.xlu0 %v1750, 111
        %v2711 = vpop.permute.xlu0 %2710
        %2712 = vrot.lane.b32.xlu0 %v1752, 111
        %v2713 = vpop.permute.xlu0 %2712
        %2714 = vrot.lane.b32.xlu0 %v191, 111
        %v2715 = vpop.permute.xlu0 %2714
        %2716 = vrot.lane.b32.xlu0 %v193, 111
        %v2717 = vpop.permute.xlu0 %2716
        %2718 = vrot.lane.b32.xlu0 %v195, 111
        %v2719 = vpop.permute.xlu0 %2718
        %2720 = vrot.lane.b32.xlu0 %v197, 111
        %v2721 = vpop.permute.xlu0 %2720
        %2722 = vrot.lane.b32.xlu0 %v1747, 111
        %v2723 = vpop.permute.xlu0 %2722
        %2724 = vrot.lane.b32.xlu0 %v1749, 111
        %v2725 = vpop.permute.xlu0 %2724
        %2726 = vrot.lane.b32.xlu0 %v1751, 111
        %v2727 = vpop.permute.xlu0 %2726
        %2728 = vrot.lane.b32.xlu0 %v1753, 111
        %v2729 = vpop.permute.xlu0 %2728
        %v2730 = vsel %vm1435, %v2699, %v2715
        %v2731 = vsel %vm1435, %v2701, %v2717
        %v2732 = vsel %vm1435, %v2703, %v2719
        %v2733 = vsel %vm1435, %v2705, %v2721
        %v2734 = vsel %vm1435, %v2707, %v2723
        %v2735 = vsel %vm1435, %v2709, %v2725
        %v2736 = vsel %vm1435, %v2711, %v2727
        %v2737 = vsel %vm1435, %v2713, %v2729
        %v2738 = vsel %vm1435, %v2715, %v2699
        %v2739 = vsel %vm1435, %v2717, %v2701
        %v2740 = vsel %vm1435, %v2719, %v2703
        %v2741 = vsel %vm1435, %v2721, %v2705
        %v2742 = vsel %vm1435, %v2723, %v2707
        %v2743 = vsel %vm1435, %v2725, %v2709
        %v2744 = vsel %vm1435, %v2727, %v2711
        %v2745 = vsel %vm1435, %v2729, %v2713
        %v2746 = vsel %vm1454, %v2730, 0.0
        %v2747 = vsel %vm1455, %v2738, 0.0
        %v2748 = vsel %vm1454, %v2731, 0.0
        %v2749 = vsel %vm1455, %v2739, 0.0
        %v2750 = vsel %vm1454, %v2732, 0.0
        %v2751 = vsel %vm1455, %v2740, 0.0
        %v2752 = vsel %vm1454, %v2733, 0.0
        %v2753 = vsel %vm1455, %v2741, 0.0
        %v2754 = vsel %vm1454, %v2734, 0.0
        %v2755 = vsel %vm1455, %v2742, 0.0
        %v2756 = vsel %vm1454, %v2735, 0.0
        %v2757 = vsel %vm1455, %v2743, 0.0
        %v2758 = vsel %vm1454, %v2736, 0.0
        %v2759 = vsel %vm1455, %v2744, 0.0
        %v2760 = vsel %vm1454, %v2737, 0.0
        %v2761 = vsel %vm1455, %v2745, 0.0
        %2762 = vset.pattern.permute.xlu0 20
        %2763 = vperm.xlu0 %2762, %v206
        %v2764 = vpop.permute.xlu0 %2763
        %2766 = vset.pattern.permute.xlu0 20
        %2767 = vperm.xlu0 %2766, %v207
        %v2768 = vpop.permute.xlu0 %2767
        %2770 = vset.pattern.permute.xlu0 20
        %2771 = vperm.xlu0 %2770, %v208
        %v2772 = vpop.permute.xlu0 %2771
        %2774 = vset.pattern.permute.xlu0 20
        %2775 = vperm.xlu0 %2774, %v209
        %v2776 = vpop.permute.xlu0 %2775
        %2778 = vset.pattern.permute.xlu0 20
        %2779 = vperm.xlu0 %2778, %v210
        %v2780 = vpop.permute.xlu0 %2779
        %2782 = vset.pattern.permute.xlu0 20
        %2783 = vperm.xlu0 %2782, %v211
        %v2784 = vpop.permute.xlu0 %2783
        %2786 = vset.pattern.permute.xlu0 20
        %2787 = vperm.xlu0 %2786, %v212
        %v2788 = vpop.permute.xlu0 %2787
        %2790 = vset.pattern.permute.xlu0 20
        %2791 = vperm.xlu0 %2790, %v213
        %v2792 = vpop.permute.xlu0 %2791
        %v2794 = vmul.f32 %v2746, %v2764
        %v2795 = vmul.f32 %v2747, %v2764
        %v2796 = vmul.f32 %v2748, %v2768
        %v2797 = vmul.f32 %v2749, %v2768
        %v2798 = vmul.f32 %v2750, %v2772
        %v2799 = vmul.f32 %v2751, %v2772
        %v2800 = vmul.f32 %v2752, %v2776
        %v2801 = vmul.f32 %v2753, %v2776
        %v2802 = vmul.f32 %v2754, %v2780
        %v2803 = vmul.f32 %v2755, %v2780
        %v2804 = vmul.f32 %v2756, %v2784
        %v2805 = vmul.f32 %v2757, %v2784
        %v2806 = vmul.f32 %v2758, %v2788
        %v2807 = vmul.f32 %v2759, %v2788
        %v2808 = vmul.f32 %v2760, %v2792
        %v2809 = vmul.f32 %v2761, %v2792
        %v2810 = vadd.f32 %v2682, %v2794
        %v2811 = vadd.f32 %v2683, %v2795
        %v2812 = vadd.f32 %v2684, %v2796
        %v2813 = vadd.f32 %v2685, %v2797
        %v2814 = vadd.f32 %v2686, %v2798
        %v2815 = vadd.f32 %v2687, %v2799
        %v2816 = vadd.f32 %v2688, %v2800
        %v2817 = vadd.f32 %v2689, %v2801
        %v2818 = vadd.f32 %v2690, %v2802
        %v2819 = vadd.f32 %v2691, %v2803
        %v2820 = vadd.f32 %v2692, %v2804
        %v2821 = vadd.f32 %v2693, %v2805
        %v2822 = vadd.f32 %v2694, %v2806
        %v2823 = vadd.f32 %v2695, %v2807
        %v2824 = vadd.f32 %v2696, %v2808
        %v2825 = vadd.f32 %v2697, %v2809
        %2826 = vset.pattern.permute.xlu0 21
        %2827 = vperm.xlu0 %2826, %v206
        %v2828 = vpop.permute.xlu0 %2827
        %2830 = vset.pattern.permute.xlu0 21
        %2831 = vperm.xlu0 %2830, %v207
        %v2832 = vpop.permute.xlu0 %2831
        %2834 = vset.pattern.permute.xlu0 21
        %2835 = vperm.xlu0 %2834, %v208
        %v2836 = vpop.permute.xlu0 %2835
        %2838 = vset.pattern.permute.xlu0 21
        %2839 = vperm.xlu0 %2838, %v209
        %v2840 = vpop.permute.xlu0 %2839
        %2842 = vset.pattern.permute.xlu0 21
        %2843 = vperm.xlu0 %2842, %v210
        %v2844 = vpop.permute.xlu0 %2843
        %2846 = vset.pattern.permute.xlu0 21
        %2847 = vperm.xlu0 %2846, %v211
        %v2848 = vpop.permute.xlu0 %2847
        %2850 = vset.pattern.permute.xlu0 21
        %2851 = vperm.xlu0 %2850, %v212
        %v2852 = vpop.permute.xlu0 %2851
        %2854 = vset.pattern.permute.xlu0 21
        %2855 = vperm.xlu0 %2854, %v213
        %v2856 = vpop.permute.xlu0 %2855
        %v2858 = vadd.f32 %v2810, %v2828
        %v2859 = vadd.f32 %v2811, %v2828
        %v2860 = vadd.f32 %v2812, %v2832
        %v2861 = vadd.f32 %v2813, %v2832
        %v2862 = vadd.f32 %v2814, %v2836
        %v2863 = vadd.f32 %v2815, %v2836
        %v2864 = vadd.f32 %v2816, %v2840
        %v2865 = vadd.f32 %v2817, %v2840
        %v2866 = vadd.f32 %v2818, %v2844
        %v2867 = vadd.f32 %v2819, %v2844
        %v2868 = vadd.f32 %v2820, %v2848
        %v2869 = vadd.f32 %v2821, %v2848
        %v2870 = vadd.f32 %v2822, %v2852
        %v2871 = vadd.f32 %v2823, %v2852
        %v2872 = vadd.f32 %v2824, %v2856
        %v2873 = vadd.f32 %v2825, %v2856
        %v2874 = vmax.f32 %v2858, 0.0
        %v2875 = vmax.f32 %v2859, 0.0
        %v2876 = vmax.f32 %v2860, 0.0
        %v2877 = vmax.f32 %v2861, 0.0
        %v2878 = vmax.f32 %v2862, 0.0
        %v2879 = vmax.f32 %v2863, 0.0
        %v2880 = vmax.f32 %v2864, 0.0
        %v2881 = vmax.f32 %v2865, 0.0
        %v2882 = vmax.f32 %v2866, 0.0
        %v2883 = vmax.f32 %v2867, 0.0
        %v2884 = vmax.f32 %v2868, 0.0
        %v2885 = vmax.f32 %v2869, 0.0
        %v2886 = vmax.f32 %v2870, 0.0
        %v2887 = vmax.f32 %v2871, 0.0
        %v2888 = vmax.f32 %v2872, 0.0
        %v2889 = vmax.f32 %v2873, 0.0
        %v2890 = vmin.f32 %v2874, 6.0
        %v2891 = vmin.f32 %v2875, 6.0
        %v2892 = vmin.f32 %v2876, 6.0
        %v2893 = vmin.f32 %v2877, 6.0
        %v2894 = vmin.f32 %v2878, 6.0
        %v2895 = vmin.f32 %v2879, 6.0
        %v2896 = vmin.f32 %v2880, 6.0
        %v2897 = vmin.f32 %v2881, 6.0
        %v2898 = vmin.f32 %v2882, 6.0
        %v2899 = vmin.f32 %v2883, 6.0
        %v2900 = vmin.f32 %v2884, 6.0
        %v2901 = vmin.f32 %v2885, 6.0
        %v2902 = vmin.f32 %v2886, 6.0
        %v2903 = vmin.f32 %v2887, 6.0
        %v2904 = vmin.f32 %v2888, 6.0
        %v2905 = vmin.f32 %v2889, 6.0
        %v2906 = vld [vmem:[%s1 + $0x60] sm:$0xff]
        %v2907 = vld [vmem:[%s1 + $0x68] sm:$0xff]
        %v2908 = vld [vmem:[%s1 + $0x70] sm:$0xff]
        %v2909 = vld [vmem:[%s1 + $0x78] sm:$0xff]
        %2910 = vset.pattern.permute.xlu0 22
        %2911 = vperm.xlu0 %2910, %v1620
        %v2912 = vpop.permute.xlu0 %2911
        %2914 = vset.pattern.permute.xlu0 22
        %2915 = vperm.xlu0 %2914, %v1621
        %v2916 = vpop.permute.xlu0 %2915
        %2918 = vset.pattern.permute.xlu0 22
        %2919 = vperm.xlu0 %2918, %v1622
        %v2920 = vpop.permute.xlu0 %2919
        %2922 = vset.pattern.permute.xlu0 22
        %2923 = vperm.xlu0 %2922, %v1623
        %v2924 = vpop.permute.xlu0 %2923
        %v2927 = vsel %vm1644, %v2906, 0
        %v2930 = vsel %vm1644, %v2907, 0
        %v2933 = vsel %vm1644, %v2908, 0
        %v2936 = vsel %vm1644, %v2909, 0
        %2938 = vmatprep.subr.mxu0 0.0
        %2939 = vmatpush1.msra.mxu0 0.0
        %2940 = vmatprep.subr.mxu0 0.0
        %2941 = vmatpush1.msra.mxu0 0.0
        %2942 = vmatprep.subr.mxu0 0.0
        %2943 = vmatpush1.msra.mxu0 0.0
        %2944 = vmatprep.subr.mxu0 0.0
        %2945 = vmatpush1.msra.mxu0 0.0
        %2946 = vmatprep.subr.mxu0 0.0
        %2947 = vmatpush1.msra.mxu0 0.0
        %2948 = vmatprep.subr.mxu0 0.0
        %2949 = vmatpush1.msra.mxu0 0.0
        %2950 = vmatprep.subr.mxu0 0.0
        %2951 = vmatpush1.msra.mxu0 0.0
        %2952 = vmatprep.subr.mxu0 0.0
        %2953 = vmatpush1.msra.mxu0 0.0
        %2954 = vmatprep.subr.mxu0 %v2905
        %2955 = vmatpush1.msra.mxu0 %v2904
        %2956 = vmatprep.subr.mxu0 %v2903
        %2957 = vmatpush1.msra.mxu0 %v2902
        %2958 = vmatprep.subr.mxu0 %v2901
        %2959 = vmatpush1.msra.mxu0 %v2900
        %2960 = vmatprep.subr.mxu0 %v2899
        %2961 = vmatpush1.msra.mxu0 %v2898
        %2962 = vmatprep.subr.mxu0 %v2897
        %2963 = vmatpush1.msra.mxu0 %v2896
        %2964 = vmatprep.subr.mxu0 %v2895
        %2965 = vmatpush1.msra.mxu0 %v2894
        %2966 = vmatprep.subr.mxu0 %v2893
        %2967 = vmatpush1.msra.mxu0 %v2892
        %2968 = vmatprep.subr.mxu0 %v2891
        %2969 = vmatpush1.msra.mxu0 %v2890
        %2970 = vmatprep.subr.mxu0 0.0
        %2971 = vmatpush2.msra.mxu0 0.0
        %2972 = vmatprep.subr.mxu0 0.0
        %2973 = vmatpush2.msra.mxu0 0.0
        %2974 = vmatprep.subr.mxu0 0.0
        %2975 = vmatpush2.msra.mxu0 0.0
        %2976 = vmatprep.subr.mxu0 0.0
        %2977 = vmatpush2.msra.mxu0 0.0
        %2978 = vmatprep.subr.mxu0 0.0
        %2979 = vmatpush2.msra.mxu0 0.0
        %2980 = vmatprep.subr.mxu0 0.0
        %2981 = vmatpush2.msra.mxu0 0.0
        %2982 = vmatprep.subr.mxu0 0.0
        %2983 = vmatpush2.msra.mxu0 0.0
        %2984 = vmatprep.subr.mxu0 0.0
        %2985 = vmatpush2.msra.mxu0 0.0
        %2986 = vmatprep.subr.mxu0 0.0
        %2987 = vmatpush2.msra.mxu0 0.0
        %2988 = vmatprep.subr.mxu0 0.0
        %2989 = vmatpush2.msra.mxu0 0.0
        %2990 = vmatprep.subr.mxu0 0.0
        %2991 = vmatpush2.msra.mxu0 0.0
        %2992 = vmatprep.subr.mxu0 0.0
        %2993 = vmatpush2.msra.mxu0 0.0
        %2994 = vmatprep.subr.mxu0 0.0
        %2995 = vmatpush2.msra.mxu0 0.0
        %2996 = vmatprep.subr.mxu0 0.0
        %2997 = vmatpush2.msra.mxu0 0.0
        %2998 = vmatprep.subr.mxu0 0.0
        %2999 = vmatpush2.msra.mxu0 0.0
        %3000 = vmatprep.subr.mxu0 0.0
        %3001 = vmatpush2.msra.mxu0 0.0
        %3002 = vmatprep.mubr.f32.mxu0 0.0
        %3003 = vmatmul.mubr.f32.gmra.mxu0 %v2927
        %v3004 = vpop.f32.mrf.mxu0
        %v3005 = vadd.f32 %v2912, %v3004
        %v3006 = vpop.f32.mrf.mxu0
        %v3007 = vadd.f32 %v2912, %v3006
        %3008 = vmatprep.mubr.f32.mxu0 0.0
        %3009 = vmatmul.mubr.f32.gmra.mxu0 %v2930
        %v3010 = vpop.f32.mrf.mxu0
        %v3011 = vadd.f32 %v2916, %v3010
        %v3012 = vpop.f32.mrf.mxu0
        %v3013 = vadd.f32 %v2916, %v3012
        %3014 = vmatprep.mubr.f32.mxu0 0.0
        %3015 = vmatmul.mubr.f32.gmra.mxu0 %v2933
        %v3016 = vpop.f32.mrf.mxu0
        %v3017 = vadd.f32 %v2920, %v3016
        %v3018 = vpop.f32.mrf.mxu0
        %v3019 = vadd.f32 %v2920, %v3018
        %3020 = vmatprep.mubr.f32.mxu0 0.0
        %3021 = vmatmul.mubr.f32.gmra.mxu0 %v2936
        %v3022 = vpop.f32.mrf.mxu0
        %v3023 = vadd.f32 %v2924, %v3022
        %v3024 = vpop.f32.mrf.mxu0
        %v3025 = vadd.f32 %v2924, %v3024
        %3026 = vdwg.mxu0
        %3027 = vrot.lane.b32.xlu0 %v3005, 17
        %v3028 = vpop.permute.xlu0 %3027
        %3029 = vrot.lane.b32.xlu0 %v3011, 17
        %v3030 = vpop.permute.xlu0 %3029
        %3031 = vrot.lane.b32.xlu0 %v3017, 17
        %v3032 = vpop.permute.xlu0 %3031
        %3033 = vrot.lane.b32.xlu0 %v3023, 17
        %v3034 = vpop.permute.xlu0 %3033
        %3035 = vrot.lane.b32.xlu0 %v3007, 17
        %v3036 = vpop.permute.xlu0 %3035
        %3037 = vrot.lane.b32.xlu0 %v3013, 17
        %v3038 = vpop.permute.xlu0 %3037
        %3039 = vrot.lane.b32.xlu0 %v3019, 17
        %v3040 = vpop.permute.xlu0 %3039
        %3041 = vrot.lane.b32.xlu0 %v3025, 17
        %v3042 = vpop.permute.xlu0 %3041
        %v3043 = vsel %vm456, %v3028, %v3036
        %v3044 = vsel %vm456, %v3030, %v3038
        %v3045 = vsel %vm456, %v3032, %v3040
        %v3046 = vsel %vm456, %v3034, %v3042
        %v3047 = vsel %vm456, %v3036, %v3028
        %v3048 = vsel %vm456, %v3038, %v3030
        %v3049 = vsel %vm456, %v3040, %v3032
        %v3050 = vsel %vm456, %v3042, %v3034
        %v3051 = vsel %vm475, %v3047, 0.0
        %v3052 = vsel %vm476, %v3043, 0.0
        %v3053 = vsel %vm475, %v3048, 0.0
        %v3054 = vsel %vm476, %v3044, 0.0
        %v3055 = vsel %vm475, %v3049, 0.0
        %v3056 = vsel %vm476, %v3045, 0.0
        %v3057 = vsel %vm475, %v3050, 0.0
        %v3058 = vsel %vm476, %v3046, 0.0
        %3059 = vset.pattern.permute.xlu0 23
        %3060 = vperm.xlu0 %3059, %v206
        %v3061 = vpop.permute.xlu0 %3060
        %3063 = vset.pattern.permute.xlu0 23
        %3064 = vperm.xlu0 %3063, %v207
        %v3065 = vpop.permute.xlu0 %3064
        %3067 = vset.pattern.permute.xlu0 23
        %3068 = vperm.xlu0 %3067, %v208
        %v3069 = vpop.permute.xlu0 %3068
        %3071 = vset.pattern.permute.xlu0 23
        %3072 = vperm.xlu0 %3071, %v209
        %v3073 = vpop.permute.xlu0 %3072
        %3075 = vset.pattern.permute.xlu0 23
        %3076 = vperm.xlu0 %3075, %v210
        %v3077 = vpop.permute.xlu0 %3076
        %3079 = vset.pattern.permute.xlu0 23
        %3080 = vperm.xlu0 %3079, %v211
        %v3081 = vpop.permute.xlu0 %3080
        %3083 = vset.pattern.permute.xlu0 23
        %3084 = vperm.xlu0 %3083, %v212
        %v3085 = vpop.permute.xlu0 %3084
        %3087 = vset.pattern.permute.xlu0 23
        %3088 = vperm.xlu0 %3087, %v213
        %v3089 = vpop.permute.xlu0 %3088
        %v3091 = vmul.f32 %v3051, %v3061
        %v3092 = vmul.f32 %v3052, %v3061
        %v3093 = vmul.f32 %v3053, %v3065
        %v3094 = vmul.f32 %v3054, %v3065
        %v3095 = vmul.f32 %v3055, %v3069
        %v3096 = vmul.f32 %v3056, %v3069
        %v3097 = vmul.f32 %v3057, %v3073
        %v3098 = vmul.f32 %v3058, %v3073
        %v3099 = vmul.f32 %v1802, %v3077
        %v3100 = vmul.f32 %v1803, %v3077
        %v3101 = vmul.f32 %v1804, %v3081
        %v3102 = vmul.f32 %v1805, %v3081
        %v3103 = vmul.f32 %v1806, %v3085
        %v3104 = vmul.f32 %v1807, %v3085
        %v3105 = vmul.f32 %v1808, %v3089
        %v3106 = vmul.f32 %v1809, %v3089
        %3107 = vrot.lane.b32.xlu0 %v3005, 16
        %v3108 = vpop.permute.xlu0 %3107
        %3109 = vrot.lane.b32.xlu0 %v3011, 16
        %v3110 = vpop.permute.xlu0 %3109
        %3111 = vrot.lane.b32.xlu0 %v3017, 16
        %v3112 = vpop.permute.xlu0 %3111
        %3113 = vrot.lane.b32.xlu0 %v3023, 16
        %v3114 = vpop.permute.xlu0 %3113
        %3115 = vrot.lane.b32.xlu0 %v3007, 16
        %v3116 = vpop.permute.xlu0 %3115
        %3117 = vrot.lane.b32.xlu0 %v3013, 16
        %v3118 = vpop.permute.xlu0 %3117
        %3119 = vrot.lane.b32.xlu0 %v3019, 16
        %v3120 = vpop.permute.xlu0 %3119
        %3121 = vrot.lane.b32.xlu0 %v3025, 16
        %v3122 = vpop.permute.xlu0 %3121
        %v3123 = vsel %vm573, %v3108, %v3116
        %v3124 = vsel %vm573, %v3110, %v3118
        %v3125 = vsel %vm573, %v3112, %v3120
        %v3126 = vsel %vm573, %v3114, %v3122
        %v3127 = vsel %vm573, %v3116, %v3108
        %v3128 = vsel %vm573, %v3118, %v3110
        %v3129 = vsel %vm573, %v3120, %v3112
        %v3130 = vsel %vm573, %v3122, %v3114
        %v3131 = vsel %vm592, %v3127, 0.0
        %v3132 = vsel %vm593, %v3123, 0.0
        %v3133 = vsel %vm592, %v3128, 0.0
        %v3134 = vsel %vm593, %v3124, 0.0
        %v3135 = vsel %vm592, %v3129, 0.0
        %v3136 = vsel %vm593, %v3125, 0.0
        %v3137 = vsel %vm592, %v3130, 0.0
        %v3138 = vsel %vm593, %v3126, 0.0
        %3139 = vset.pattern.permute.xlu0 24
        %3140 = vperm.xlu0 %3139, %v206
        %v3141 = vpop.permute.xlu0 %3140
        %3143 = vset.pattern.permute.xlu0 24
        %3144 = vperm.xlu0 %3143, %v207
        %v3145 = vpop.permute.xlu0 %3144
        %3147 = vset.pattern.permute.xlu0 24
        %3148 = vperm.xlu0 %3147, %v208
        %v3149 = vpop.permute.xlu0 %3148
        %3151 = vset.pattern.permute.xlu0 24
        %3152 = vperm.xlu0 %3151, %v209
        %v3153 = vpop.permute.xlu0 %3152
        %3155 = vset.pattern.permute.xlu0 24
        %3156 = vperm.xlu0 %3155, %v210
        %v3157 = vpop.permute.xlu0 %3156
        %3159 = vset.pattern.permute.xlu0 24
        %3160 = vperm.xlu0 %3159, %v211
        %v3161 = vpop.permute.xlu0 %3160
        %3163 = vset.pattern.permute.xlu0 24
        %3164 = vperm.xlu0 %3163, %v212
        %v3165 = vpop.permute.xlu0 %3164
        %3167 = vset.pattern.permute.xlu0 24
        %3168 = vperm.xlu0 %3167, %v213
        %v3169 = vpop.permute.xlu0 %3168
        %v3171 = vmul.f32 %v3131, %v3141
        %v3172 = vmul.f32 %v3132, %v3141
        %v3173 = vmul.f32 %v3133, %v3145
        %v3174 = vmul.f32 %v3134, %v3145
        %v3175 = vmul.f32 %v3135, %v3149
        %v3176 = vmul.f32 %v3136, %v3149
        %v3177 = vmul.f32 %v3137, %v3153
        %v3178 = vmul.f32 %v3138, %v3153
        %v3179 = vmul.f32 %v1914, %v3157
        %v3180 = vmul.f32 %v1915, %v3157
        %v3181 = vmul.f32 %v1916, %v3161
        %v3182 = vmul.f32 %v1917, %v3161
        %v3183 = vmul.f32 %v1918, %v3165
        %v3184 = vmul.f32 %v1919, %v3165
        %v3185 = vmul.f32 %v1920, %v3169
        %v3186 = vmul.f32 %v1921, %v3169
        %v3187 = vadd.f32 %v3091, %v3171
        %v3188 = vadd.f32 %v3092, %v3172
        %v3189 = vadd.f32 %v3093, %v3173
        %v3190 = vadd.f32 %v3094, %v3174
        %v3191 = vadd.f32 %v3095, %v3175
        %v3192 = vadd.f32 %v3096, %v3176
        %v3193 = vadd.f32 %v3097, %v3177
        %v3194 = vadd.f32 %v3098, %v3178
        %v3195 = vadd.f32 %v3099, %v3179
        %v3196 = vadd.f32 %v3100, %v3180
        %v3197 = vadd.f32 %v3101, %v3181
        %v3198 = vadd.f32 %v3102, %v3182
        %v3199 = vadd.f32 %v3103, %v3183
        %v3200 = vadd.f32 %v3104, %v3184
        %v3201 = vadd.f32 %v3105, %v3185
        %v3202 = vadd.f32 %v3106, %v3186
        %3203 = vrot.lane.b32.xlu0 %v3005, 15
        %v3204 = vpop.permute.xlu0 %3203
        %3205 = vrot.lane.b32.xlu0 %v3011, 15
        %v3206 = vpop.permute.xlu0 %3205
        %3207 = vrot.lane.b32.xlu0 %v3017, 15
        %v3208 = vpop.permute.xlu0 %3207
        %3209 = vrot.lane.b32.xlu0 %v3023, 15
        %v3210 = vpop.permute.xlu0 %3209
        %3211 = vrot.lane.b32.xlu0 %v3007, 15
        %v3212 = vpop.permute.xlu0 %3211
        %3213 = vrot.lane.b32.xlu0 %v3013, 15
        %v3214 = vpop.permute.xlu0 %3213
        %3215 = vrot.lane.b32.xlu0 %v3019, 15
        %v3216 = vpop.permute.xlu0 %3215
        %3217 = vrot.lane.b32.xlu0 %v3025, 15
        %v3218 = vpop.permute.xlu0 %3217
        %v3219 = vsel %vm706, %v3204, %v3212
        %v3220 = vsel %vm706, %v3206, %v3214
        %v3221 = vsel %vm706, %v3208, %v3216
        %v3222 = vsel %vm706, %v3210, %v3218
        %v3223 = vsel %vm706, %v3212, %v3204
        %v3224 = vsel %vm706, %v3214, %v3206
        %v3225 = vsel %vm706, %v3216, %v3208
        %v3226 = vsel %vm706, %v3218, %v3210
        %v3227 = vsel %vm725, %v3223, 0.0
        %v3228 = vsel %vm726, %v3219, 0.0
        %v3229 = vsel %vm725, %v3224, 0.0
        %v3230 = vsel %vm726, %v3220, 0.0
        %v3231 = vsel %vm725, %v3225, 0.0
        %v3232 = vsel %vm726, %v3221, 0.0
        %v3233 = vsel %vm725, %v3226, 0.0
        %v3234 = vsel %vm726, %v3222, 0.0
        %3235 = vset.pattern.permute.xlu0 25
        %3236 = vperm.xlu0 %3235, %v206
        %v3237 = vpop.permute.xlu0 %3236
        %3239 = vset.pattern.permute.xlu0 25
        %3240 = vperm.xlu0 %3239, %v207
        %v3241 = vpop.permute.xlu0 %3240
        %3243 = vset.pattern.permute.xlu0 25
        %3244 = vperm.xlu0 %3243, %v208
        %v3245 = vpop.permute.xlu0 %3244
        %3247 = vset.pattern.permute.xlu0 25
        %3248 = vperm.xlu0 %3247, %v209
        %v3249 = vpop.permute.xlu0 %3248
        %3251 = vset.pattern.permute.xlu0 25
        %3252 = vperm.xlu0 %3251, %v210
        %v3253 = vpop.permute.xlu0 %3252
        %3255 = vset.pattern.permute.xlu0 25
        %3256 = vperm.xlu0 %3255, %v211
        %v3257 = vpop.permute.xlu0 %3256
        %3259 = vset.pattern.permute.xlu0 25
        %3260 = vperm.xlu0 %3259, %v212
        %v3261 = vpop.permute.xlu0 %3260
        %3263 = vset.pattern.permute.xlu0 25
        %3264 = vperm.xlu0 %3263, %v213
        %v3265 = vpop.permute.xlu0 %3264
        %v3267 = vmul.f32 %v3227, %v3237
        %v3268 = vmul.f32 %v3228, %v3237
        %v3269 = vmul.f32 %v3229, %v3241
        %v3270 = vmul.f32 %v3230, %v3241
        %v3271 = vmul.f32 %v3231, %v3245
        %v3272 = vmul.f32 %v3232, %v3245
        %v3273 = vmul.f32 %v3233, %v3249
        %v3274 = vmul.f32 %v3234, %v3249
        %v3275 = vmul.f32 %v2042, %v3253
        %v3276 = vmul.f32 %v2043, %v3253
        %v3277 = vmul.f32 %v2044, %v3257
        %v3278 = vmul.f32 %v2045, %v3257
        %v3279 = vmul.f32 %v2046, %v3261
        %v3280 = vmul.f32 %v2047, %v3261
        %v3281 = vmul.f32 %v2048, %v3265
        %v3282 = vmul.f32 %v2049, %v3265
        %v3283 = vadd.f32 %v3187, %v3267
        %v3284 = vadd.f32 %v3188, %v3268
        %v3285 = vadd.f32 %v3189, %v3269
        %v3286 = vadd.f32 %v3190, %v3270
        %v3287 = vadd.f32 %v3191, %v3271
        %v3288 = vadd.f32 %v3192, %v3272
        %v3289 = vadd.f32 %v3193, %v3273
        %v3290 = vadd.f32 %v3194, %v3274
        %v3291 = vadd.f32 %v3195, %v3275
        %v3292 = vadd.f32 %v3196, %v3276
        %v3293 = vadd.f32 %v3197, %v3277
        %v3294 = vadd.f32 %v3198, %v3278
        %v3295 = vadd.f32 %v3199, %v3279
        %v3296 = vadd.f32 %v3200, %v3280
        %v3297 = vadd.f32 %v3201, %v3281
        %v3298 = vadd.f32 %v3202, %v3282
        %3299 = vrot.lane.b32.xlu0 %v3005, 1
        %v3300 = vpop.permute.xlu0 %3299
        %3301 = vrot.lane.b32.xlu0 %v3011, 1
        %v3302 = vpop.permute.xlu0 %3301
        %3303 = vrot.lane.b32.xlu0 %v3017, 1
        %v3304 = vpop.permute.xlu0 %3303
        %3305 = vrot.lane.b32.xlu0 %v3023, 1
        %v3306 = vpop.permute.xlu0 %3305
        %3307 = vrot.lane.b32.xlu0 %v3007, 1
        %v3308 = vpop.permute.xlu0 %3307
        %3309 = vrot.lane.b32.xlu0 %v3013, 1
        %v3310 = vpop.permute.xlu0 %3309
        %3311 = vrot.lane.b32.xlu0 %v3019, 1
        %v3312 = vpop.permute.xlu0 %3311
        %3313 = vrot.lane.b32.xlu0 %v3025, 1
        %v3314 = vpop.permute.xlu0 %3313
        %v3315 = vsel %vm839, %v3300, %v3308
        %v3316 = vsel %vm839, %v3302, %v3310
        %v3317 = vsel %vm839, %v3304, %v3312
        %v3318 = vsel %vm839, %v3306, %v3314
        %v3319 = vsel %vm839, %v3308, %v3300
        %v3320 = vsel %vm839, %v3310, %v3302
        %v3321 = vsel %vm839, %v3312, %v3304
        %v3322 = vsel %vm839, %v3314, %v3306
        %v3323 = vsel %vm858, %v3319, 0.0
        %v3324 = vsel %vm859, %v3315, 0.0
        %v3325 = vsel %vm858, %v3320, 0.0
        %v3326 = vsel %vm859, %v3316, 0.0
        %v3327 = vsel %vm858, %v3321, 0.0
        %v3328 = vsel %vm859, %v3317, 0.0
        %v3329 = vsel %vm858, %v3322, 0.0
        %v3330 = vsel %vm859, %v3318, 0.0
        %3331 = vset.pattern.permute.xlu0 26
        %3332 = vperm.xlu0 %3331, %v206
        %v3333 = vpop.permute.xlu0 %3332
        %3335 = vset.pattern.permute.xlu0 26
        %3336 = vperm.xlu0 %3335, %v207
        %v3337 = vpop.permute.xlu0 %3336
        %3339 = vset.pattern.permute.xlu0 26
        %3340 = vperm.xlu0 %3339, %v208
        %v3341 = vpop.permute.xlu0 %3340
        %3343 = vset.pattern.permute.xlu0 26
        %3344 = vperm.xlu0 %3343, %v209
        %v3345 = vpop.permute.xlu0 %3344
        %3347 = vset.pattern.permute.xlu0 26
        %3348 = vperm.xlu0 %3347, %v210
        %v3349 = vpop.permute.xlu0 %3348
        %3351 = vset.pattern.permute.xlu0 26
        %3352 = vperm.xlu0 %3351, %v211
        %v3353 = vpop.permute.xlu0 %3352
        %3355 = vset.pattern.permute.xlu0 26
        %3356 = vperm.xlu0 %3355, %v212
        %v3357 = vpop.permute.xlu0 %3356
        %3359 = vset.pattern.permute.xlu0 26
        %3360 = vperm.xlu0 %3359, %v213
        %v3361 = vpop.permute.xlu0 %3360
        %v3363 = vmul.f32 %v3323, %v3333
        %v3364 = vmul.f32 %v3324, %v3333
        %v3365 = vmul.f32 %v3325, %v3337
        %v3366 = vmul.f32 %v3326, %v3337
        %v3367 = vmul.f32 %v3327, %v3341
        %v3368 = vmul.f32 %v3328, %v3341
        %v3369 = vmul.f32 %v3329, %v3345
        %v3370 = vmul.f32 %v3330, %v3345
        %v3371 = vmul.f32 %v2170, %v3349
        %v3372 = vmul.f32 %v2171, %v3349
        %v3373 = vmul.f32 %v2172, %v3353
        %v3374 = vmul.f32 %v2173, %v3353
        %v3375 = vmul.f32 %v2174, %v3357
        %v3376 = vmul.f32 %v2175, %v3357
        %v3377 = vmul.f32 %v2176, %v3361
        %v3378 = vmul.f32 %v2177, %v3361
        %v3379 = vadd.f32 %v3283, %v3363
        %v3380 = vadd.f32 %v3284, %v3364
        %v3381 = vadd.f32 %v3285, %v3365
        %v3382 = vadd.f32 %v3286, %v3366
        %v3383 = vadd.f32 %v3287, %v3367
        %v3384 = vadd.f32 %v3288, %v3368
        %v3385 = vadd.f32 %v3289, %v3369
        %v3386 = vadd.f32 %v3290, %v3370
        %v3387 = vadd.f32 %v3291, %v3371
        %v3388 = vadd.f32 %v3292, %v3372
        %v3389 = vadd.f32 %v3293, %v3373
        %v3390 = vadd.f32 %v3294, %v3374
        %v3391 = vadd.f32 %v3295, %v3375
        %v3392 = vadd.f32 %v3296, %v3376
        %v3393 = vadd.f32 %v3297, %v3377
        %v3394 = vadd.f32 %v3298, %v3378
        %3395 = vset.pattern.permute.xlu0 27
        %3396 = vperm.xlu0 %3395, %v206
        %v3397 = vpop.permute.xlu0 %3396
        %3399 = vset.pattern.permute.xlu0 27
        %3400 = vperm.xlu0 %3399, %v207
        %v3401 = vpop.permute.xlu0 %3400
        %3403 = vset.pattern.permute.xlu0 27
        %3404 = vperm.xlu0 %3403, %v208
        %v3405 = vpop.permute.xlu0 %3404
        %3407 = vset.pattern.permute.xlu0 27
        %3408 = vperm.xlu0 %3407, %v209
        %v3409 = vpop.permute.xlu0 %3408
        %3411 = vset.pattern.permute.xlu0 27
        %3412 = vperm.xlu0 %3411, %v210
        %v3413 = vpop.permute.xlu0 %3412
        %3415 = vset.pattern.permute.xlu0 27
        %3416 = vperm.xlu0 %3415, %v211
        %v3417 = vpop.permute.xlu0 %3416
        %3419 = vset.pattern.permute.xlu0 27
        %3420 = vperm.xlu0 %3419, %v212
        %v3421 = vpop.permute.xlu0 %3420
        %3423 = vset.pattern.permute.xlu0 27
        %3424 = vperm.xlu0 %3423, %v213
        %v3425 = vpop.permute.xlu0 %3424
        %v3427 = vmul.f32 %v3005, %v3397
        %v3428 = vmul.f32 %v3007, %v3397
        %v3429 = vmul.f32 %v3011, %v3401
        %v3430 = vmul.f32 %v3013, %v3401
        %v3431 = vmul.f32 %v3017, %v3405
        %v3432 = vmul.f32 %v3019, %v3405
        %v3433 = vmul.f32 %v3023, %v3409
        %v3434 = vmul.f32 %v3025, %v3409
        %v3435 = vmul.f32 %v190, %v3413
        %v3436 = vmul.f32 %v191, %v3413
        %v3437 = vmul.f32 %v192, %v3417
        %v3438 = vmul.f32 %v193, %v3417
        %v3439 = vmul.f32 %v194, %v3421
        %v3440 = vmul.f32 %v195, %v3421
        %v3441 = vmul.f32 %v196, %v3425
        %v3442 = vmul.f32 %v197, %v3425
        %v3443 = vadd.f32 %v3379, %v3427
        %v3444 = vadd.f32 %v3380, %v3428
        %v3445 = vadd.f32 %v3381, %v3429
        %v3446 = vadd.f32 %v3382, %v3430
        %v3447 = vadd.f32 %v3383, %v3431
        %v3448 = vadd.f32 %v3384, %v3432
        %v3449 = vadd.f32 %v3385, %v3433
        %v3450 = vadd.f32 %v3386, %v3434
        %v3451 = vadd.f32 %v3387, %v3435
        %v3452 = vadd.f32 %v3388, %v3436
        %v3453 = vadd.f32 %v3389, %v3437
        %v3454 = vadd.f32 %v3390, %v3438
        %v3455 = vadd.f32 %v3391, %v3439
        %v3456 = vadd.f32 %v3392, %v3440
        %v3457 = vadd.f32 %v3393, %v3441
        %v3458 = vadd.f32 %v3394, %v3442
        %3459 = vrot.lane.b32.xlu0 %v3005, 127
        %v3460 = vpop.permute.xlu0 %3459
        %3461 = vrot.lane.b32.xlu0 %v3011, 127
        %v3462 = vpop.permute.xlu0 %3461
        %3463 = vrot.lane.b32.xlu0 %v3017, 127
        %v3464 = vpop.permute.xlu0 %3463
        %3465 = vrot.lane.b32.xlu0 %v3023, 127
        %v3466 = vpop.permute.xlu0 %3465
        %3467 = vrot.lane.b32.xlu0 %v3007, 127
        %v3468 = vpop.permute.xlu0 %3467
        %3469 = vrot.lane.b32.xlu0 %v3013, 127
        %v3470 = vpop.permute.xlu0 %3469
        %3471 = vrot.lane.b32.xlu0 %v3019, 127
        %v3472 = vpop.permute.xlu0 %3471
        %3473 = vrot.lane.b32.xlu0 %v3025, 127
        %v3474 = vpop.permute.xlu0 %3473
        %v3475 = vsel %vm1036, %v3460, %v3468
        %v3476 = vsel %vm1036, %v3462, %v3470
        %v3477 = vsel %vm1036, %v3464, %v3472
        %v3478 = vsel %vm1036, %v3466, %v3474
        %v3479 = vsel %vm1036, %v3468, %v3460
        %v3480 = vsel %vm1036, %v3470, %v3462
        %v3481 = vsel %vm1036, %v3472, %v3464
        %v3482 = vsel %vm1036, %v3474, %v3466
        %v3483 = vsel %vm1055, %v3475, 0.0
        %v3484 = vsel %vm1056, %v3479, 0.0
        %v3485 = vsel %vm1055, %v3476, 0.0
        %v3486 = vsel %vm1056, %v3480, 0.0
        %v3487 = vsel %vm1055, %v3477, 0.0
        %v3488 = vsel %vm1056, %v3481, 0.0
        %v3489 = vsel %vm1055, %v3478, 0.0
        %v3490 = vsel %vm1056, %v3482, 0.0
        %3491 = vset.pattern.permute.xlu0 28
        %3492 = vperm.xlu0 %3491, %v206
        %v3493 = vpop.permute.xlu0 %3492
        %3495 = vset.pattern.permute.xlu0 28
        %3496 = vperm.xlu0 %3495, %v207
        %v3497 = vpop.permute.xlu0 %3496
        %3499 = vset.pattern.permute.xlu0 28
        %3500 = vperm.xlu0 %3499, %v208
        %v3501 = vpop.permute.xlu0 %3500
        %3503 = vset.pattern.permute.xlu0 28
        %3504 = vperm.xlu0 %3503, %v209
        %v3505 = vpop.permute.xlu0 %3504
        %3507 = vset.pattern.permute.xlu0 28
        %3508 = vperm.xlu0 %3507, %v210
        %v3509 = vpop.permute.xlu0 %3508
        %3511 = vset.pattern.permute.xlu0 28
        %3512 = vperm.xlu0 %3511, %v211
        %v3513 = vpop.permute.xlu0 %3512
        %3515 = vset.pattern.permute.xlu0 28
        %3516 = vperm.xlu0 %3515, %v212
        %v3517 = vpop.permute.xlu0 %3516
        %3519 = vset.pattern.permute.xlu0 28
        %3520 = vperm.xlu0 %3519, %v213
        %v3521 = vpop.permute.xlu0 %3520
        %v3523 = vmul.f32 %v3483, %v3493
        %v3524 = vmul.f32 %v3484, %v3493
        %v3525 = vmul.f32 %v3485, %v3497
        %v3526 = vmul.f32 %v3486, %v3497
        %v3527 = vmul.f32 %v3487, %v3501
        %v3528 = vmul.f32 %v3488, %v3501
        %v3529 = vmul.f32 %v3489, %v3505
        %v3530 = vmul.f32 %v3490, %v3505
        %v3531 = vmul.f32 %v2362, %v3509
        %v3532 = vmul.f32 %v2363, %v3509
        %v3533 = vmul.f32 %v2364, %v3513
        %v3534 = vmul.f32 %v2365, %v3513
        %v3535 = vmul.f32 %v2366, %v3517
        %v3536 = vmul.f32 %v2367, %v3517
        %v3537 = vmul.f32 %v2368, %v3521
        %v3538 = vmul.f32 %v2369, %v3521
        %v3539 = vadd.f32 %v3443, %v3523
        %v3540 = vadd.f32 %v3444, %v3524
        %v3541 = vadd.f32 %v3445, %v3525
        %v3542 = vadd.f32 %v3446, %v3526
        %v3543 = vadd.f32 %v3447, %v3527
        %v3544 = vadd.f32 %v3448, %v3528
        %v3545 = vadd.f32 %v3449, %v3529
        %v3546 = vadd.f32 %v3450, %v3530
        %v3547 = vadd.f32 %v3451, %v3531
        %v3548 = vadd.f32 %v3452, %v3532
        %v3549 = vadd.f32 %v3453, %v3533
        %v3550 = vadd.f32 %v3454, %v3534
        %v3551 = vadd.f32 %v3455, %v3535
        %v3552 = vadd.f32 %v3456, %v3536
        %v3553 = vadd.f32 %v3457, %v3537
        %v3554 = vadd.f32 %v3458, %v3538
        %3555 = vrot.lane.b32.xlu0 %v3005, 113
        %v3556 = vpop.permute.xlu0 %3555
        %3557 = vrot.lane.b32.xlu0 %v3011, 113
        %v3558 = vpop.permute.xlu0 %3557
        %3559 = vrot.lane.b32.xlu0 %v3017, 113
        %v3560 = vpop.permute.xlu0 %3559
        %3561 = vrot.lane.b32.xlu0 %v3023, 113
        %v3562 = vpop.permute.xlu0 %3561
        %3563 = vrot.lane.b32.xlu0 %v3007, 113
        %v3564 = vpop.permute.xlu0 %3563
        %3565 = vrot.lane.b32.xlu0 %v3013, 113
        %v3566 = vpop.permute.xlu0 %3565
        %3567 = vrot.lane.b32.xlu0 %v3019, 113
        %v3568 = vpop.permute.xlu0 %3567
        %3569 = vrot.lane.b32.xlu0 %v3025, 113
        %v3570 = vpop.permute.xlu0 %3569
        %v3571 = vsel %vm1169, %v3556, %v3564
        %v3572 = vsel %vm1169, %v3558, %v3566
        %v3573 = vsel %vm1169, %v3560, %v3568
        %v3574 = vsel %vm1169, %v3562, %v3570
        %v3575 = vsel %vm1169, %v3564, %v3556
        %v3576 = vsel %vm1169, %v3566, %v3558
        %v3577 = vsel %vm1169, %v3568, %v3560
        %v3578 = vsel %vm1169, %v3570, %v3562
        %v3579 = vsel %vm1188, %v3571, 0.0
        %v3580 = vsel %vm1189, %v3575, 0.0
        %v3581 = vsel %vm1188, %v3572, 0.0
        %v3582 = vsel %vm1189, %v3576, 0.0
        %v3583 = vsel %vm1188, %v3573, 0.0
        %v3584 = vsel %vm1189, %v3577, 0.0
        %v3585 = vsel %vm1188, %v3574, 0.0
        %v3586 = vsel %vm1189, %v3578, 0.0
        %3587 = vset.pattern.permute.xlu0 29
        %3588 = vperm.xlu0 %3587, %v206
        %v3589 = vpop.permute.xlu0 %3588
        %3591 = vset.pattern.permute.xlu0 29
        %3592 = vperm.xlu0 %3591, %v207
        %v3593 = vpop.permute.xlu0 %3592
        %3595 = vset.pattern.permute.xlu0 29
        %3596 = vperm.xlu0 %3595, %v208
        %v3597 = vpop.permute.xlu0 %3596
        %3599 = vset.pattern.permute.xlu0 29
        %3600 = vperm.xlu0 %3599, %v209
        %v3601 = vpop.permute.xlu0 %3600
        %3603 = vset.pattern.permute.xlu0 29
        %3604 = vperm.xlu0 %3603, %v210
        %v3605 = vpop.permute.xlu0 %3604
        %3607 = vset.pattern.permute.xlu0 29
        %3608 = vperm.xlu0 %3607, %v211
        %v3609 = vpop.permute.xlu0 %3608
        %3611 = vset.pattern.permute.xlu0 29
        %3612 = vperm.xlu0 %3611, %v212
        %v3613 = vpop.permute.xlu0 %3612
        %3615 = vset.pattern.permute.xlu0 29
        %3616 = vperm.xlu0 %3615, %v213
        %v3617 = vpop.permute.xlu0 %3616
        %v3619 = vmul.f32 %v3579, %v3589
        %v3620 = vmul.f32 %v3580, %v3589
        %v3621 = vmul.f32 %v3581, %v3593
        %v3622 = vmul.f32 %v3582, %v3593
        %v3623 = vmul.f32 %v3583, %v3597
        %v3624 = vmul.f32 %v3584, %v3597
        %v3625 = vmul.f32 %v3585, %v3601
        %v3626 = vmul.f32 %v3586, %v3601
        %v3627 = vmul.f32 %v2490, %v3605
        %v3628 = vmul.f32 %v2491, %v3605
        %v3629 = vmul.f32 %v2492, %v3609
        %v3630 = vmul.f32 %v2493, %v3609
        %v3631 = vmul.f32 %v2494, %v3613
        %v3632 = vmul.f32 %v2495, %v3613
        %v3633 = vmul.f32 %v2496, %v3617
        %v3634 = vmul.f32 %v2497, %v3617
        %v3635 = vadd.f32 %v3539, %v3619
        %v3636 = vadd.f32 %v3540, %v3620
        %v3637 = vadd.f32 %v3541, %v3621
        %v3638 = vadd.f32 %v3542, %v3622
        %v3639 = vadd.f32 %v3543, %v3623
        %v3640 = vadd.f32 %v3544, %v3624
        %v3641 = vadd.f32 %v3545, %v3625
        %v3642 = vadd.f32 %v3546, %v3626
        %v3643 = vadd.f32 %v3547, %v3627
        %v3644 = vadd.f32 %v3548, %v3628
        %v3645 = vadd.f32 %v3549, %v3629
        %v3646 = vadd.f32 %v3550, %v3630
        %v3647 = vadd.f32 %v3551, %v3631
        %v3648 = vadd.f32 %v3552, %v3632
        %v3649 = vadd.f32 %v3553, %v3633
        %v3650 = vadd.f32 %v3554, %v3634
        %3651 = vrot.lane.b32.xlu0 %v3005, 112
        %v3652 = vpop.permute.xlu0 %3651
        %3653 = vrot.lane.b32.xlu0 %v3011, 112
        %v3654 = vpop.permute.xlu0 %3653
        %3655 = vrot.lane.b32.xlu0 %v3017, 112
        %v3656 = vpop.permute.xlu0 %3655
        %3657 = vrot.lane.b32.xlu0 %v3023, 112
        %v3658 = vpop.permute.xlu0 %3657
        %3659 = vrot.lane.b32.xlu0 %v3007, 112
        %v3660 = vpop.permute.xlu0 %3659
        %3661 = vrot.lane.b32.xlu0 %v3013, 112
        %v3662 = vpop.permute.xlu0 %3661
        %3663 = vrot.lane.b32.xlu0 %v3019, 112
        %v3664 = vpop.permute.xlu0 %3663
        %3665 = vrot.lane.b32.xlu0 %v3025, 112
        %v3666 = vpop.permute.xlu0 %3665
        %v3667 = vsel %vm1302, %v3652, %v3660
        %v3668 = vsel %vm1302, %v3654, %v3662
        %v3669 = vsel %vm1302, %v3656, %v3664
        %v3670 = vsel %vm1302, %v3658, %v3666
        %v3671 = vsel %vm1302, %v3660, %v3652
        %v3672 = vsel %vm1302, %v3662, %v3654
        %v3673 = vsel %vm1302, %v3664, %v3656
        %v3674 = vsel %vm1302, %v3666, %v3658
        %v3675 = vsel %vm1321, %v3667, 0.0
        %v3676 = vsel %vm1322, %v3671, 0.0
        %v3677 = vsel %vm1321, %v3668, 0.0
        %v3678 = vsel %vm1322, %v3672, 0.0
        %v3679 = vsel %vm1321, %v3669, 0.0
        %v3680 = vsel %vm1322, %v3673, 0.0
        %v3681 = vsel %vm1321, %v3670, 0.0
        %v3682 = vsel %vm1322, %v3674, 0.0
        %3683 = vset.pattern.permute.xlu0 30
        %3684 = vperm.xlu0 %3683, %v206
        %v3685 = vpop.permute.xlu0 %3684
        %3687 = vset.pattern.permute.xlu0 30
        %3688 = vperm.xlu0 %3687, %v207
        %v3689 = vpop.permute.xlu0 %3688
        %3691 = vset.pattern.permute.xlu0 30
        %3692 = vperm.xlu0 %3691, %v208
        %v3693 = vpop.permute.xlu0 %3692
        %3695 = vset.pattern.permute.xlu0 30
        %3696 = vperm.xlu0 %3695, %v209
        %v3697 = vpop.permute.xlu0 %3696
        %3699 = vset.pattern.permute.xlu0 30
        %3700 = vperm.xlu0 %3699, %v210
        %v3701 = vpop.permute.xlu0 %3700
        %3703 = vset.pattern.permute.xlu0 30
        %3704 = vperm.xlu0 %3703, %v211
        %v3705 = vpop.permute.xlu0 %3704
        %3707 = vset.pattern.permute.xlu0 30
        %3708 = vperm.xlu0 %3707, %v212
        %v3709 = vpop.permute.xlu0 %3708
        %3711 = vset.pattern.permute.xlu0 30
        %3712 = vperm.xlu0 %3711, %v213
        %v3713 = vpop.permute.xlu0 %3712
        %v3715 = vmul.f32 %v3675, %v3685
        %v3716 = vmul.f32 %v3676, %v3685
        %v3717 = vmul.f32 %v3677, %v3689
        %v3718 = vmul.f32 %v3678, %v3689
        %v3719 = vmul.f32 %v3679, %v3693
        %v3720 = vmul.f32 %v3680, %v3693
        %v3721 = vmul.f32 %v3681, %v3697
        %v3722 = vmul.f32 %v3682, %v3697
        %v3723 = vmul.f32 %v2618, %v3701
        %v3724 = vmul.f32 %v2619, %v3701
        %v3725 = vmul.f32 %v2620, %v3705
        %v3726 = vmul.f32 %v2621, %v3705
        %v3727 = vmul.f32 %v2622, %v3709
        %v3728 = vmul.f32 %v2623, %v3709
        %v3729 = vmul.f32 %v2624, %v3713
        %v3730 = vmul.f32 %v2625, %v3713
        %v3731 = vadd.f32 %v3635, %v3715
        %v3732 = vadd.f32 %v3636, %v3716
        %v3733 = vadd.f32 %v3637, %v3717
        %v3734 = vadd.f32 %v3638, %v3718
        %v3735 = vadd.f32 %v3639, %v3719
        %v3736 = vadd.f32 %v3640, %v3720
        %v3737 = vadd.f32 %v3641, %v3721
        %v3738 = vadd.f32 %v3642, %v3722
        %v3739 = vadd.f32 %v3643, %v3723
        %v3740 = vadd.f32 %v3644, %v3724
        %v3741 = vadd.f32 %v3645, %v3725
        %v3742 = vadd.f32 %v3646, %v3726
        %v3743 = vadd.f32 %v3647, %v3727
        %v3744 = vadd.f32 %v3648, %v3728
        %v3745 = vadd.f32 %v3649, %v3729
        %v3746 = vadd.f32 %v3650, %v3730
        %3747 = vrot.lane.b32.xlu0 %v3005, 111
        %v3748 = vpop.permute.xlu0 %3747
        %3749 = vrot.lane.b32.xlu0 %v3011, 111
        %v3750 = vpop.permute.xlu0 %3749
        %3751 = vrot.lane.b32.xlu0 %v3017, 111
        %v3752 = vpop.permute.xlu0 %3751
        %3753 = vrot.lane.b32.xlu0 %v3023, 111
        %v3754 = vpop.permute.xlu0 %3753
        %3755 = vrot.lane.b32.xlu0 %v3007, 111
        %v3756 = vpop.permute.xlu0 %3755
        %3757 = vrot.lane.b32.xlu0 %v3013, 111
        %v3758 = vpop.permute.xlu0 %3757
        %3759 = vrot.lane.b32.xlu0 %v3019, 111
        %v3760 = vpop.permute.xlu0 %3759
        %3761 = vrot.lane.b32.xlu0 %v3025, 111
        %v3762 = vpop.permute.xlu0 %3761
        %v3763 = vsel %vm1435, %v3748, %v3756
        %v3764 = vsel %vm1435, %v3750, %v3758
        %v3765 = vsel %vm1435, %v3752, %v3760
        %v3766 = vsel %vm1435, %v3754, %v3762
        %v3767 = vsel %vm1435, %v3756, %v3748
        %v3768 = vsel %vm1435, %v3758, %v3750
        %v3769 = vsel %vm1435, %v3760, %v3752
        %v3770 = vsel %vm1435, %v3762, %v3754
        %v3771 = vsel %vm1454, %v3763, 0.0
        %v3772 = vsel %vm1455, %v3767, 0.0
        %v3773 = vsel %vm1454, %v3764, 0.0
        %v3774 = vsel %vm1455, %v3768, 0.0
        %v3775 = vsel %vm1454, %v3765, 0.0
        %v3776 = vsel %vm1455, %v3769, 0.0
        %v3777 = vsel %vm1454, %v3766, 0.0
        %v3778 = vsel %vm1455, %v3770, 0.0
        %3779 = vset.pattern.permute.xlu0 31
        %3780 = vperm.xlu0 %3779, %v206
        %v3781 = vpop.permute.xlu0 %3780
        %3783 = vset.pattern.permute.xlu0 31
        %3784 = vperm.xlu0 %3783, %v207
        %v3785 = vpop.permute.xlu0 %3784
        %3787 = vset.pattern.permute.xlu0 31
        %3788 = vperm.xlu0 %3787, %v208
        %v3789 = vpop.permute.xlu0 %3788
        %3791 = vset.pattern.permute.xlu0 31
        %3792 = vperm.xlu0 %3791, %v209
        %v3793 = vpop.permute.xlu0 %3792
        %3795 = vset.pattern.permute.xlu0 31
        %3796 = vperm.xlu0 %3795, %v210
        %v3797 = vpop.permute.xlu0 %3796
        %3799 = vset.pattern.permute.xlu0 31
        %3800 = vperm.xlu0 %3799, %v211
        %v3801 = vpop.permute.xlu0 %3800
        %3803 = vset.pattern.permute.xlu0 31
        %3804 = vperm.xlu0 %3803, %v212
        %v3805 = vpop.permute.xlu0 %3804
        %3807 = vset.pattern.permute.xlu0 31
        %3808 = vperm.xlu0 %3807, %v213
        %v3809 = vpop.permute.xlu0 %3808
        %v3811 = vmul.f32 %v3771, %v3781
        %v3812 = vmul.f32 %v3772, %v3781
        %v3813 = vmul.f32 %v3773, %v3785
        %v3814 = vmul.f32 %v3774, %v3785
        %v3815 = vmul.f32 %v3775, %v3789
        %v3816 = vmul.f32 %v3776, %v3789
        %v3817 = vmul.f32 %v3777, %v3793
        %v3818 = vmul.f32 %v3778, %v3793
        %v3819 = vmul.f32 %v2746, %v3797
        %v3820 = vmul.f32 %v2747, %v3797
        %v3821 = vmul.f32 %v2748, %v3801
        %v3822 = vmul.f32 %v2749, %v3801
        %v3823 = vmul.f32 %v2750, %v3805
        %v3824 = vmul.f32 %v2751, %v3805
        %v3825 = vmul.f32 %v2752, %v3809
        %v3826 = vmul.f32 %v2753, %v3809
        %v3827 = vadd.f32 %v3731, %v3811
        %v3828 = vadd.f32 %v3732, %v3812
        %v3829 = vadd.f32 %v3733, %v3813
        %v3830 = vadd.f32 %v3734, %v3814
        %v3831 = vadd.f32 %v3735, %v3815
        %v3832 = vadd.f32 %v3736, %v3816
        %v3833 = vadd.f32 %v3737, %v3817
        %v3834 = vadd.f32 %v3738, %v3818
        %v3835 = vadd.f32 %v3739, %v3819
        %v3836 = vadd.f32 %v3740, %v3820
        %v3837 = vadd.f32 %v3741, %v3821
        %v3838 = vadd.f32 %v3742, %v3822
        %v3839 = vadd.f32 %v3743, %v3823
        %v3840 = vadd.f32 %v3744, %v3824
        %v3841 = vadd.f32 %v3745, %v3825
        %v3842 = vadd.f32 %v3746, %v3826
        %3843 = vset.pattern.permute.xlu0 32
        %3844 = vperm.xlu0 %3843, %v206
        %v3845 = vpop.permute.xlu0 %3844
        %3847 = vset.pattern.permute.xlu0 32
        %3848 = vperm.xlu0 %3847, %v207
        %v3849 = vpop.permute.xlu0 %3848
        %3851 = vset.pattern.permute.xlu0 32
        %3852 = vperm.xlu0 %3851, %v208
        %v3853 = vpop.permute.xlu0 %3852
        %3855 = vset.pattern.permute.xlu0 32
        %3856 = vperm.xlu0 %3855, %v209
        %v3857 = vpop.permute.xlu0 %3856
        %3859 = vset.pattern.permute.xlu0 32
        %3860 = vperm.xlu0 %3859, %v210
        %v3861 = vpop.permute.xlu0 %3860
        %3863 = vset.pattern.permute.xlu0 32
        %3864 = vperm.xlu0 %3863, %v211
        %v3865 = vpop.permute.xlu0 %3864
        %3867 = vset.pattern.permute.xlu0 32
        %3868 = vperm.xlu0 %3867, %v212
        %v3869 = vpop.permute.xlu0 %3868
        %3871 = vset.pattern.permute.xlu0 32
        %3872 = vperm.xlu0 %3871, %v213
        %v3873 = vpop.permute.xlu0 %3872
        %v3875 = vadd.f32 %v3827, %v3845
        %v3876 = vadd.f32 %v3828, %v3845
        %v3877 = vadd.f32 %v3829, %v3849
        %v3878 = vadd.f32 %v3830, %v3849
        %v3879 = vadd.f32 %v3831, %v3853
        %v3880 = vadd.f32 %v3832, %v3853
        %v3881 = vadd.f32 %v3833, %v3857
        %v3882 = vadd.f32 %v3834, %v3857
        %v3883 = vadd.f32 %v3835, %v3861
        %v3884 = vadd.f32 %v3836, %v3861
        %v3885 = vadd.f32 %v3837, %v3865
        %v3886 = vadd.f32 %v3838, %v3865
        %v3887 = vadd.f32 %v3839, %v3869
        %v3888 = vadd.f32 %v3840, %v3869
        %v3889 = vadd.f32 %v3841, %v3873
        %v3890 = vadd.f32 %v3842, %v3873
        %v3891 = vmax.f32 %v3875, 0.0
        %v3892 = vmax.f32 %v3876, 0.0
        %v3893 = vmax.f32 %v3877, 0.0
        %v3894 = vmax.f32 %v3878, 0.0
        %v3895 = vmax.f32 %v3879, 0.0
        %v3896 = vmax.f32 %v3880, 0.0
        %v3897 = vmax.f32 %v3881, 0.0
        %v3898 = vmax.f32 %v3882, 0.0
        %v3899 = vmax.f32 %v3883, 0.0
        %v3900 = vmax.f32 %v3884, 0.0
        %v3901 = vmax.f32 %v3885, 0.0
        %v3902 = vmax.f32 %v3886, 0.0
        %v3903 = vmax.f32 %v3887, 0.0
        %v3904 = vmax.f32 %v3888, 0.0
        %v3905 = vmax.f32 %v3889, 0.0
        %v3906 = vmax.f32 %v3890, 0.0
        %v3907 = vmin.f32 %v3891, 6.0
        %v3908 = vmin.f32 %v3892, 6.0
        %v3909 = vmin.f32 %v3893, 6.0
        %v3910 = vmin.f32 %v3894, 6.0
        %v3911 = vmin.f32 %v3895, 6.0
        %v3912 = vmin.f32 %v3896, 6.0
        %v3913 = vmin.f32 %v3897, 6.0
        %v3914 = vmin.f32 %v3898, 6.0
        %v3915 = vmin.f32 %v3899, 6.0
        %v3916 = vmin.f32 %v3900, 6.0
        %v3917 = vmin.f32 %v3901, 6.0
        %v3918 = vmin.f32 %v3902, 6.0
        %v3919 = vmin.f32 %v3903, 6.0
        %v3920 = vmin.f32 %v3904, 6.0
        %v3921 = vmin.f32 %v3905, 6.0
        %v3922 = vmin.f32 %v3906, 6.0
        %v3923 = vld [vmem:[%s1 + $0x80] sm:$0xff]
        %v3924 = vld [vmem:[%s1 + $0x88] sm:$0xff]
        %v3925 = vld [vmem:[%s1 + $0x90] sm:$0xff]
        %v3926 = vld [vmem:[%s1 + $0x98] sm:$0xff]
        %3927 = vset.pattern.permute.xlu0 33
        %3928 = vperm.xlu0 %3927, %v1620
        %v3929 = vpop.permute.xlu0 %3928
        %3931 = vset.pattern.permute.xlu0 33
        %3932 = vperm.xlu0 %3931, %v1621
        %v3933 = vpop.permute.xlu0 %3932
        %3935 = vset.pattern.permute.xlu0 33
        %3936 = vperm.xlu0 %3935, %v1622
        %v3937 = vpop.permute.xlu0 %3936
        %3939 = vset.pattern.permute.xlu0 33
        %3940 = vperm.xlu0 %3939, %v1623
        %v3941 = vpop.permute.xlu0 %3940
        %v3944 = vsel %vm1644, %v3923, 0
        %v3947 = vsel %vm1644, %v3924, 0
        %v3950 = vsel %vm1644, %v3925, 0
        %v3953 = vsel %vm1644, %v3926, 0
        %3955 = vmatprep.subr.mxu0 0.0
        %3956 = vmatpush1.msra.mxu0 0.0
        %3957 = vmatprep.subr.mxu0 0.0
        %3958 = vmatpush1.msra.mxu0 0.0
        %3959 = vmatprep.subr.mxu0 0.0
        %3960 = vmatpush1.msra.mxu0 0.0
        %3961 = vmatprep.subr.mxu0 0.0
        %3962 = vmatpush1.msra.mxu0 0.0
        %3963 = vmatprep.subr.mxu0 0.0
        %3964 = vmatpush1.msra.mxu0 0.0
        %3965 = vmatprep.subr.mxu0 0.0
        %3966 = vmatpush1.msra.mxu0 0.0
        %3967 = vmatprep.subr.mxu0 0.0
        %3968 = vmatpush1.msra.mxu0 0.0
        %3969 = vmatprep.subr.mxu0 0.0
        %3970 = vmatpush1.msra.mxu0 0.0
        %3971 = vmatprep.subr.mxu0 %v3922
        %3972 = vmatpush1.msra.mxu0 %v3921
        %3973 = vmatprep.subr.mxu0 %v3920
        %3974 = vmatpush1.msra.mxu0 %v3919
        %3975 = vmatprep.subr.mxu0 %v3918
        %3976 = vmatpush1.msra.mxu0 %v3917
        %3977 = vmatprep.subr.mxu0 %v3916
        %3978 = vmatpush1.msra.mxu0 %v3915
        %3979 = vmatprep.subr.mxu0 %v3914
        %3980 = vmatpush1.msra.mxu0 %v3913
        %3981 = vmatprep.subr.mxu0 %v3912
        %3982 = vmatpush1.msra.mxu0 %v3911
        %3983 = vmatprep.subr.mxu0 %v3910
        %3984 = vmatpush1.msra.mxu0 %v3909
        %3985 = vmatprep.subr.mxu0 %v3908
        %3986 = vmatpush1.msra.mxu0 %v3907
        %3987 = vmatprep.subr.mxu0 0.0
        %3988 = vmatpush2.msra.mxu0 0.0
        %3989 = vmatprep.subr.mxu0 0.0
        %3990 = vmatpush2.msra.mxu0 0.0
        %3991 = vmatprep.subr.mxu0 0.0
        %3992 = vmatpush2.msra.mxu0 0.0
        %3993 = vmatprep.subr.mxu0 0.0
        %3994 = vmatpush2.msra.mxu0 0.0
        %3995 = vmatprep.subr.mxu0 0.0
        %3996 = vmatpush2.msra.mxu0 0.0
        %3997 = vmatprep.subr.mxu0 0.0
        %3998 = vmatpush2.msra.mxu0 0.0
        %3999 = vmatprep.subr.mxu0 0.0
        %4000 = vmatpush2.msra.mxu0 0.0
        %4001 = vmatprep.subr.mxu0 0.0
        %4002 = vmatpush2.msra.mxu0 0.0
        %4003 = vmatprep.subr.mxu0 0.0
        %4004 = vmatpush2.msra.mxu0 0.0
        %4005 = vmatprep.subr.mxu0 0.0
        %4006 = vmatpush2.msra.mxu0 0.0
        %4007 = vmatprep.subr.mxu0 0.0
        %4008 = vmatpush2.msra.mxu0 0.0
        %4009 = vmatprep.subr.mxu0 0.0
        %4010 = vmatpush2.msra.mxu0 0.0
        %4011 = vmatprep.subr.mxu0 0.0
        %4012 = vmatpush2.msra.mxu0 0.0
        %4013 = vmatprep.subr.mxu0 0.0
        %4014 = vmatpush2.msra.mxu0 0.0
        %4015 = vmatprep.subr.mxu0 0.0
        %4016 = vmatpush2.msra.mxu0 0.0
        %4017 = vmatprep.subr.mxu0 0.0
        %4018 = vmatpush2.msra.mxu0 0.0
        %4019 = vmatprep.mubr.f32.mxu0 0.0
        %4020 = vmatmul.mubr.f32.gmra.mxu0 %v3944
        %v4021 = vpop.f32.mrf.mxu0
        %v4022 = vadd.f32 %v3929, %v4021
        %v4023 = vpop.f32.mrf.mxu0
        %v4024 = vadd.f32 %v3929, %v4023
        %4025 = vmatprep.mubr.f32.mxu0 0.0
        %4026 = vmatmul.mubr.f32.gmra.mxu0 %v3947
        %v4027 = vpop.f32.mrf.mxu0
        %v4028 = vadd.f32 %v3933, %v4027
        %v4029 = vpop.f32.mrf.mxu0
        %v4030 = vadd.f32 %v3933, %v4029
        %4031 = vmatprep.mubr.f32.mxu0 0.0
        %4032 = vmatmul.mubr.f32.gmra.mxu0 %v3950
        %v4033 = vpop.f32.mrf.mxu0
        %v4034 = vadd.f32 %v3937, %v4033
        %v4035 = vpop.f32.mrf.mxu0
        %v4036 = vadd.f32 %v3937, %v4035
        %4037 = vmatprep.mubr.f32.mxu0 0.0
        %4038 = vmatmul.mubr.f32.gmra.mxu0 %v3953
        %v4039 = vpop.f32.mrf.mxu0
        %v4040 = vadd.f32 %v3941, %v4039
        %v4041 = vpop.f32.mrf.mxu0
        %v4042 = vadd.f32 %v3941, %v4041
        %4043 = vdwg.mxu0
        %4044 = vst [vmem:[%s163] sm:$0xff] %v4022
        %4045 = vst [vmem:[%s163 + $0x8] sm:$0xff] %v4024
        %4046 = vst [vmem:[%s163 + $0x10] sm:$0xff] %v4028
        %4047 = vst [vmem:[%s163 + $0x18] sm:$0xff] %v4030
        %4048 = vst [vmem:[%s163 + $0x20] sm:$0xff] %v4034
        %4049 = vst [vmem:[%s163 + $0x28] sm:$0xff] %v4036
        %4050 = vst [vmem:[%s163 + $0x30] sm:$0xff] %v4040
        %4051 = vst [vmem:[%s163 + $0x38] sm:$0xff] %v4042
        %s4052 = sand.u32 %s93, 1
        %s4053 = scalar_lea.sflag [#allocation3], %s4052
        %s4054 = sand.u32 %s93, 1
        %s4055 = smul.addr %s4054, 64
        %s4056 = scalar_lea.vmem [#allocation2], %s4055
        // Predicated region
        $region33: #{tpu_custom_call.1} parent=31 // pred_check
          %p4057 = pneg %p103
        $region34: #{tpu_custom_call.1} parent=31 // pred_check_branch
          %4059 = sbr.rel (%p4057) target = $region36
        $region35: #{tpu_custom_call.1} parent=31 // pred_region
          %s4061 = ssub.s32 1024, 1024
          %4062 = vsyncadd %s4053, %s4061
          %s4063 = smul.addr %s17, 8
          %s4064 = smul.addr %s4063, 128
          %s4065 = scalar_lea.hbm %s3, %s4064
          %s4066 = sshll.u32 %s4056, 4
          %s4067 = int_to_ptr.vmem [resolvable:$true] %s4066
          %4072 = dma.vmem_to_hbm [thread:$0]  %s4067, 1024, %s4065, %s4053, 256, 256, 16
        $region36: #{tpu_custom_call.1} parent=31 // pred_fallthru
          _
      $region32: #{tpu_custom_call.1} parent=5 // pred_fallthru
        _
      %p4073 = scmp.le.s32.totalorder 2, %s12
      // Predicated region
      $region37: #{tpu_custom_call.1} parent=5 // pred_check
        %p4074 = pneg %p4073
      $region38: #{tpu_custom_call.1} parent=5 // pred_check_branch
        %4076 = sbr.rel (%p4074) target = $region40
      $region39: #{tpu_custom_call.1} parent=5 // pred_region
        %s4077 = ssub.s32 %s12, 2
        // Predicated region
        $region41: #{tpu_custom_call.1} parent=39 // pred_check
          %p4078 = pneg %p109
        $region42: #{tpu_custom_call.1} parent=39 // pred_check_branch
          %4080 = sbr.rel (%p4078) target = $region44
        $region43: #{tpu_custom_call.1} parent=39 // pred_region
          %s4081 = sand.u32 %s94, 1
          %s4082 = scalar_lea.sflag [#allocation3], %s4081
          %s4083 = sand.u32 %s94, 1
          %s4084 = smul.addr %s4083, 64
          %s4085 = scalar_lea.vmem [#allocation2], %s4084
          %4086 = dma.done %s4082, 1024
        $region44: #{tpu_custom_call.1} parent=39 // pred_fallthru
          _
      $region40: #{tpu_custom_call.1} parent=5 // pred_fallthru
        _
    $region6: #{tpu_custom_call.1} parent=1 // loop_footer
      %s16 = sadd.s32 1, %s12
    $region7: #{tpu_custom_call.1} parent=1 // loop_footer_branch
      %11 = sbr.rel target = $region3
    $region8: #{tpu_custom_call.1} parent=1 // loop_exit
      _
    %4087 = vsyncpa [#allocation3], 1
    %s4088 = scalar_lea.sflag [#allocation3], 1
    %4089 = vsyncpa %s4088, 1

</llo_original>
